<compile_context>
chip_gen: v5e
topology: v5e:2x2
jax: 0.10.0
libtpu: 0.0.40
codegen_flags: <defaults>
</compile_context>

<pallas_src>
from functools import partial

import numpy as np
import jax
import jax.numpy as jnp
from jax import lax
from jax.experimental import pallas as pl
from jax.experimental.pallas import tpu as pltpu


def _round_up(n, m):
    return ((n + m - 1) // m) * m


# ---------------------------------------------------------------------------
# One-time host-side weight packing / padding (NOT in the per-call jitted path)
# ---------------------------------------------------------------------------
def prepare_params(params):
    """Pack/pad the three LSTMs' weights once.

    Returns (packed_dict_of_jnp_arrays, latent_dim).
    Packed layout:
      wih1 : (D, 4*Hp)        fc1 input weights, each gate padded to 128 lanes
      b1   : (1, 4*Hp)
      whh1 : (Hp, 4*Hp)       fc1 recurrent weights
      wlat : (Hp+Gp, 4*Gp)    fused fc21|fc22 [input ; recurrent] weights
      blat : (1, 4*Gp)
    Fused latent layout per gate block: lanes [0,L) = fc21, [L,2L) = fc22,
    recurrent part block-diagonal over the combined [h21 | h22] state.
    """
    wih1_t, whh1_t, b1 = (np.asarray(a, np.float32) for a in params["fc1"])
    wih21_t, whh21_t, b21 = (np.asarray(a, np.float32) for a in params["fc21"])
    wih22_t, whh22_t, b22 = (np.asarray(a, np.float32) for a in params["fc22"])

    D = wih1_t.shape[0]
    H = whh1_t.shape[0]          # mid_dim_i
    L = whh21_t.shape[0]         # latent_dim
    Hp = _round_up(H, 128)       # padded fc1 gate-block width
    Gp = _round_up(2 * L, 128)   # padded fused fc21|fc22 gate-block width

    # ---- fc1 weights: pad each gate block to 128 lanes ----
    wih1_p = np.zeros((D, 4 * Hp), np.float32)
    whh1_p = np.zeros((Hp, 4 * Hp), np.float32)
    b1_p = np.zeros((1, 4 * Hp), np.float32)
    for k in range(4):
        wih1_p[:, k * Hp:k * Hp + H] = wih1_t[:, k * H:(k + 1) * H]
        whh1_p[:H, k * Hp:k * Hp + H] = whh1_t[:, k * H:(k + 1) * H]
        b1_p[:, k * Hp:k * Hp + H] = b1[:, k * H:(k + 1) * H]

    # ---- fuse fc21/fc22 and stack [W_ih ; W_hh] into one (Hp+Gp, 4*Gp) ----
    wlat_ih = np.zeros((Hp, 4 * Gp), np.float32)
    wlat_hh = np.zeros((Gp, 4 * Gp), np.float32)
    blat_p = np.zeros((1, 4 * Gp), np.float32)
    for k in range(4):
        wlat_ih[:H, k * Gp:k * Gp + L] = wih21_t[:, k * L:(k + 1) * L]
        wlat_ih[:H, k * Gp + L:k * Gp + 2 * L] = wih22_t[:, k * L:(k + 1) * L]
        wlat_hh[:L, k * Gp:k * Gp + L] = whh21_t[:, k * L:(k + 1) * L]
        wlat_hh[L:2 * L, k * Gp + L:k * Gp + 2 * L] = whh22_t[:, k * L:(k + 1) * L]
        blat_p[:, k * Gp:k * Gp + L] = b21[:, k * L:(k + 1) * L]
        blat_p[:, k * Gp + L:k * Gp + 2 * L] = b22[:, k * L:(k + 1) * L]
    wlat_cat = np.concatenate([wlat_ih, wlat_hh], axis=0)     # (Hp+Gp, 4*Gp)

    packed = {
        "wih1": jnp.asarray(wih1_p),
        "b1": jnp.asarray(b1_p),
        "whh1": jnp.asarray(whh1_p),
        "wlat": jnp.asarray(wlat_cat),
        "blat": jnp.asarray(blat_p),
    }
    return packed, int(L)


# ---------------------------------------------------------------------------
# Fused Pallas kernel (single invocation, no grid, everything VMEM-resident)
# ---------------------------------------------------------------------------
def _encoder_kernel(x_ref, wih1_ref, b1_ref, whh1_ref, wlat_ref, blat_ref,
                    out_ref):
    S, B, Gp = out_ref.shape          # seq, batch, padded fused latent width
    Hp = whh1_ref.shape[0]            # padded fc1 gate-block width

    # Load weights once; the unrolled loop closes over these values.
    whh1 = whh1_ref[...]              # (Hp, 4*Hp)
    wlat = wlat_ref[...]              # (Hp+Gp, 4*Gp)
    # Hoist bias broadcasts out of the loop (JAX does not CSE broadcasts).
    blat = jnp.broadcast_to(blat_ref[...], (B, 4 * Gp))

    # ---- pre-loop: one M=S*B matmul for the non-recurrent fc1 projection ----
    proj = (jnp.dot(x_ref[...], wih1_ref[...],
                    preferred_element_type=jnp.float32)
            + jnp.broadcast_to(b1_ref[...], (S * B, 4 * Hp)))   # (S*B, 4*Hp)

    def gates_to_hc(gates, c, width):
        # Gate blocks are 128-lane aligned -> each slice is a free static view.
        i = jax.nn.sigmoid(gates[:, 0 * width:1 * width])
        f = jax.nn.sigmoid(gates[:, 1 * width:2 * width])
        g = jnp.tanh(gates[:, 2 * width:3 * width])
        o = jax.nn.sigmoid(gates[:, 3 * width:4 * width])
        c_new = f * c + i * g
        h_new = o * jnp.tanh(c_new)
        return h_new, c_new

    h1 = jnp.zeros((B, Hp), jnp.float32)
    c1 = jnp.zeros((B, Hp), jnp.float32)
    hl = jnp.zeros((B, Gp), jnp.float32)
    cl = jnp.zeros((B, Gp), jnp.float32)

    # Fully unrolled recurrence with static indices (S is small).
    # TODO(synk): for large S, switch to lax.fori_loop with partial unroll.
    for t in range(S):
        # ---- fc1 LSTM step (input projection already done above) ----
        g1 = proj[t * B:(t + 1) * B, :] + jnp.dot(
            h1, whh1, preferred_element_type=jnp.float32)
        h1, c1 = gates_to_hc(g1, c1, Hp)

        # ---- ReLU between the layers ----
        hr = jnp.maximum(h1, 0.0)

        # ---- fused fc21+fc22 step: ONE K=Hp+Gp matmul for both branches ----
        cat = jnp.concatenate([hr, hl], axis=1)            # (B, Hp+Gp)
        gl = jnp.dot(cat, wlat, preferred_element_type=jnp.float32) + blat
        hl, cl = gates_to_hc(gl, cl, Gp)

        # Lane-dense full-width store; slicing into mu/logvar happens outside.
        out_ref[t] = hl


# ---------------------------------------------------------------------------
# Wrapper: single pallas_call, lane-dense output sliced into the two branches
# ---------------------------------------------------------------------------
@partial(jax.jit, static_argnames=("latent_dim",))
def sss_encoder_pallas(x, packed, latent_dim):
    """x: (S, B, D) float32.  Returns (out21, out22), each (S, B, latent_dim)."""
    S, B, D = x.shape
    Gp = packed["blat"].shape[1] // 4
    L = latent_dim

    # Row-major (S,B,D) -> (S*B,D) is a free metadata reshape.
    x2d = x.reshape(S * B, D)

    vmem = pl.BlockSpec(memory_space=pltpu.MemorySpace.VMEM)
    out = pl.pallas_call(
        _encoder_kernel,
        out_shape=jax.ShapeDtypeStruct((S, B, Gp), jnp.float32),
        in_specs=[vmem] * 6,
        out_specs=vmem,
    )(x2d, packed["wih1"], packed["b1"], packed["whh1"],
      packed["wlat"], packed["blat"])

    # Combined latent layout: lanes [0,L) = fc21 (mu), [L,2L) = fc22 (logvar).
    return out[:, :, :L], out[:, :, L:2 * L]


# ---------------------------------------------------------------------------
# Pure-JAX reference (mirrors torch.nn.LSTM, single layer, zero init state)
# ---------------------------------------------------------------------------
def _lstm_cell_ref(x_t, h, c, w_ih_t, w_hh_t, b):
    gates = x_t @ w_ih_t + h @ w_hh_t + b
    hidden = h.shape[-1]
    i = jax.nn.sigmoid(gates[:, 0 * hidden:1 * hidden])
    f = jax.nn.sigmoid(gates[:, 1 * hidden:2 * hidden])
    g = jnp.tanh(gates[:, 2 * hidden:3 * hidden])
    o = jax.nn.sigmoid(gates[:, 3 * hidden:4 * hidden])
    c_new = f * c + i * g
    h_new = o * jnp.tanh(c_new)
    return h_new, c_new


def _lstm_ref(x, w_ih_t, w_hh_t, b):
    S, B, _ = x.shape
    H = w_hh_t.shape[0]

    def step(carry, x_t):
        h, c = carry
        h_new, c_new = _lstm_cell_ref(x_t, h, c, w_ih_t, w_hh_t, b)
        return (h_new, c_new), h_new

    init = (jnp.zeros((B, H), jnp.float32), jnp.zeros((B, H), jnp.float32))
    _, out = lax.scan(step, init, x)
    return out


def sss_encoder_ref(x, params):
    out1 = _lstm_ref(x, *params["fc1"])
    h1 = jnp.maximum(out1, 0.0)
    out21 = _lstm_ref(h1, *params["fc21"])
    out22 = _lstm_ref(h1, *params["fc22"])
    return out21, out22


# ---------------------------------------------------------------------------
def _init_lstm_params(key, input_dim, hidden_dim):
    """Mimics torch.nn.LSTM init: U(-1/sqrt(H), 1/sqrt(H)); weights stored
    pre-transposed as (in, 4H) for right-multiplication, gate order i,f,g,o."""
    k = 1.0 / jnp.sqrt(jnp.float32(hidden_dim))
    k_ih, k_hh, k_bih, k_bhh = jax.random.split(key, 4)
    w_ih_t = jax.random.uniform(k_ih, (input_dim, 4 * hidden_dim),
                                jnp.float32, -k, k)
    w_hh_t = jax.random.uniform(k_hh, (hidden_dim, 4 * hidden_dim),
                                jnp.float32, -k, k)
    b_ih = jax.random.uniform(k_bih, (4 * hidden_dim,), jnp.float32, -k, k)
    b_hh = jax.random.uniform(k_bhh, (4 * hidden_dim,), jnp.float32, -k, k)
    b = (b_ih + b_hh).reshape(1, 4 * hidden_dim)
    return (w_ih_t, w_hh_t, b)


if __name__ == "__main__":
    # Shapes consistent with the module defaults:
    # seq=8, batch=2, input_dim=16, mid_dim_i=60, latent_dim=20.
    S, B, D = 8, 2, 16
    MID, LAT = 60, 20

    key = jax.random.PRNGKey(0)
    kx, k1, k21, k22 = jax.random.split(key, 4)

    x = jax.random.normal(kx, (S, B, D), jnp.float32)
    params = {
        "fc1": _init_lstm_params(k1, D, MID),
        "fc21": _init_lstm_params(k21, MID, LAT),
        "fc22": _init_lstm_params(k22, MID, LAT),
    }

    # One-time packing (outside the per-call jitted path).
    packed, latent = prepare_params(params)

    out21, out22 = sss_encoder_pallas(x, packed, latent_dim=latent)
    out21 = jax.block_until_ready(out21)
    out22 = jax.block_until_ready(out22)

    ref21, ref22 = sss_encoder_ref(x, params)
    assert out21.shape == (S, B, LAT) and out22.shape == (S, B, LAT)
    assert jnp.allclose(out21, ref21, atol=2e-4, rtol=2e-4)
    assert jnp.allclose(out22, ref22, atol=2e-4, rtol=2e-4)

    print("KERNEL_OK")
</pallas_src>

<mosaic_0001>
module attributes {stable_mosaic.version = 11 : i64} {
  func.func @_encoder_kernel(%arg0: memref<16x16xf32, #tpu.memory_space<vmem>>, %arg1: memref<16x512xf32, #tpu.memory_space<vmem>>, %arg2: memref<1x512xf32, #tpu.memory_space<vmem>>, %arg3: memref<128x512xf32, #tpu.memory_space<vmem>>, %arg4: memref<256x512xf32, #tpu.memory_space<vmem>>, %arg5: memref<1x512xf32, #tpu.memory_space<vmem>>, %arg6: memref<8x2x128xf32, #tpu.memory_space<vmem>>) attributes {dimension_semantics = [], scalar_prefetch = 0 : i64, scratch_operands = 0 : i64, tpu.core_type = #tpu.core_type<tc>} {
    %c0 = arith.constant 0 : index
    %c0_0 = arith.constant 0 : index
    %0 = vector.load %arg3[%c0, %c0_0] : memref<128x512xf32, #tpu.memory_space<vmem>>, vector<128x512xf32>
    %c0_1 = arith.constant 0 : index
    %c0_2 = arith.constant 0 : index
    %1 = vector.load %arg4[%c0_1, %c0_2] : memref<256x512xf32, #tpu.memory_space<vmem>>, vector<256x512xf32>
    %c0_3 = arith.constant 0 : index
    %c0_4 = arith.constant 0 : index
    %2 = vector.load %arg5[%c0_3, %c0_4] : memref<1x512xf32, #tpu.memory_space<vmem>>, vector<1x512xf32>
    %3 = vector.shape_cast %2 : vector<1x512xf32> to vector<1x512xf32>
    %4 = vector.broadcast %3 : vector<1x512xf32> to vector<2x512xf32>
    %c0_5 = arith.constant 0 : index
    %c0_6 = arith.constant 0 : index
    %5 = vector.load %arg0[%c0_5, %c0_6] : memref<16x16xf32, #tpu.memory_space<vmem>>, vector<16x16xf32>
    %c0_7 = arith.constant 0 : index
    %c0_8 = arith.constant 0 : index
    %6 = vector.load %arg1[%c0_7, %c0_8] : memref<16x512xf32, #tpu.memory_space<vmem>>, vector<16x512xf32>
    %cst = arith.constant dense<0.000000e+00> : vector<16x512xf32>
    %7 = tpu.matmul %5, %6, %cst {dimension_numbers = #tpu.dot_dimension_numbers<[1], [0], [0], [1], [0, 0, 1, 1], [], []>} : vector<16x16xf32>, vector<16x512xf32>, vector<16x512xf32> -> vector<16x512xf32>
    %c0_9 = arith.constant 0 : index
    %c0_10 = arith.constant 0 : index
    %8 = vector.load %arg2[%c0_9, %c0_10] : memref<1x512xf32, #tpu.memory_space<vmem>>, vector<1x512xf32>
    %9 = vector.shape_cast %8 : vector<1x512xf32> to vector<1x512xf32>
    %10 = vector.broadcast %9 : vector<1x512xf32> to vector<16x512xf32>
    %11 = arith.addf %7, %10 : vector<16x512xf32>
    %cst_11 = arith.constant 0.000000e+00 : f32
    %12 = vector.broadcast %cst_11 : f32 to vector<2x128xf32>
    %cst_12 = arith.constant 0.000000e+00 : f32
    %13 = vector.broadcast %cst_12 : f32 to vector<2x128xf32>
    %cst_13 = arith.constant 0.000000e+00 : f32
    %14 = vector.broadcast %cst_13 : f32 to vector<2x128xf32>
    %cst_14 = arith.constant 0.000000e+00 : f32
    %15 = vector.broadcast %cst_14 : f32 to vector<2x128xf32>
    %16 = vector.extract_strided_slice %11 {offsets = [0, 0], sizes = [2, 512], strides = [1, 1]} : vector<16x512xf32> to vector<2x512xf32>
    %cst_15 = arith.constant dense<0.000000e+00> : vector<2x512xf32>
    %17 = tpu.matmul %12, %0, %cst_15 {dimension_numbers = #tpu.dot_dimension_numbers<[1], [0], [0], [1], [0, 0, 1, 1], [], []>} : vector<2x128xf32>, vector<128x512xf32>, vector<2x512xf32> -> vector<2x512xf32>
    %18 = arith.addf %16, %17 : vector<2x512xf32>
    %19 = vector.extract_strided_slice %18 {offsets = [0, 0], sizes = [2, 128], strides = [1, 1]} : vector<2x512xf32> to vector<2x128xf32>
    %20 = arith.negf %19 : vector<2x128xf32>
    %21 = math.exp %20 : vector<2x128xf32>
    %cst_16 = arith.constant 1.000000e+00 : f32
    %22 = vector.broadcast %cst_16 : f32 to vector<2x128xf32>
    %23 = arith.addf %22, %21 : vector<2x128xf32>
    %24 = arith.divf %22, %23 : vector<2x128xf32>
    %25 = vector.extract_strided_slice %18 {offsets = [0, 128], sizes = [2, 128], strides = [1, 1]} : vector<2x512xf32> to vector<2x128xf32>
    %26 = arith.negf %25 : vector<2x128xf32>
    %27 = math.exp %26 : vector<2x128xf32>
    %cst_17 = arith.constant 1.000000e+00 : f32
    %28 = vector.broadcast %cst_17 : f32 to vector<2x128xf32>
    %29 = arith.addf %28, %27 : vector<2x128xf32>
    %30 = arith.divf %28, %29 : vector<2x128xf32>
    %31 = vector.extract_strided_slice %18 {offsets = [0, 256], sizes = [2, 128], strides = [1, 1]} : vector<2x512xf32> to vector<2x128xf32>
    %32 = math.tanh %31 : vector<2x128xf32>
    %33 = vector.extract_strided_slice %18 {offsets = [0, 384], sizes = [2, 128], strides = [1, 1]} : vector<2x512xf32> to vector<2x128xf32>
    %34 = arith.negf %33 : vector<2x128xf32>
    %35 = math.exp %34 : vector<2x128xf32>
    %cst_18 = arith.constant 1.000000e+00 : f32
    %36 = vector.broadcast %cst_18 : f32 to vector<2x128xf32>
    %37 = arith.addf %36, %35 : vector<2x128xf32>
    %38 = arith.divf %36, %37 : vector<2x128xf32>
    %39 = arith.mulf %30, %13 : vector<2x128xf32>
    %40 = arith.mulf %24, %32 : vector<2x128xf32>
    %41 = arith.addf %39, %40 : vector<2x128xf32>
    %42 = math.tanh %41 : vector<2x128xf32>
    %43 = arith.mulf %38, %42 : vector<2x128xf32>
    %cst_19 = arith.constant 0.000000e+00 : f32
    %44 = vector.broadcast %cst_19 : f32 to vector<2x128xf32>
    %45 = arith.maximumf %43, %44 : vector<2x128xf32>
    %46 = tpu.concatenate %45, %14 in 1 : vector<2x128xf32>, vector<2x128xf32> -> vector<2x256xf32>
    %cst_20 = arith.constant dense<0.000000e+00> : vector<2x512xf32>
    %47 = tpu.matmul %46, %1, %cst_20 {dimension_numbers = #tpu.dot_dimension_numbers<[1], [0], [0], [1], [0, 0, 1, 1], [], []>} : vector<2x256xf32>, vector<256x512xf32>, vector<2x512xf32> -> vector<2x512xf32>
    %48 = arith.addf %47, %4 : vector<2x512xf32>
    %49 = vector.extract_strided_slice %48 {offsets = [0, 0], sizes = [2, 128], strides = [1, 1]} : vector<2x512xf32> to vector<2x128xf32>
    %50 = arith.negf %49 : vector<2x128xf32>
    %51 = math.exp %50 : vector<2x128xf32>
    %cst_21 = arith.constant 1.000000e+00 : f32
    %52 = vector.broadcast %cst_21 : f32 to vector<2x128xf32>
    %53 = arith.addf %52, %51 : vector<2x128xf32>
    %54 = arith.divf %52, %53 : vector<2x128xf32>
    %55 = vector.extract_strided_slice %48 {offsets = [0, 128], sizes = [2, 128], strides = [1, 1]} : vector<2x512xf32> to vector<2x128xf32>
    %56 = arith.negf %55 : vector<2x128xf32>
    %57 = math.exp %56 : vector<2x128xf32>
    %cst_22 = arith.constant 1.000000e+00 : f32
    %58 = vector.broadcast %cst_22 : f32 to vector<2x128xf32>
    %59 = arith.addf %58, %57 : vector<2x128xf32>
    %60 = arith.divf %58, %59 : vector<2x128xf32>
    %61 = vector.extract_strided_slice %48 {offsets = [0, 256], sizes = [2, 128], strides = [1, 1]} : vector<2x512xf32> to vector<2x128xf32>
    %62 = math.tanh %61 : vector<2x128xf32>
    %63 = vector.extract_strided_slice %48 {offsets = [0, 384], sizes = [2, 128], strides = [1, 1]} : vector<2x512xf32> to vector<2x128xf32>
    %64 = arith.negf %63 : vector<2x128xf32>
    %65 = math.exp %64 : vector<2x128xf32>
    %cst_23 = arith.constant 1.000000e+00 : f32
    %66 = vector.broadcast %cst_23 : f32 to vector<2x128xf32>
    %67 = arith.addf %66, %65 : vector<2x128xf32>
    %68 = arith.divf %66, %67 : vector<2x128xf32>
    %69 = arith.mulf %60, %15 : vector<2x128xf32>
    %70 = arith.mulf %54, %62 : vector<2x128xf32>
    %71 = arith.addf %69, %70 : vector<2x128xf32>
    %72 = math.tanh %71 : vector<2x128xf32>
    %73 = arith.mulf %68, %72 : vector<2x128xf32>
    %c0_24 = arith.constant 0 : index
    %c0_25 = arith.constant 0 : index
    %c0_26 = arith.constant 0 : index
    %74 = vector.load %arg6[%c0_24, %c0_25, %c0_26] : memref<8x2x128xf32, #tpu.memory_space<vmem>>, vector<1x2x128xf32>
    %75 = vector.shape_cast %74 : vector<1x2x128xf32> to vector<2x128xf32>
    %76 = vector.shape_cast %73 : vector<2x128xf32> to vector<1x2x128xf32>
    tpu.vector_store %arg6[%c0_24, %c0_25, %c0_26], %76 {strides = array<i32>} : memref<8x2x128xf32, #tpu.memory_space<vmem>>, vector<1x2x128xf32>,
    %77 = vector.extract_strided_slice %11 {offsets = [2, 0], sizes = [2, 512], strides = [1, 1]} : vector<16x512xf32> to vector<2x512xf32>
    %cst_27 = arith.constant dense<0.000000e+00> : vector<2x512xf32>
    %78 = tpu.matmul %43, %0, %cst_27 {dimension_numbers = #tpu.dot_dimension_numbers<[1], [0], [0], [1], [0, 0, 1, 1], [], []>} : vector<2x128xf32>, vector<128x512xf32>, vector<2x512xf32> -> vector<2x512xf32>
    %79 = arith.addf %77, %78 : vector<2x512xf32>
    %80 = vector.extract_strided_slice %79 {offsets = [0, 0], sizes = [2, 128], strides = [1, 1]} : vector<2x512xf32> to vector<2x128xf32>
    %81 = arith.negf %80 : vector<2x128xf32>
    %82 = math.exp %81 : vector<2x128xf32>
    %cst_28 = arith.constant 1.000000e+00 : f32
    %83 = vector.broadcast %cst_28 : f32 to vector<2x128xf32>
    %84 = arith.addf %83, %82 : vector<2x128xf32>
    %85 = arith.divf %83, %84 : vector<2x128xf32>
    %86 = vector.extract_strided_slice %79 {offsets = [0, 128], sizes = [2, 128], strides = [1, 1]} : vector<2x512xf32> to vector<2x128xf32>
    %87 = arith.negf %86 : vector<2x128xf32>
    %88 = math.exp %87 : vector<2x128xf32>
    %cst_29 = arith.constant 1.000000e+00 : f32
    %89 = vector.broadcast %cst_29 : f32 to vector<2x128xf32>
    %90 = arith.addf %89, %88 : vector<2x128xf32>
    %91 = arith.divf %89, %90 : vector<2x128xf32>
    %92 = vector.extract_strided_slice %79 {offsets = [0, 256], sizes = [2, 128], strides = [1, 1]} : vector<2x512xf32> to vector<2x128xf32>
    %93 = math.tanh %92 : vector<2x128xf32>
    %94 = vector.extract_strided_slice %79 {offsets = [0, 384], sizes = [2, 128], strides = [1, 1]} : vector<2x512xf32> to vector<2x128xf32>
    %95 = arith.negf %94 : vector<2x128xf32>
    %96 = math.exp %95 : vector<2x128xf32>
    %cst_30 = arith.constant 1.000000e+00 : f32
    %97 = vector.broadcast %cst_30 : f32 to vector<2x128xf32>
    %98 = arith.addf %97, %96 : vector<2x128xf32>
    %99 = arith.divf %97, %98 : vector<2x128xf32>
    %100 = arith.mulf %91, %41 : vector<2x128xf32>
    %101 = arith.mulf %85, %93 : vector<2x128xf32>
    %102 = arith.addf %100, %101 : vector<2x128xf32>
    %103 = math.tanh %102 : vector<2x128xf32>
    %104 = arith.mulf %99, %103 : vector<2x128xf32>
    %cst_31 = arith.constant 0.000000e+00 : f32
    %105 = vector.broadcast %cst_31 : f32 to vector<2x128xf32>
    %106 = arith.maximumf %104, %105 : vector<2x128xf32>
    %107 = tpu.concatenate %106, %73 in 1 : vector<2x128xf32>, vector<2x128xf32> -> vector<2x256xf32>
    %cst_32 = arith.constant dense<0.000000e+00> : vector<2x512xf32>
    %108 = tpu.matmul %107, %1, %cst_32 {dimension_numbers = #tpu.dot_dimension_numbers<[1], [0], [0], [1], [0, 0, 1, 1], [], []>} : vector<2x256xf32>, vector<256x512xf32>, vector<2x512xf32> -> vector<2x512xf32>
    %109 = arith.addf %108, %4 : vector<2x512xf32>
    %110 = vector.extract_strided_slice %109 {offsets = [0, 0], sizes = [2, 128], strides = [1, 1]} : vector<2x512xf32> to vector<2x128xf32>
    %111 = arith.negf %110 : vector<2x128xf32>
    %112 = math.exp %111 : vector<2x128xf32>
    %cst_33 = arith.constant 1.000000e+00 : f32
    %113 = vector.broadcast %cst_33 : f32 to vector<2x128xf32>
    %114 = arith.addf %113, %112 : vector<2x128xf32>
    %115 = arith.divf %113, %114 : vector<2x128xf32>
    %116 = vector.extract_strided_slice %109 {offsets = [0, 128], sizes = [2, 128], strides = [1, 1]} : vector<2x512xf32> to vector<2x128xf32>
    %117 = arith.negf %116 : vector<2x128xf32>
    %118 = math.exp %117 : vector<2x128xf32>
    %cst_34 = arith.constant 1.000000e+00 : f32
    %119 = vector.broadcast %cst_34 : f32 to vector<2x128xf32>
    %120 = arith.addf %119, %118 : vector<2x128xf32>
    %121 = arith.divf %119, %120 : vector<2x128xf32>
    %122 = vector.extract_strided_slice %109 {offsets = [0, 256], sizes = [2, 128], strides = [1, 1]} : vector<2x512xf32> to vector<2x128xf32>
    %123 = math.tanh %122 : vector<2x128xf32>
    %124 = vector.extract_strided_slice %109 {offsets = [0, 384], sizes = [2, 128], strides = [1, 1]} : vector<2x512xf32> to vector<2x128xf32>
    %125 = arith.negf %124 : vector<2x128xf32>
    %126 = math.exp %125 : vector<2x128xf32>
    %cst_35 = arith.constant 1.000000e+00 : f32
    %127 = vector.broadcast %cst_35 : f32 to vector<2x128xf32>
    %128 = arith.addf %127, %126 : vector<2x128xf32>
    %129 = arith.divf %127, %128 : vector<2x128xf32>
    %130 = arith.mulf %121, %71 : vector<2x128xf32>
    %131 = arith.mulf %115, %123 : vector<2x128xf32>
    %132 = arith.addf %130, %131 : vector<2x128xf32>
    %133 = math.tanh %132 : vector<2x128xf32>
    %134 = arith.mulf %129, %133 : vector<2x128xf32>
    %c1 = arith.constant 1 : index
    %c0_36 = arith.constant 0 : index
    %c0_37 = arith.constant 0 : index
    %135 = vector.load %arg6[%c1, %c0_36, %c0_37] : memref<8x2x128xf32, #tpu.memory_space<vmem>>, vector<1x2x128xf32>
    %136 = vector.shape_cast %135 : vector<1x2x128xf32> to vector<2x128xf32>
    %137 = vector.shape_cast %134 : vector<2x128xf32> to vector<1x2x128xf32>
    tpu.vector_store %arg6[%c1, %c0_36, %c0_37], %137 {strides = array<i32>} : memref<8x2x128xf32, #tpu.memory_space<vmem>>, vector<1x2x128xf32>,
    %138 = vector.extract_strided_slice %11 {offsets = [4, 0], sizes = [2, 512], strides = [1, 1]} : vector<16x512xf32> to vector<2x512xf32>
    %cst_38 = arith.constant dense<0.000000e+00> : vector<2x512xf32>
    %139 = tpu.matmul %104, %0, %cst_38 {dimension_numbers = #tpu.dot_dimension_numbers<[1], [0], [0], [1], [0, 0, 1, 1], [], []>} : vector<2x128xf32>, vector<128x512xf32>, vector<2x512xf32> -> vector<2x512xf32>
    %140 = arith.addf %138, %139 : vector<2x512xf32>
    %141 = vector.extract_strided_slice %140 {offsets = [0, 0], sizes = [2, 128], strides = [1, 1]} : vector<2x512xf32> to vector<2x128xf32>
    %142 = arith.negf %141 : vector<2x128xf32>
    %143 = math.exp %142 : vector<2x128xf32>
    %cst_39 = arith.constant 1.000000e+00 : f32
    %144 = vector.broadcast %cst_39 : f32 to vector<2x128xf32>
    %145 = arith.addf %144, %143 : vector<2x128xf32>
    %146 = arith.divf %144, %145 : vector<2x128xf32>
    %147 = vector.extract_strided_slice %140 {offsets = [0, 128], sizes = [2, 128], strides = [1, 1]} : vector<2x512xf32> to vector<2x128xf32>
    %148 = arith.negf %147 : vector<2x128xf32>
    %149 = math.exp %148 : vector<2x128xf32>
    %cst_40 = arith.constant 1.000000e+00 : f32
    %150 = vector.broadcast %cst_40 : f32 to vector<2x128xf32>
    %151 = arith.addf %150, %149 : vector<2x128xf32>
    %152 = arith.divf %150, %151 : vector<2x128xf32>
    %153 = vector.extract_strided_slice %140 {offsets = [0, 256], sizes = [2, 128], strides = [1, 1]} : vector<2x512xf32> to vector<2x128xf32>
    %154 = math.tanh %153 : vector<2x128xf32>
    %155 = vector.extract_strided_slice %140 {offsets = [0, 384], sizes = [2, 128], strides = [1, 1]} : vector<2x512xf32> to vector<2x128xf32>
    %156 = arith.negf %155 : vector<2x128xf32>
    %157 = math.exp %156 : vector<2x128xf32>
    %cst_41 = arith.constant 1.000000e+00 : f32
    %158 = vector.broadcast %cst_41 : f32 to vector<2x128xf32>
    %159 = arith.addf %158, %157 : vector<2x128xf32>
    %160 = arith.divf %158, %159 : vector<2x128xf32>
    %161 = arith.mulf %152, %102 : vector<2x128xf32>
    %162 = arith.mulf %146, %154 : vector<2x128xf32>
    %163 = arith.addf %161, %162 : vector<2x128xf32>
    %164 = math.tanh %163 : vector<2x128xf32>
    %165 = arith.mulf %160, %164 : vector<2x128xf32>
    %cst_42 = arith.constant 0.000000e+00 : f32
    %166 = vector.broadcast %cst_42 : f32 to vector<2x128xf32>
    %167 = arith.maximumf %165, %166 : vector<2x128xf32>
    %168 = tpu.concatenate %167, %134 in 1 : vector<2x128xf32>, vector<2x128xf32> -> vector<2x256xf32>
    %cst_43 = arith.constant dense<0.000000e+00> : vector<2x512xf32>
    %169 = tpu.matmul %168, %1, %cst_43 {dimension_numbers = #tpu.dot_dimension_numbers<[1], [0], [0], [1], [0, 0, 1, 1], [], []>} : vector<2x256xf32>, vector<256x512xf32>, vector<2x512xf32> -> vector<2x512xf32>
    %170 = arith.addf %169, %4 : vector<2x512xf32>
    %171 = vector.extract_strided_slice %170 {offsets = [0, 0], sizes = [2, 128], strides = [1, 1]} : vector<2x512xf32> to vector<2x128xf32>
    %172 = arith.negf %171 : vector<2x128xf32>
    %173 = math.exp %172 : vector<2x128xf32>
    %cst_44 = arith.constant 1.000000e+00 : f32
    %174 = vector.broadcast %cst_44 : f32 to vector<2x128xf32>
    %175 = arith.addf %174, %173 : vector<2x128xf32>
    %176 = arith.divf %174, %175 : vector<2x128xf32>
    %177 = vector.extract_strided_slice %170 {offsets = [0, 128], sizes = [2, 128], strides = [1, 1]} : vector<2x512xf32> to vector<2x128xf32>
    %178 = arith.negf %177 : vector<2x128xf32>
    %179 = math.exp %178 : vector<2x128xf32>
    %cst_45 = arith.constant 1.000000e+00 : f32
    %180 = vector.broadcast %cst_45 : f32 to vector<2x128xf32>
    %181 = arith.addf %180, %179 : vector<2x128xf32>
    %182 = arith.divf %180, %181 : vector<2x128xf32>
    %183 = vector.extract_strided_slice %170 {offsets = [0, 256], sizes = [2, 128], strides = [1, 1]} : vector<2x512xf32> to vector<2x128xf32>
    %184 = math.tanh %183 : vector<2x128xf32>
    %185 = vector.extract_strided_slice %170 {offsets = [0, 384], sizes = [2, 128], strides = [1, 1]} : vector<2x512xf32> to vector<2x128xf32>
    %186 = arith.negf %185 : vector<2x128xf32>
    %187 = math.exp %186 : vector<2x128xf32>
    %cst_46 = arith.constant 1.000000e+00 : f32
    %188 = vector.broadcast %cst_46 : f32 to vector<2x128xf32>
    %189 = arith.addf %188, %187 : vector<2x128xf32>
    %190 = arith.divf %188, %189 : vector<2x128xf32>
    %191 = arith.mulf %182, %132 : vector<2x128xf32>
    %192 = arith.mulf %176, %184 : vector<2x128xf32>
    %193 = arith.addf %191, %192 : vector<2x128xf32>
    %194 = math.tanh %193 : vector<2x128xf32>
    %195 = arith.mulf %190, %194 : vector<2x128xf32>
    %c2 = arith.constant 2 : index
    %c0_47 = arith.constant 0 : index
    %c0_48 = arith.constant 0 : index
    %196 = vector.load %arg6[%c2, %c0_47, %c0_48] : memref<8x2x128xf32, #tpu.memory_space<vmem>>, vector<1x2x128xf32>
    %197 = vector.shape_cast %196 : vector<1x2x128xf32> to vector<2x128xf32>
    %198 = vector.shape_cast %195 : vector<2x128xf32> to vector<1x2x128xf32>
    tpu.vector_store %arg6[%c2, %c0_47, %c0_48], %198 {strides = array<i32>} : memref<8x2x128xf32, #tpu.memory_space<vmem>>, vector<1x2x128xf32>,
    %199 = vector.extract_strided_slice %11 {offsets = [6, 0], sizes = [2, 512], strides = [1, 1]} : vector<16x512xf32> to vector<2x512xf32>
    %cst_49 = arith.constant dense<0.000000e+00> : vector<2x512xf32>
    %200 = tpu.matmul %165, %0, %cst_49 {dimension_numbers = #tpu.dot_dimension_numbers<[1], [0], [0], [1], [0, 0, 1, 1], [], []>} : vector<2x128xf32>, vector<128x512xf32>, vector<2x512xf32> -> vector<2x512xf32>
    %201 = arith.addf %199, %200 : vector<2x512xf32>
    %202 = vector.extract_strided_slice %201 {offsets = [0, 0], sizes = [2, 128], strides = [1, 1]} : vector<2x512xf32> to vector<2x128xf32>
    %203 = arith.negf %202 : vector<2x128xf32>
    %204 = math.exp %203 : vector<2x128xf32>
    %cst_50 = arith.constant 1.000000e+00 : f32
    %205 = vector.broadcast %cst_50 : f32 to vector<2x128xf32>
    %206 = arith.addf %205, %204 : vector<2x128xf32>
    %207 = arith.divf %205, %206 : vector<2x128xf32>
    %208 = vector.extract_strided_slice %201 {offsets = [0, 128], sizes = [2, 128], strides = [1, 1]} : vector<2x512xf32> to vector<2x128xf32>
    %209 = arith.negf %208 : vector<2x128xf32>
    %210 = math.exp %209 : vector<2x128xf32>
    %cst_51 = arith.constant 1.000000e+00 : f32
    %211 = vector.broadcast %cst_51 : f32 to vector<2x128xf32>
    %212 = arith.addf %211, %210 : vector<2x128xf32>
    %213 = arith.divf %211, %212 : vector<2x128xf32>
    %214 = vector.extract_strided_slice %201 {offsets = [0, 256], sizes = [2, 128], strides = [1, 1]} : vector<2x512xf32> to vector<2x128xf32>
    %215 = math.tanh %214 : vector<2x128xf32>
    %216 = vector.extract_strided_slice %201 {offsets = [0, 384], sizes = [2, 128], strides = [1, 1]} : vector<2x512xf32> to vector<2x128xf32>
    %217 = arith.negf %216 : vector<2x128xf32>
    %218 = math.exp %217 : vector<2x128xf32>
    %cst_52 = arith.constant 1.000000e+00 : f32
    %219 = vector.broadcast %cst_52 : f32 to vector<2x128xf32>
    %220 = arith.addf %219, %218 : vector<2x128xf32>
    %221 = arith.divf %219, %220 : vector<2x128xf32>
    %222 = arith.mulf %213, %163 : vector<2x128xf32>
    %223 = arith.mulf %207, %215 : vector<2x128xf32>
    %224 = arith.addf %222, %223 : vector<2x128xf32>
    %225 = math.tanh %224 : vector<2x128xf32>
    %226 = arith.mulf %221, %225 : vector<2x128xf32>
    %cst_53 = arith.constant 0.000000e+00 : f32
    %227 = vector.broadcast %cst_53 : f32 to vector<2x128xf32>
    %228 = arith.maximumf %226, %227 : vector<2x128xf32>
    %229 = tpu.concatenate %228, %195 in 1 : vector<2x128xf32>, vector<2x128xf32> -> vector<2x256xf32>
    %cst_54 = arith.constant dense<0.000000e+00> : vector<2x512xf32>
    %230 = tpu.matmul %229, %1, %cst_54 {dimension_numbers = #tpu.dot_dimension_numbers<[1], [0], [0], [1], [0, 0, 1, 1], [], []>} : vector<2x256xf32>, vector<256x512xf32>, vector<2x512xf32> -> vector<2x512xf32>
    %231 = arith.addf %230, %4 : vector<2x512xf32>
    %232 = vector.extract_strided_slice %231 {offsets = [0, 0], sizes = [2, 128], strides = [1, 1]} : vector<2x512xf32> to vector<2x128xf32>
    %233 = arith.negf %232 : vector<2x128xf32>
    %234 = math.exp %233 : vector<2x128xf32>
    %cst_55 = arith.constant 1.000000e+00 : f32
    %235 = vector.broadcast %cst_55 : f32 to vector<2x128xf32>
    %236 = arith.addf %235, %234 : vector<2x128xf32>
    %237 = arith.divf %235, %236 : vector<2x128xf32>
    %238 = vector.extract_strided_slice %231 {offsets = [0, 128], sizes = [2, 128], strides = [1, 1]} : vector<2x512xf32> to vector<2x128xf32>
    %239 = arith.negf %238 : vector<2x128xf32>
    %240 = math.exp %239 : vector<2x128xf32>
    %cst_56 = arith.constant 1.000000e+00 : f32
    %241 = vector.broadcast %cst_56 : f32 to vector<2x128xf32>
    %242 = arith.addf %241, %240 : vector<2x128xf32>
    %243 = arith.divf %241, %242 : vector<2x128xf32>
    %244 = vector.extract_strided_slice %231 {offsets = [0, 256], sizes = [2, 128], strides = [1, 1]} : vector<2x512xf32> to vector<2x128xf32>
    %245 = math.tanh %244 : vector<2x128xf32>
    %246 = vector.extract_strided_slice %231 {offsets = [0, 384], sizes = [2, 128], strides = [1, 1]} : vector<2x512xf32> to vector<2x128xf32>
    %247 = arith.negf %246 : vector<2x128xf32>
    %248 = math.exp %247 : vector<2x128xf32>
    %cst_57 = arith.constant 1.000000e+00 : f32
    %249 = vector.broadcast %cst_57 : f32 to vector<2x128xf32>
    %250 = arith.addf %249, %248 : vector<2x128xf32>
    %251 = arith.divf %249, %250 : vector<2x128xf32>
    %252 = arith.mulf %243, %193 : vector<2x128xf32>
    %253 = arith.mulf %237, %245 : vector<2x128xf32>
    %254 = arith.addf %252, %253 : vector<2x128xf32>
    %255 = math.tanh %254 : vector<2x128xf32>
    %256 = arith.mulf %251, %255 : vector<2x128xf32>
    %c3 = arith.constant 3 : index
    %c0_58 = arith.constant 0 : index
    %c0_59 = arith.constant 0 : index
    %257 = vector.load %arg6[%c3, %c0_58, %c0_59] : memref<8x2x128xf32, #tpu.memory_space<vmem>>, vector<1x2x128xf32>
    %258 = vector.shape_cast %257 : vector<1x2x128xf32> to vector<2x128xf32>
    %259 = vector.shape_cast %256 : vector<2x128xf32> to vector<1x2x128xf32>
    tpu.vector_store %arg6[%c3, %c0_58, %c0_59], %259 {strides = array<i32>} : memref<8x2x128xf32, #tpu.memory_space<vmem>>, vector<1x2x128xf32>,
    %260 = vector.extract_strided_slice %11 {offsets = [8, 0], sizes = [2, 512], strides = [1, 1]} : vector<16x512xf32> to vector<2x512xf32>
    %cst_60 = arith.constant dense<0.000000e+00> : vector<2x512xf32>
    %261 = tpu.matmul %226, %0, %cst_60 {dimension_numbers = #tpu.dot_dimension_numbers<[1], [0], [0], [1], [0, 0, 1, 1], [], []>} : vector<2x128xf32>, vector<128x512xf32>, vector<2x512xf32> -> vector<2x512xf32>
    %262 = arith.addf %260, %261 : vector<2x512xf32>
    %263 = vector.extract_strided_slice %262 {offsets = [0, 0], sizes = [2, 128], strides = [1, 1]} : vector<2x512xf32> to vector<2x128xf32>
    %264 = arith.negf %263 : vector<2x128xf32>
    %265 = math.exp %264 : vector<2x128xf32>
    %cst_61 = arith.constant 1.000000e+00 : f32
    %266 = vector.broadcast %cst_61 : f32 to vector<2x128xf32>
    %267 = arith.addf %266, %265 : vector<2x128xf32>
    %268 = arith.divf %266, %267 : vector<2x128xf32>
    %269 = vector.extract_strided_slice %262 {offsets = [0, 128], sizes = [2, 128], strides = [1, 1]} : vector<2x512xf32> to vector<2x128xf32>
    %270 = arith.negf %269 : vector<2x128xf32>
    %271 = math.exp %270 : vector<2x128xf32>
    %cst_62 = arith.constant 1.000000e+00 : f32
    %272 = vector.broadcast %cst_62 : f32 to vector<2x128xf32>
    %273 = arith.addf %272, %271 : vector<2x128xf32>
    %274 = arith.divf %272, %273 : vector<2x128xf32>
    %275 = vector.extract_strided_slice %262 {offsets = [0, 256], sizes = [2, 128], strides = [1, 1]} : vector<2x512xf32> to vector<2x128xf32>
    %276 = math.tanh %275 : vector<2x128xf32>
    %277 = vector.extract_strided_slice %262 {offsets = [0, 384], sizes = [2, 128], strides = [1, 1]} : vector<2x512xf32> to vector<2x128xf32>
    %278 = arith.negf %277 : vector<2x128xf32>
    %279 = math.exp %278 : vector<2x128xf32>
    %cst_63 = arith.constant 1.000000e+00 : f32
    %280 = vector.broadcast %cst_63 : f32 to vector<2x128xf32>
    %281 = arith.addf %280, %279 : vector<2x128xf32>
    %282 = arith.divf %280, %281 : vector<2x128xf32>
    %283 = arith.mulf %274, %224 : vector<2x128xf32>
    %284 = arith.mulf %268, %276 : vector<2x128xf32>
    %285 = arith.addf %283, %284 : vector<2x128xf32>
    %286 = math.tanh %285 : vector<2x128xf32>
    %287 = arith.mulf %282, %286 : vector<2x128xf32>
    %cst_64 = arith.constant 0.000000e+00 : f32
    %288 = vector.broadcast %cst_64 : f32 to vector<2x128xf32>
    %289 = arith.maximumf %287, %288 : vector<2x128xf32>
    %290 = tpu.concatenate %289, %256 in 1 : vector<2x128xf32>, vector<2x128xf32> -> vector<2x256xf32>
    %cst_65 = arith.constant dense<0.000000e+00> : vector<2x512xf32>
    %291 = tpu.matmul %290, %1, %cst_65 {dimension_numbers = #tpu.dot_dimension_numbers<[1], [0], [0], [1], [0, 0, 1, 1], [], []>} : vector<2x256xf32>, vector<256x512xf32>, vector<2x512xf32> -> vector<2x512xf32>
    %292 = arith.addf %291, %4 : vector<2x512xf32>
    %293 = vector.extract_strided_slice %292 {offsets = [0, 0], sizes = [2, 128], strides = [1, 1]} : vector<2x512xf32> to vector<2x128xf32>
    %294 = arith.negf %293 : vector<2x128xf32>
    %295 = math.exp %294 : vector<2x128xf32>
    %cst_66 = arith.constant 1.000000e+00 : f32
    %296 = vector.broadcast %cst_66 : f32 to vector<2x128xf32>
    %297 = arith.addf %296, %295 : vector<2x128xf32>
    %298 = arith.divf %296, %297 : vector<2x128xf32>
    %299 = vector.extract_strided_slice %292 {offsets = [0, 128], sizes = [2, 128], strides = [1, 1]} : vector<2x512xf32> to vector<2x128xf32>
    %300 = arith.negf %299 : vector<2x128xf32>
    %301 = math.exp %300 : vector<2x128xf32>
    %cst_67 = arith.constant 1.000000e+00 : f32
    %302 = vector.broadcast %cst_67 : f32 to vector<2x128xf32>
    %303 = arith.addf %302, %301 : vector<2x128xf32>
    %304 = arith.divf %302, %303 : vector<2x128xf32>
    %305 = vector.extract_strided_slice %292 {offsets = [0, 256], sizes = [2, 128], strides = [1, 1]} : vector<2x512xf32> to vector<2x128xf32>
    %306 = math.tanh %305 : vector<2x128xf32>
    %307 = vector.extract_strided_slice %292 {offsets = [0, 384], sizes = [2, 128], strides = [1, 1]} : vector<2x512xf32> to vector<2x128xf32>
    %308 = arith.negf %307 : vector<2x128xf32>
    %309 = math.exp %308 : vector<2x128xf32>
    %cst_68 = arith.constant 1.000000e+00 : f32
    %310 = vector.broadcast %cst_68 : f32 to vector<2x128xf32>
    %311 = arith.addf %310, %309 : vector<2x128xf32>
    %312 = arith.divf %310, %311 : vector<2x128xf32>
    %313 = arith.mulf %304, %254 : vector<2x128xf32>
    %314 = arith.mulf %298, %306 : vector<2x128xf32>
    %315 = arith.addf %313, %314 : vector<2x128xf32>
    %316 = math.tanh %315 : vector<2x128xf32>
    %317 = arith.mulf %312, %316 : vector<2x128xf32>
    %c4 = arith.constant 4 : index
    %c0_69 = arith.constant 0 : index
    %c0_70 = arith.constant 0 : index
    %318 = vector.load %arg6[%c4, %c0_69, %c0_70] : memref<8x2x128xf32, #tpu.memory_space<vmem>>, vector<1x2x128xf32>
    %319 = vector.shape_cast %318 : vector<1x2x128xf32> to vector<2x128xf32>
    %320 = vector.shape_cast %317 : vector<2x128xf32> to vector<1x2x128xf32>
    tpu.vector_store %arg6[%c4, %c0_69, %c0_70], %320 {strides = array<i32>} : memref<8x2x128xf32, #tpu.memory_space<vmem>>, vector<1x2x128xf32>,
    %321 = vector.extract_strided_slice %11 {offsets = [10, 0], sizes = [2, 512], strides = [1, 1]} : vector<16x512xf32> to vector<2x512xf32>
    %cst_71 = arith.constant dense<0.000000e+00> : vector<2x512xf32>
    %322 = tpu.matmul %287, %0, %cst_71 {dimension_numbers = #tpu.dot_dimension_numbers<[1], [0], [0], [1], [0, 0, 1, 1], [], []>} : vector<2x128xf32>, vector<128x512xf32>, vector<2x512xf32> -> vector<2x512xf32>
    %323 = arith.addf %321, %322 : vector<2x512xf32>
    %324 = vector.extract_strided_slice %323 {offsets = [0, 0], sizes = [2, 128], strides = [1, 1]} : vector<2x512xf32> to vector<2x128xf32>
    %325 = arith.negf %324 : vector<2x128xf32>
    %326 = math.exp %325 : vector<2x128xf32>
    %cst_72 = arith.constant 1.000000e+00 : f32
    %327 = vector.broadcast %cst_72 : f32 to vector<2x128xf32>
    %328 = arith.addf %327, %326 : vector<2x128xf32>
    %329 = arith.divf %327, %328 : vector<2x128xf32>
    %330 = vector.extract_strided_slice %323 {offsets = [0, 128], sizes = [2, 128], strides = [1, 1]} : vector<2x512xf32> to vector<2x128xf32>
    %331 = arith.negf %330 : vector<2x128xf32>
    %332 = math.exp %331 : vector<2x128xf32>
    %cst_73 = arith.constant 1.000000e+00 : f32
    %333 = vector.broadcast %cst_73 : f32 to vector<2x128xf32>
    %334 = arith.addf %333, %332 : vector<2x128xf32>
    %335 = arith.divf %333, %334 : vector<2x128xf32>
    %336 = vector.extract_strided_slice %323 {offsets = [0, 256], sizes = [2, 128], strides = [1, 1]} : vector<2x512xf32> to vector<2x128xf32>
    %337 = math.tanh %336 : vector<2x128xf32>
    %338 = vector.extract_strided_slice %323 {offsets = [0, 384], sizes = [2, 128], strides = [1, 1]} : vector<2x512xf32> to vector<2x128xf32>
    %339 = arith.negf %338 : vector<2x128xf32>
    %340 = math.exp %339 : vector<2x128xf32>
    %cst_74 = arith.constant 1.000000e+00 : f32
    %341 = vector.broadcast %cst_74 : f32 to vector<2x128xf32>
    %342 = arith.addf %341, %340 : vector<2x128xf32>
    %343 = arith.divf %341, %342 : vector<2x128xf32>
    %344 = arith.mulf %335, %285 : vector<2x128xf32>
    %345 = arith.mulf %329, %337 : vector<2x128xf32>
    %346 = arith.addf %344, %345 : vector<2x128xf32>
    %347 = math.tanh %346 : vector<2x128xf32>
    %348 = arith.mulf %343, %347 : vector<2x128xf32>
    %cst_75 = arith.constant 0.000000e+00 : f32
    %349 = vector.broadcast %cst_75 : f32 to vector<2x128xf32>
    %350 = arith.maximumf %348, %349 : vector<2x128xf32>
    %351 = tpu.concatenate %350, %317 in 1 : vector<2x128xf32>, vector<2x128xf32> -> vector<2x256xf32>
    %cst_76 = arith.constant dense<0.000000e+00> : vector<2x512xf32>
    %352 = tpu.matmul %351, %1, %cst_76 {dimension_numbers = #tpu.dot_dimension_numbers<[1], [0], [0], [1], [0, 0, 1, 1], [], []>} : vector<2x256xf32>, vector<256x512xf32>, vector<2x512xf32> -> vector<2x512xf32>
    %353 = arith.addf %352, %4 : vector<2x512xf32>
    %354 = vector.extract_strided_slice %353 {offsets = [0, 0], sizes = [2, 128], strides = [1, 1]} : vector<2x512xf32> to vector<2x128xf32>
    %355 = arith.negf %354 : vector<2x128xf32>
    %356 = math.exp %355 : vector<2x128xf32>
    %cst_77 = arith.constant 1.000000e+00 : f32
    %357 = vector.broadcast %cst_77 : f32 to vector<2x128xf32>
    %358 = arith.addf %357, %356 : vector<2x128xf32>
    %359 = arith.divf %357, %358 : vector<2x128xf32>
    %360 = vector.extract_strided_slice %353 {offsets = [0, 128], sizes = [2, 128], strides = [1, 1]} : vector<2x512xf32> to vector<2x128xf32>
    %361 = arith.negf %360 : vector<2x128xf32>
    %362 = math.exp %361 : vector<2x128xf32>
    %cst_78 = arith.constant 1.000000e+00 : f32
    %363 = vector.broadcast %cst_78 : f32 to vector<2x128xf32>
    %364 = arith.addf %363, %362 : vector<2x128xf32>
    %365 = arith.divf %363, %364 : vector<2x128xf32>
    %366 = vector.extract_strided_slice %353 {offsets = [0, 256], sizes = [2, 128], strides = [1, 1]} : vector<2x512xf32> to vector<2x128xf32>
    %367 = math.tanh %366 : vector<2x128xf32>
    %368 = vector.extract_strided_slice %353 {offsets = [0, 384], sizes = [2, 128], strides = [1, 1]} : vector<2x512xf32> to vector<2x128xf32>
    %369 = arith.negf %368 : vector<2x128xf32>
    %370 = math.exp %369 : vector<2x128xf32>
    %cst_79 = arith.constant 1.000000e+00 : f32
    %371 = vector.broadcast %cst_79 : f32 to vector<2x128xf32>
    %372 = arith.addf %371, %370 : vector<2x128xf32>
    %373 = arith.divf %371, %372 : vector<2x128xf32>
    %374 = arith.mulf %365, %315 : vector<2x128xf32>
    %375 = arith.mulf %359, %367 : vector<2x128xf32>
    %376 = arith.addf %374, %375 : vector<2x128xf32>
    %377 = math.tanh %376 : vector<2x128xf32>
    %378 = arith.mulf %373, %377 : vector<2x128xf32>
    %c5 = arith.constant 5 : index
    %c0_80 = arith.constant 0 : index
    %c0_81 = arith.constant 0 : index
    %379 = vector.load %arg6[%c5, %c0_80, %c0_81] : memref<8x2x128xf32, #tpu.memory_space<vmem>>, vector<1x2x128xf32>
    %380 = vector.shape_cast %379 : vector<1x2x128xf32> to vector<2x128xf32>
    %381 = vector.shape_cast %378 : vector<2x128xf32> to vector<1x2x128xf32>
    tpu.vector_store %arg6[%c5, %c0_80, %c0_81], %381 {strides = array<i32>} : memref<8x2x128xf32, #tpu.memory_space<vmem>>, vector<1x2x128xf32>,
    %382 = vector.extract_strided_slice %11 {offsets = [12, 0], sizes = [2, 512], strides = [1, 1]} : vector<16x512xf32> to vector<2x512xf32>
    %cst_82 = arith.constant dense<0.000000e+00> : vector<2x512xf32>
    %383 = tpu.matmul %348, %0, %cst_82 {dimension_numbers = #tpu.dot_dimension_numbers<[1], [0], [0], [1], [0, 0, 1, 1], [], []>} : vector<2x128xf32>, vector<128x512xf32>, vector<2x512xf32> -> vector<2x512xf32>
    %384 = arith.addf %382, %383 : vector<2x512xf32>
    %385 = vector.extract_strided_slice %384 {offsets = [0, 0], sizes = [2, 128], strides = [1, 1]} : vector<2x512xf32> to vector<2x128xf32>
    %386 = arith.negf %385 : vector<2x128xf32>
    %387 = math.exp %386 : vector<2x128xf32>
    %cst_83 = arith.constant 1.000000e+00 : f32
    %388 = vector.broadcast %cst_83 : f32 to vector<2x128xf32>
    %389 = arith.addf %388, %387 : vector<2x128xf32>
    %390 = arith.divf %388, %389 : vector<2x128xf32>
    %391 = vector.extract_strided_slice %384 {offsets = [0, 128], sizes = [2, 128], strides = [1, 1]} : vector<2x512xf32> to vector<2x128xf32>
    %392 = arith.negf %391 : vector<2x128xf32>
    %393 = math.exp %392 : vector<2x128xf32>
    %cst_84 = arith.constant 1.000000e+00 : f32
    %394 = vector.broadcast %cst_84 : f32 to vector<2x128xf32>
    %395 = arith.addf %394, %393 : vector<2x128xf32>
    %396 = arith.divf %394, %395 : vector<2x128xf32>
    %397 = vector.extract_strided_slice %384 {offsets = [0, 256], sizes = [2, 128], strides = [1, 1]} : vector<2x512xf32> to vector<2x128xf32>
    %398 = math.tanh %397 : vector<2x128xf32>
    %399 = vector.extract_strided_slice %384 {offsets = [0, 384], sizes = [2, 128], strides = [1, 1]} : vector<2x512xf32> to vector<2x128xf32>
    %400 = arith.negf %399 : vector<2x128xf32>
    %401 = math.exp %400 : vector<2x128xf32>
    %cst_85 = arith.constant 1.000000e+00 : f32
    %402 = vector.broadcast %cst_85 : f32 to vector<2x128xf32>
    %403 = arith.addf %402, %401 : vector<2x128xf32>
    %404 = arith.divf %402, %403 : vector<2x128xf32>
    %405 = arith.mulf %396, %346 : vector<2x128xf32>
    %406 = arith.mulf %390, %398 : vector<2x128xf32>
    %407 = arith.addf %405, %406 : vector<2x128xf32>
    %408 = math.tanh %407 : vector<2x128xf32>
    %409 = arith.mulf %404, %408 : vector<2x128xf32>
    %cst_86 = arith.constant 0.000000e+00 : f32
    %410 = vector.broadcast %cst_86 : f32 to vector<2x128xf32>
    %411 = arith.maximumf %409, %410 : vector<2x128xf32>
    %412 = tpu.concatenate %411, %378 in 1 : vector<2x128xf32>, vector<2x128xf32> -> vector<2x256xf32>
    %cst_87 = arith.constant dense<0.000000e+00> : vector<2x512xf32>
    %413 = tpu.matmul %412, %1, %cst_87 {dimension_numbers = #tpu.dot_dimension_numbers<[1], [0], [0], [1], [0, 0, 1, 1], [], []>} : vector<2x256xf32>, vector<256x512xf32>, vector<2x512xf32> -> vector<2x512xf32>
    %414 = arith.addf %413, %4 : vector<2x512xf32>
    %415 = vector.extract_strided_slice %414 {offsets = [0, 0], sizes = [2, 128], strides = [1, 1]} : vector<2x512xf32> to vector<2x128xf32>
    %416 = arith.negf %415 : vector<2x128xf32>
    %417 = math.exp %416 : vector<2x128xf32>
    %cst_88 = arith.constant 1.000000e+00 : f32
    %418 = vector.broadcast %cst_88 : f32 to vector<2x128xf32>
    %419 = arith.addf %418, %417 : vector<2x128xf32>
    %420 = arith.divf %418, %419 : vector<2x128xf32>
    %421 = vector.extract_strided_slice %414 {offsets = [0, 128], sizes = [2, 128], strides = [1, 1]} : vector<2x512xf32> to vector<2x128xf32>
    %422 = arith.negf %421 : vector<2x128xf32>
    %423 = math.exp %422 : vector<2x128xf32>
    %cst_89 = arith.constant 1.000000e+00 : f32
    %424 = vector.broadcast %cst_89 : f32 to vector<2x128xf32>
    %425 = arith.addf %424, %423 : vector<2x128xf32>
    %426 = arith.divf %424, %425 : vector<2x128xf32>
    %427 = vector.extract_strided_slice %414 {offsets = [0, 256], sizes = [2, 128], strides = [1, 1]} : vector<2x512xf32> to vector<2x128xf32>
    %428 = math.tanh %427 : vector<2x128xf32>
    %429 = vector.extract_strided_slice %414 {offsets = [0, 384], sizes = [2, 128], strides = [1, 1]} : vector<2x512xf32> to vector<2x128xf32>
    %430 = arith.negf %429 : vector<2x128xf32>
    %431 = math.exp %430 : vector<2x128xf32>
    %cst_90 = arith.constant 1.000000e+00 : f32
    %432 = vector.broadcast %cst_90 : f32 to vector<2x128xf32>
    %433 = arith.addf %432, %431 : vector<2x128xf32>
    %434 = arith.divf %432, %433 : vector<2x128xf32>
    %435 = arith.mulf %426, %376 : vector<2x128xf32>
    %436 = arith.mulf %420, %428 : vector<2x128xf32>
    %437 = arith.addf %435, %436 : vector<2x128xf32>
    %438 = math.tanh %437 : vector<2x128xf32>
    %439 = arith.mulf %434, %438 : vector<2x128xf32>
    %c6 = arith.constant 6 : index
    %c0_91 = arith.constant 0 : index
    %c0_92 = arith.constant 0 : index
    %440 = vector.load %arg6[%c6, %c0_91, %c0_92] : memref<8x2x128xf32, #tpu.memory_space<vmem>>, vector<1x2x128xf32>
    %441 = vector.shape_cast %440 : vector<1x2x128xf32> to vector<2x128xf32>
    %442 = vector.shape_cast %439 : vector<2x128xf32> to vector<1x2x128xf32>
    tpu.vector_store %arg6[%c6, %c0_91, %c0_92], %442 {strides = array<i32>} : memref<8x2x128xf32, #tpu.memory_space<vmem>>, vector<1x2x128xf32>,
    %443 = vector.extract_strided_slice %11 {offsets = [14, 0], sizes = [2, 512], strides = [1, 1]} : vector<16x512xf32> to vector<2x512xf32>
    %cst_93 = arith.constant dense<0.000000e+00> : vector<2x512xf32>
    %444 = tpu.matmul %409, %0, %cst_93 {dimension_numbers = #tpu.dot_dimension_numbers<[1], [0], [0], [1], [0, 0, 1, 1], [], []>} : vector<2x128xf32>, vector<128x512xf32>, vector<2x512xf32> -> vector<2x512xf32>
    %445 = arith.addf %443, %444 : vector<2x512xf32>
    %446 = vector.extract_strided_slice %445 {offsets = [0, 0], sizes = [2, 128], strides = [1, 1]} : vector<2x512xf32> to vector<2x128xf32>
    %447 = arith.negf %446 : vector<2x128xf32>
    %448 = math.exp %447 : vector<2x128xf32>
    %cst_94 = arith.constant 1.000000e+00 : f32
    %449 = vector.broadcast %cst_94 : f32 to vector<2x128xf32>
    %450 = arith.addf %449, %448 : vector<2x128xf32>
    %451 = arith.divf %449, %450 : vector<2x128xf32>
    %452 = vector.extract_strided_slice %445 {offsets = [0, 128], sizes = [2, 128], strides = [1, 1]} : vector<2x512xf32> to vector<2x128xf32>
    %453 = arith.negf %452 : vector<2x128xf32>
    %454 = math.exp %453 : vector<2x128xf32>
    %cst_95 = arith.constant 1.000000e+00 : f32
    %455 = vector.broadcast %cst_95 : f32 to vector<2x128xf32>
    %456 = arith.addf %455, %454 : vector<2x128xf32>
    %457 = arith.divf %455, %456 : vector<2x128xf32>
    %458 = vector.extract_strided_slice %445 {offsets = [0, 256], sizes = [2, 128], strides = [1, 1]} : vector<2x512xf32> to vector<2x128xf32>
    %459 = math.tanh %458 : vector<2x128xf32>
    %460 = vector.extract_strided_slice %445 {offsets = [0, 384], sizes = [2, 128], strides = [1, 1]} : vector<2x512xf32> to vector<2x128xf32>
    %461 = arith.negf %460 : vector<2x128xf32>
    %462 = math.exp %461 : vector<2x128xf32>
    %cst_96 = arith.constant 1.000000e+00 : f32
    %463 = vector.broadcast %cst_96 : f32 to vector<2x128xf32>
    %464 = arith.addf %463, %462 : vector<2x128xf32>
    %465 = arith.divf %463, %464 : vector<2x128xf32>
    %466 = arith.mulf %457, %407 : vector<2x128xf32>
    %467 = arith.mulf %451, %459 : vector<2x128xf32>
    %468 = arith.addf %466, %467 : vector<2x128xf32>
    %469 = math.tanh %468 : vector<2x128xf32>
    %470 = arith.mulf %465, %469 : vector<2x128xf32>
    %cst_97 = arith.constant 0.000000e+00 : f32
    %471 = vector.broadcast %cst_97 : f32 to vector<2x128xf32>
    %472 = arith.maximumf %470, %471 : vector<2x128xf32>
    %473 = tpu.concatenate %472, %439 in 1 : vector<2x128xf32>, vector<2x128xf32> -> vector<2x256xf32>
    %cst_98 = arith.constant dense<0.000000e+00> : vector<2x512xf32>
    %474 = tpu.matmul %473, %1, %cst_98 {dimension_numbers = #tpu.dot_dimension_numbers<[1], [0], [0], [1], [0, 0, 1, 1], [], []>} : vector<2x256xf32>, vector<256x512xf32>, vector<2x512xf32> -> vector<2x512xf32>
    %475 = arith.addf %474, %4 : vector<2x512xf32>
    %476 = vector.extract_strided_slice %475 {offsets = [0, 0], sizes = [2, 128], strides = [1, 1]} : vector<2x512xf32> to vector<2x128xf32>
    %477 = arith.negf %476 : vector<2x128xf32>
    %478 = math.exp %477 : vector<2x128xf32>
    %cst_99 = arith.constant 1.000000e+00 : f32
    %479 = vector.broadcast %cst_99 : f32 to vector<2x128xf32>
    %480 = arith.addf %479, %478 : vector<2x128xf32>
    %481 = arith.divf %479, %480 : vector<2x128xf32>
    %482 = vector.extract_strided_slice %475 {offsets = [0, 128], sizes = [2, 128], strides = [1, 1]} : vector<2x512xf32> to vector<2x128xf32>
    %483 = arith.negf %482 : vector<2x128xf32>
    %484 = math.exp %483 : vector<2x128xf32>
    %cst_100 = arith.constant 1.000000e+00 : f32
    %485 = vector.broadcast %cst_100 : f32 to vector<2x128xf32>
    %486 = arith.addf %485, %484 : vector<2x128xf32>
    %487 = arith.divf %485, %486 : vector<2x128xf32>
    %488 = vector.extract_strided_slice %475 {offsets = [0, 256], sizes = [2, 128], strides = [1, 1]} : vector<2x512xf32> to vector<2x128xf32>
    %489 = math.tanh %488 : vector<2x128xf32>
    %490 = vector.extract_strided_slice %475 {offsets = [0, 384], sizes = [2, 128], strides = [1, 1]} : vector<2x512xf32> to vector<2x128xf32>
    %491 = arith.negf %490 : vector<2x128xf32>
    %492 = math.exp %491 : vector<2x128xf32>
    %cst_101 = arith.constant 1.000000e+00 : f32
    %493 = vector.broadcast %cst_101 : f32 to vector<2x128xf32>
    %494 = arith.addf %493, %492 : vector<2x128xf32>
    %495 = arith.divf %493, %494 : vector<2x128xf32>
    %496 = arith.mulf %487, %437 : vector<2x128xf32>
    %497 = arith.mulf %481, %489 : vector<2x128xf32>
    %498 = arith.addf %496, %497 : vector<2x128xf32>
    %499 = math.tanh %498 : vector<2x128xf32>
    %500 = arith.mulf %495, %499 : vector<2x128xf32>
    %c7 = arith.constant 7 : index
    %c0_102 = arith.constant 0 : index
    %c0_103 = arith.constant 0 : index
    %501 = vector.load %arg6[%c7, %c0_102, %c0_103] : memref<8x2x128xf32, #tpu.memory_space<vmem>>, vector<1x2x128xf32>
    %502 = vector.shape_cast %501 : vector<1x2x128xf32> to vector<2x128xf32>
    %503 = vector.shape_cast %500 : vector<2x128xf32> to vector<1x2x128xf32>
    tpu.vector_store %arg6[%c7, %c0_102, %c0_103], %503 {strides = array<i32>} : memref<8x2x128xf32, #tpu.memory_space<vmem>>, vector<1x2x128xf32>,
    return
  }
}

</mosaic_0001>

<llo_original>
// kernel: sss_encoder_pallas.1
$region0: #{sss_encoder_pallas.1}
  #allocation0 [shape = 'u32[]', space=smem, size = 0x4, offset = 0x4, fixed_abs, tag = 'smem constant byte address 0x4 - core index']
  #allocation1 [shape = 'u32[72,128]{1,0:T(1,128)}', space=vmem, size = 0x9000, scoped, tag = 'internal scratch']
  %s0 = inlined_call_operand.hbm [shape: f32[16,16], index: 0, kind: input, shape index: {}]
  %s1 = inlined_call_operand.hbm [shape: f32[16,512], index: 1, kind: input, shape index: {}]
  %s2 = inlined_call_operand.hbm [shape: f32[1,512], index: 2, kind: input, shape index: {}]
  %s3 = inlined_call_operand.hbm [shape: f32[128,512], index: 3, kind: input, shape index: {}]
  %s4 = inlined_call_operand.hbm [shape: f32[256,512], index: 4, kind: input, shape index: {}]
  %s5 = inlined_call_operand.hbm [shape: f32[1,512], index: 5, kind: input, shape index: {}]
  %s6 = inlined_call_operand.vmem [shape: f32[8,2,128], index: 6, kind: output, shape index: {}]
  %s7 = sld [smem:[#allocation0]]
  $region58: #{sss_encoder_pallas.1} parent=0
    _
  %s9 = ssub.s32 1, %s7
  %s10 = scalar_select 0, %s9, %s7
  $region1: #{sss_encoder_pallas.1} parent=0
    #allocation2 [shape = 'u8[8192]{0}', space=vmem, size = 0x2000, scoped, tag = 'input window, operand 0, single buffered']
    #allocation3 [shape = 's32[1]{0}', space=sflag, size = 0x4, scoped, tag = 'scoped memory for sss_encoder_pallas.1']
    #allocation4 [shape = 'u8[32768]{0}', space=vmem, size = 0x8000, scoped, tag = 'input window, operand 1, single buffered']
    #allocation5 [shape = 's32[1]{0}', space=sflag, size = 0x4, scoped, tag = 'scoped memory for sss_encoder_pallas.1']
    #allocation6 [shape = 'u8[2048]{0}', space=vmem, size = 0x800, scoped, tag = 'input window, operand 2, single buffered']
    #allocation7 [shape = 'u8[262144]{0}', space=vmem, size = 0x40000, scoped, tag = 'input window, operand 3, single buffered']
    #allocation8 [shape = 's32[1]{0}', space=sflag, size = 0x4, scoped, tag = 'scoped memory for sss_encoder_pallas.1']
    #allocation9 [shape = 'u8[524288]{0}', space=vmem, size = 0x80000, scoped, tag = 'input window, operand 4, single buffered']
    #allocation10 [shape = 'u8[2048]{0}', space=vmem, size = 0x800, scoped, tag = 'input window, operand 5, single buffered']
    #allocation11 [shape = 's32[1]{0}', space=sflag, size = 0x4, scoped, tag = 'scoped memory for sss_encoder_pallas.1']
    %11 = vsyncpa [#allocation3], 0
    %12 = vsyncpa [#allocation5], 0
    %13 = vsyncpa [#allocation8], 0
    %14 = vsyncpa [#allocation11], 0
    // Predicated region
    $region2: #{sss_encoder_pallas.1} parent=1 // pred_check
      _
    $region3: #{sss_encoder_pallas.1} parent=1 // pred_check_branch
      %16 = sbr.rel (0) target = $region5
    $region4: #{sss_encoder_pallas.1} parent=1 // pred_region
      %18 = vsyncadd [#allocation3], 0
      %s19 = sshll.u32 %s0, 4
      %s20 = int_to_ptr.hbm [resolvable:$true] %s19
      %s21 = sshll.u32 [#allocation2], 4
      %s22 = int_to_ptr.vmem [resolvable:$true] %s21
      %27 = dma.hbm_to_vmem [thread:$0]  %s20, 256, %s22, [#allocation3], 128, 128, 8
    $region5: #{sss_encoder_pallas.1} parent=1 // pred_fallthru
      _
    // Predicated region
    $region6: #{sss_encoder_pallas.1} parent=1 // pred_check
      _
    $region7: #{sss_encoder_pallas.1} parent=1 // pred_check_branch
      %29 = sbr.rel (0) target = $region9
    $region8: #{sss_encoder_pallas.1} parent=1 // pred_region
      %31 = vsyncadd [#allocation5], 0
      %s32 = sshll.u32 %s1, 4
      %s33 = int_to_ptr.hbm [resolvable:$true] %s32
      %s34 = sshll.u32 [#allocation4], 4
      %s35 = int_to_ptr.vmem [resolvable:$true] %s34
      %40 = dma.hbm_to_vmem [thread:$0]  %s33, 1024, %s35, [#allocation5], 512, 512, 32
    $region9: #{sss_encoder_pallas.1} parent=1 // pred_fallthru
      _
    // Predicated region
    $region10: #{sss_encoder_pallas.1} parent=1 // pred_check
      _
    $region11: #{sss_encoder_pallas.1} parent=1 // pred_check_branch
      %42 = sbr.rel (0) target = $region13
    $region12: #{sss_encoder_pallas.1} parent=1 // pred_region
      %44 = vsyncadd [#allocation5], 0
      %s46 = sshll.u32 %s2, 4
      %s47 = int_to_ptr.hbm [resolvable:$true] %s46
      %s48 = sshll.u32 [#allocation6], 4
      %s49 = int_to_ptr.vmem [resolvable:$true] %s48
      %51 = dma.hbm_to_vmem [thread:$0]  %s47, 64, %s49, [#allocation5]
    $region13: #{sss_encoder_pallas.1} parent=1 // pred_fallthru
      _
    // Predicated region
    $region14: #{sss_encoder_pallas.1} parent=1 // pred_check
      _
    $region15: #{sss_encoder_pallas.1} parent=1 // pred_check_branch
      %53 = sbr.rel (0) target = $region17
    $region16: #{sss_encoder_pallas.1} parent=1 // pred_region
      %55 = vsyncadd [#allocation8], 0
      %s56 = sshll.u32 %s3, 4
      %s57 = int_to_ptr.hbm [resolvable:$true] %s56
      %s58 = sshll.u32 [#allocation7], 4
      %s59 = int_to_ptr.vmem [resolvable:$true] %s58
      %64 = dma.hbm_to_vmem [thread:$0]  %s57, 8192, %s59, [#allocation8], 512, 512, 32
    $region17: #{sss_encoder_pallas.1} parent=1 // pred_fallthru
      _
    // Predicated region
    $region18: #{sss_encoder_pallas.1} parent=1 // pred_check
      _
    $region19: #{sss_encoder_pallas.1} parent=1 // pred_check_branch
      %66 = sbr.rel (0) target = $region21
    $region20: #{sss_encoder_pallas.1} parent=1 // pred_region
      %68 = vsyncadd [#allocation8], 0
      %s69 = sshll.u32 %s4, 4
      %s70 = int_to_ptr.hbm [resolvable:$true] %s69
      %s71 = sshll.u32 [#allocation9], 4
      %s72 = int_to_ptr.vmem [resolvable:$true] %s71
      %77 = dma.hbm_to_vmem [thread:$0]  %s70, 16384, %s72, [#allocation8], 512, 512, 32
    $region21: #{sss_encoder_pallas.1} parent=1 // pred_fallthru
      _
    // Predicated region
    $region22: #{sss_encoder_pallas.1} parent=1 // pred_check
      _
    $region23: #{sss_encoder_pallas.1} parent=1 // pred_check_branch
      %79 = sbr.rel (0) target = $region25
    $region24: #{sss_encoder_pallas.1} parent=1 // pred_region
      %81 = vsyncadd [#allocation11], 0
      %s83 = sshll.u32 %s5, 4
      %s84 = int_to_ptr.hbm [resolvable:$true] %s83
      %s85 = sshll.u32 [#allocation10], 4
      %s86 = int_to_ptr.vmem [resolvable:$true] %s85
      %88 = dma.hbm_to_vmem [thread:$0]  %s84, 64, %s86, [#allocation11]
    $region25: #{sss_encoder_pallas.1} parent=1 // pred_fallthru
      _
    // Predicated region
    $region26: #{sss_encoder_pallas.1} parent=1 // pred_check
      _
    $region27: #{sss_encoder_pallas.1} parent=1 // pred_check_branch
      %90 = sbr.rel (0) target = $region29
    $region28: #{sss_encoder_pallas.1} parent=1 // pred_region
      %92 = dma.done [#allocation3], 256
    $region29: #{sss_encoder_pallas.1} parent=1 // pred_fallthru
      _
    // Predicated region
    $region30: #{sss_encoder_pallas.1} parent=1 // pred_check
      _
    $region31: #{sss_encoder_pallas.1} parent=1 // pred_check_branch
      %94 = sbr.rel (0) target = $region33
    $region32: #{sss_encoder_pallas.1} parent=1 // pred_region
      %96 = dma.done [#allocation5], 1024
    $region33: #{sss_encoder_pallas.1} parent=1 // pred_fallthru
      _
    // Predicated region
    $region34: #{sss_encoder_pallas.1} parent=1 // pred_check
      _
    $region35: #{sss_encoder_pallas.1} parent=1 // pred_check_branch
      %98 = sbr.rel (0) target = $region37
    $region36: #{sss_encoder_pallas.1} parent=1 // pred_region
      %100 = dma.done [#allocation5], 64
    $region37: #{sss_encoder_pallas.1} parent=1 // pred_fallthru
      _
    // Predicated region
    $region38: #{sss_encoder_pallas.1} parent=1 // pred_check
      _
    $region39: #{sss_encoder_pallas.1} parent=1 // pred_check_branch
      %102 = sbr.rel (0) target = $region41
    $region40: #{sss_encoder_pallas.1} parent=1 // pred_region
      %104 = dma.done [#allocation8], 8192
    $region41: #{sss_encoder_pallas.1} parent=1 // pred_fallthru
      _
    // Predicated region
    $region42: #{sss_encoder_pallas.1} parent=1 // pred_check
      _
    $region43: #{sss_encoder_pallas.1} parent=1 // pred_check_branch
      %106 = sbr.rel (0) target = $region45
    $region44: #{sss_encoder_pallas.1} parent=1 // pred_region
      %108 = dma.done [#allocation8], 16384
    $region45: #{sss_encoder_pallas.1} parent=1 // pred_fallthru
      _
    // Predicated region
    $region46: #{sss_encoder_pallas.1} parent=1 // pred_check
      _
    $region47: #{sss_encoder_pallas.1} parent=1 // pred_check_branch
      %110 = sbr.rel (0) target = $region49
    $region48: #{sss_encoder_pallas.1} parent=1 // pred_region
      %112 = dma.done [#allocation11], 64
    $region49: #{sss_encoder_pallas.1} parent=1 // pred_fallthru
      _
    %v113 = vld [vmem:[#allocation7] sm:$0xff]
    %v114 = vld [vmem:[#allocation7 + $0x8] sm:$0xff]
    %v115 = vld [vmem:[#allocation7 + $0x10] sm:$0xff]
    %v116 = vld [vmem:[#allocation7 + $0x18] sm:$0xff]
    %v117 = vld [vmem:[#allocation7 + $0x20] sm:$0xff]
    %v118 = vld [vmem:[#allocation7 + $0x28] sm:$0xff]
    %v119 = vld [vmem:[#allocation7 + $0x30] sm:$0xff]
    %v120 = vld [vmem:[#allocation7 + $0x38] sm:$0xff]
    %v121 = vld [vmem:[#allocation7 + $0x40] sm:$0xff]
    %v122 = vld [vmem:[#allocation7 + $0x48] sm:$0xff]
    %v123 = vld [vmem:[#allocation7 + $0x50] sm:$0xff]
    %v124 = vld [vmem:[#allocation7 + $0x58] sm:$0xff]
    %v125 = vld [vmem:[#allocation7 + $0x60] sm:$0xff]
    %v126 = vld [vmem:[#allocation7 + $0x68] sm:$0xff]
    %v127 = vld [vmem:[#allocation7 + $0x70] sm:$0xff]
    %v128 = vld [vmem:[#allocation7 + $0x78] sm:$0xff]
    %v129 = vld [vmem:[#allocation7 + $0x80] sm:$0xff]
    %v130 = vld [vmem:[#allocation7 + $0x88] sm:$0xff]
    %v131 = vld [vmem:[#allocation7 + $0x90] sm:$0xff]
    %v132 = vld [vmem:[#allocation7 + $0x98] sm:$0xff]
    %v133 = vld [vmem:[#allocation7 + $0xa0] sm:$0xff]
    %v134 = vld [vmem:[#allocation7 + $0xa8] sm:$0xff]
    %v135 = vld [vmem:[#allocation7 + $0xb0] sm:$0xff]
    %v136 = vld [vmem:[#allocation7 + $0xb8] sm:$0xff]
    %v137 = vld [vmem:[#allocation7 + $0xc0] sm:$0xff]
    %v138 = vld [vmem:[#allocation7 + $0xc8] sm:$0xff]
    %v139 = vld [vmem:[#allocation7 + $0xd0] sm:$0xff]
    %v140 = vld [vmem:[#allocation7 + $0xd8] sm:$0xff]
    %v141 = vld [vmem:[#allocation7 + $0xe0] sm:$0xff]
    %v142 = vld [vmem:[#allocation7 + $0xe8] sm:$0xff]
    %v143 = vld [vmem:[#allocation7 + $0xf0] sm:$0xff]
    %v144 = vld [vmem:[#allocation7 + $0xf8] sm:$0xff]
    %v145 = vld [vmem:[#allocation7 + $0x100] sm:$0xff]
    %v146 = vld [vmem:[#allocation7 + $0x108] sm:$0xff]
    %v147 = vld [vmem:[#allocation7 + $0x110] sm:$0xff]
    %v148 = vld [vmem:[#allocation7 + $0x118] sm:$0xff]
    %v149 = vld [vmem:[#allocation7 + $0x120] sm:$0xff]
    %v150 = vld [vmem:[#allocation7 + $0x128] sm:$0xff]
    %v151 = vld [vmem:[#allocation7 + $0x130] sm:$0xff]
    %v152 = vld [vmem:[#allocation7 + $0x138] sm:$0xff]
    %v153 = vld [vmem:[#allocation7 + $0x140] sm:$0xff]
    %v154 = vld [vmem:[#allocation7 + $0x148] sm:$0xff]
    %v155 = vld [vmem:[#allocation7 + $0x150] sm:$0xff]
    %v156 = vld [vmem:[#allocation7 + $0x158] sm:$0xff]
    %v157 = vld [vmem:[#allocation7 + $0x160] sm:$0xff]
    %v158 = vld [vmem:[#allocation7 + $0x168] sm:$0xff]
    %v159 = vld [vmem:[#allocation7 + $0x170] sm:$0xff]
    %v160 = vld [vmem:[#allocation7 + $0x178] sm:$0xff]
    %v161 = vld [vmem:[#allocation7 + $0x180] sm:$0xff]
    %v162 = vld [vmem:[#allocation7 + $0x188] sm:$0xff]
    %v163 = vld [vmem:[#allocation7 + $0x190] sm:$0xff]
    %v164 = vld [vmem:[#allocation7 + $0x198] sm:$0xff]
    %v165 = vld [vmem:[#allocation7 + $0x1a0] sm:$0xff]
    %v166 = vld [vmem:[#allocation7 + $0x1a8] sm:$0xff]
    %v167 = vld [vmem:[#allocation7 + $0x1b0] sm:$0xff]
    %v168 = vld [vmem:[#allocation7 + $0x1b8] sm:$0xff]
    %v169 = vld [vmem:[#allocation7 + $0x1c0] sm:$0xff]
    %v170 = vld [vmem:[#allocation7 + $0x1c8] sm:$0xff]
    %v171 = vld [vmem:[#allocation7 + $0x1d0] sm:$0xff]
    %v172 = vld [vmem:[#allocation7 + $0x1d8] sm:$0xff]
    %v173 = vld [vmem:[#allocation7 + $0x1e0] sm:$0xff]
    %v174 = vld [vmem:[#allocation7 + $0x1e8] sm:$0xff]
    %v175 = vld [vmem:[#allocation7 + $0x1f0] sm:$0xff]
    %v176 = vld [vmem:[#allocation7 + $0x1f8] sm:$0xff]
    %v177 = vld [vmem:[#allocation9] sm:$0xff]
    %v178 = vld [vmem:[#allocation9 + $0x8] sm:$0xff]
    %v179 = vld [vmem:[#allocation9 + $0x10] sm:$0xff]
    %v180 = vld [vmem:[#allocation9 + $0x18] sm:$0xff]
    %v181 = vld [vmem:[#allocation9 + $0x20] sm:$0xff]
    %v182 = vld [vmem:[#allocation9 + $0x28] sm:$0xff]
    %v183 = vld [vmem:[#allocation9 + $0x30] sm:$0xff]
    %v184 = vld [vmem:[#allocation9 + $0x38] sm:$0xff]
    %v185 = vld [vmem:[#allocation9 + $0x40] sm:$0xff]
    %v186 = vld [vmem:[#allocation9 + $0x48] sm:$0xff]
    %v187 = vld [vmem:[#allocation9 + $0x50] sm:$0xff]
    %v188 = vld [vmem:[#allocation9 + $0x58] sm:$0xff]
    %v189 = vld [vmem:[#allocation9 + $0x60] sm:$0xff]
    %v190 = vld [vmem:[#allocation9 + $0x68] sm:$0xff]
    %v191 = vld [vmem:[#allocation9 + $0x70] sm:$0xff]
    %v192 = vld [vmem:[#allocation9 + $0x78] sm:$0xff]
    %v193 = vld [vmem:[#allocation9 + $0x80] sm:$0xff]
    %v194 = vld [vmem:[#allocation9 + $0x88] sm:$0xff]
    %v195 = vld [vmem:[#allocation9 + $0x90] sm:$0xff]
    %v196 = vld [vmem:[#allocation9 + $0x98] sm:$0xff]
    %v197 = vld [vmem:[#allocation9 + $0xa0] sm:$0xff]
    %v198 = vld [vmem:[#allocation9 + $0xa8] sm:$0xff]
    %v199 = vld [vmem:[#allocation9 + $0xb0] sm:$0xff]
    %v200 = vld [vmem:[#allocation9 + $0xb8] sm:$0xff]
    %v201 = vld [vmem:[#allocation9 + $0xc0] sm:$0xff]
    %v202 = vld [vmem:[#allocation9 + $0xc8] sm:$0xff]
    %v203 = vld [vmem:[#allocation9 + $0xd0] sm:$0xff]
    %v204 = vld [vmem:[#allocation9 + $0xd8] sm:$0xff]
    %v205 = vld [vmem:[#allocation9 + $0xe0] sm:$0xff]
    %v206 = vld [vmem:[#allocation9 + $0xe8] sm:$0xff]
    %v207 = vld [vmem:[#allocation9 + $0xf0] sm:$0xff]
    %v208 = vld [vmem:[#allocation9 + $0xf8] sm:$0xff]
    %v209 = vld [vmem:[#allocation9 + $0x100] sm:$0xff]
    %v210 = vld [vmem:[#allocation9 + $0x108] sm:$0xff]
    %v211 = vld [vmem:[#allocation9 + $0x110] sm:$0xff]
    %v212 = vld [vmem:[#allocation9 + $0x118] sm:$0xff]
    %v213 = vld [vmem:[#allocation9 + $0x120] sm:$0xff]
    %v214 = vld [vmem:[#allocation9 + $0x128] sm:$0xff]
    %v215 = vld [vmem:[#allocation9 + $0x130] sm:$0xff]
    %v216 = vld [vmem:[#allocation9 + $0x138] sm:$0xff]
    %v217 = vld [vmem:[#allocation9 + $0x140] sm:$0xff]
    %v218 = vld [vmem:[#allocation9 + $0x148] sm:$0xff]
    %v219 = vld [vmem:[#allocation9 + $0x150] sm:$0xff]
    %v220 = vld [vmem:[#allocation9 + $0x158] sm:$0xff]
    %v221 = vld [vmem:[#allocation9 + $0x160] sm:$0xff]
    %v222 = vld [vmem:[#allocation9 + $0x168] sm:$0xff]
    %v223 = vld [vmem:[#allocation9 + $0x170] sm:$0xff]
    %v224 = vld [vmem:[#allocation9 + $0x178] sm:$0xff]
    %v225 = vld [vmem:[#allocation9 + $0x180] sm:$0xff]
    %v226 = vld [vmem:[#allocation9 + $0x188] sm:$0xff]
    %v227 = vld [vmem:[#allocation9 + $0x190] sm:$0xff]
    %v228 = vld [vmem:[#allocation9 + $0x198] sm:$0xff]
    %v229 = vld [vmem:[#allocation9 + $0x1a0] sm:$0xff]
    %v230 = vld [vmem:[#allocation9 + $0x1a8] sm:$0xff]
    %v231 = vld [vmem:[#allocation9 + $0x1b0] sm:$0xff]
    %v232 = vld [vmem:[#allocation9 + $0x1b8] sm:$0xff]
    %v233 = vld [vmem:[#allocation9 + $0x1c0] sm:$0xff]
    %v234 = vld [vmem:[#allocation9 + $0x1c8] sm:$0xff]
    %v235 = vld [vmem:[#allocation9 + $0x1d0] sm:$0xff]
    %v236 = vld [vmem:[#allocation9 + $0x1d8] sm:$0xff]
    %v237 = vld [vmem:[#allocation9 + $0x1e0] sm:$0xff]
    %v238 = vld [vmem:[#allocation9 + $0x1e8] sm:$0xff]
    %v239 = vld [vmem:[#allocation9 + $0x1f0] sm:$0xff]
    %v240 = vld [vmem:[#allocation9 + $0x1f8] sm:$0xff]
    %v241 = vld [vmem:[#allocation9 + $0x200] sm:$0xff]
    %v242 = vld [vmem:[#allocation9 + $0x208] sm:$0xff]
    %v243 = vld [vmem:[#allocation9 + $0x210] sm:$0xff]
    %v244 = vld [vmem:[#allocation9 + $0x218] sm:$0xff]
    %v245 = vld [vmem:[#allocation9 + $0x220] sm:$0xff]
    %v246 = vld [vmem:[#allocation9 + $0x228] sm:$0xff]
    %v247 = vld [vmem:[#allocation9 + $0x230] sm:$0xff]
    %v248 = vld [vmem:[#allocation9 + $0x238] sm:$0xff]
    %v249 = vld [vmem:[#allocation9 + $0x240] sm:$0xff]
    %v250 = vld [vmem:[#allocation9 + $0x248] sm:$0xff]
    %v251 = vld [vmem:[#allocation9 + $0x250] sm:$0xff]
    %v252 = vld [vmem:[#allocation9 + $0x258] sm:$0xff]
    %v253 = vld [vmem:[#allocation9 + $0x260] sm:$0xff]
    %v254 = vld [vmem:[#allocation9 + $0x268] sm:$0xff]
    %v255 = vld [vmem:[#allocation9 + $0x270] sm:$0xff]
    %v256 = vld [vmem:[#allocation9 + $0x278] sm:$0xff]
    %v257 = vld [vmem:[#allocation9 + $0x280] sm:$0xff]
    %v258 = vld [vmem:[#allocation9 + $0x288] sm:$0xff]
    %v259 = vld [vmem:[#allocation9 + $0x290] sm:$0xff]
    %v260 = vld [vmem:[#allocation9 + $0x298] sm:$0xff]
    %v261 = vld [vmem:[#allocation9 + $0x2a0] sm:$0xff]
    %v262 = vld [vmem:[#allocation9 + $0x2a8] sm:$0xff]
    %v263 = vld [vmem:[#allocation9 + $0x2b0] sm:$0xff]
    %v264 = vld [vmem:[#allocation9 + $0x2b8] sm:$0xff]
    %v265 = vld [vmem:[#allocation9 + $0x2c0] sm:$0xff]
    %v266 = vld [vmem:[#allocation9 + $0x2c8] sm:$0xff]
    %v267 = vld [vmem:[#allocation9 + $0x2d0] sm:$0xff]
    %v268 = vld [vmem:[#allocation9 + $0x2d8] sm:$0xff]
    %v269 = vld [vmem:[#allocation9 + $0x2e0] sm:$0xff]
    %v270 = vld [vmem:[#allocation9 + $0x2e8] sm:$0xff]
    %v271 = vld [vmem:[#allocation9 + $0x2f0] sm:$0xff]
    %v272 = vld [vmem:[#allocation9 + $0x2f8] sm:$0xff]
    %v273 = vld [vmem:[#allocation9 + $0x300] sm:$0xff]
    %v274 = vld [vmem:[#allocation9 + $0x308] sm:$0xff]
    %v275 = vld [vmem:[#allocation9 + $0x310] sm:$0xff]
    %v276 = vld [vmem:[#allocation9 + $0x318] sm:$0xff]
    %v277 = vld [vmem:[#allocation9 + $0x320] sm:$0xff]
    %v278 = vld [vmem:[#allocation9 + $0x328] sm:$0xff]
    %v279 = vld [vmem:[#allocation9 + $0x330] sm:$0xff]
    %v280 = vld [vmem:[#allocation9 + $0x338] sm:$0xff]
    %v281 = vld [vmem:[#allocation9 + $0x340] sm:$0xff]
    %v282 = vld [vmem:[#allocation9 + $0x348] sm:$0xff]
    %v283 = vld [vmem:[#allocation9 + $0x350] sm:$0xff]
    %v284 = vld [vmem:[#allocation9 + $0x358] sm:$0xff]
    %v285 = vld [vmem:[#allocation9 + $0x360] sm:$0xff]
    %v286 = vld [vmem:[#allocation9 + $0x368] sm:$0xff]
    %v287 = vld [vmem:[#allocation9 + $0x370] sm:$0xff]
    %v288 = vld [vmem:[#allocation9 + $0x378] sm:$0xff]
    %v289 = vld [vmem:[#allocation9 + $0x380] sm:$0xff]
    %v290 = vld [vmem:[#allocation9 + $0x388] sm:$0xff]
    %v291 = vld [vmem:[#allocation9 + $0x390] sm:$0xff]
    %v292 = vld [vmem:[#allocation9 + $0x398] sm:$0xff]
    %v293 = vld [vmem:[#allocation9 + $0x3a0] sm:$0xff]
    %v294 = vld [vmem:[#allocation9 + $0x3a8] sm:$0xff]
    %v295 = vld [vmem:[#allocation9 + $0x3b0] sm:$0xff]
    %v296 = vld [vmem:[#allocation9 + $0x3b8] sm:$0xff]
    %v297 = vld [vmem:[#allocation9 + $0x3c0] sm:$0xff]
    %v298 = vld [vmem:[#allocation9 + $0x3c8] sm:$0xff]
    %v299 = vld [vmem:[#allocation9 + $0x3d0] sm:$0xff]
    %v300 = vld [vmem:[#allocation9 + $0x3d8] sm:$0xff]
    %v301 = vld [vmem:[#allocation9 + $0x3e0] sm:$0xff]
    %v302 = vld [vmem:[#allocation9 + $0x3e8] sm:$0xff]
    %v303 = vld [vmem:[#allocation9 + $0x3f0] sm:$0xff]
    %v304 = vld [vmem:[#allocation9 + $0x3f8] sm:$0xff]
    %v305 = vld [vmem:[#allocation10] sm:$0xf]
    %v307 = vperm.slane %v305, 0
    %v308 = vperm.slane %v305, 1
    %v309 = vperm.slane %v305, 2
    %v310 = vperm.slane %v305, 3
    %v315 = vld [vmem:[#allocation2] sm:$0xff]
    %v316 = vld [vmem:[#allocation2 + $0x8] sm:$0xff]
    %v317 = vld [vmem:[#allocation4] sm:$0xff]
    %v318 = vld [vmem:[#allocation4 + $0x8] sm:$0xff]
    %v319 = vld [vmem:[#allocation4 + $0x10] sm:$0xff]
    %v320 = vld [vmem:[#allocation4 + $0x18] sm:$0xff]
    %v321 = vld [vmem:[#allocation4 + $0x20] sm:$0xff]
    %v322 = vld [vmem:[#allocation4 + $0x28] sm:$0xff]
    %v323 = vld [vmem:[#allocation4 + $0x30] sm:$0xff]
    %v324 = vld [vmem:[#allocation4 + $0x38] sm:$0xff]
    %v325 = vld [vmem:[#allocation6] sm:$0xf]
    %v327 = vperm.slane %v325, 0
    %v328 = vperm.slane %v325, 1
    %v329 = vperm.slane %v325, 2
    %v330 = vperm.slane %v325, 3
    %vm335 = vcmask 130048
    %v337 = vsel %vm335, %v315, 0
    %v340 = vsel %vm335, %v316, 0
    %342 = vmatpush.msra.mxu0 0.0
    %343 = vmatpush.msra.mxu0 0.0
    %344 = vmatpush.msra.mxu0 0.0
    %345 = vmatpush.msra.mxu0 0.0
    %346 = vmatpush.msra.mxu0 0.0
    %347 = vmatpush.msra.mxu0 0.0
    %348 = vmatpush.msra.mxu0 0.0
    %349 = vmatpush.msra.mxu0 0.0
    %350 = vmatpush.msra.mxu0 0.0
    %351 = vmatpush.msra.mxu0 0.0
    %352 = vmatpush.msra.mxu0 0.0
    %353 = vmatpush.msra.mxu0 0.0
    %354 = vmatpush.msra.mxu0 0.0
    %355 = vmatpush.msra.mxu0 0.0
    %356 = vmatpush.msra.mxu0 %v321
    %357 = vmatpush.msra.mxu0 %v317
    %358 = vmatmul.f32.gmra.mxu0 %v337
    %v359 = vpop.f32.mrf.mxu0
    %v360 = vadd.f32 %v327, %v359
    %361 = vmatmul.f32.gmra.mxu0 %v340
    %v362 = vpop.f32.mrf.mxu0
    %v363 = vadd.f32 %v327, %v362
    %364 = vdwg.mxu0
    %365 = vmatpush.msra.mxu0 0.0
    %366 = vmatpush.msra.mxu0 0.0
    %367 = vmatpush.msra.mxu0 0.0
    %368 = vmatpush.msra.mxu0 0.0
    %369 = vmatpush.msra.mxu0 0.0
    %370 = vmatpush.msra.mxu0 0.0
    %371 = vmatpush.msra.mxu0 0.0
    %372 = vmatpush.msra.mxu0 0.0
    %373 = vmatpush.msra.mxu0 0.0
    %374 = vmatpush.msra.mxu0 0.0
    %375 = vmatpush.msra.mxu0 0.0
    %376 = vmatpush.msra.mxu0 0.0
    %377 = vmatpush.msra.mxu0 0.0
    %378 = vmatpush.msra.mxu0 0.0
    %379 = vmatpush.msra.mxu0 %v322
    %380 = vmatpush.msra.mxu0 %v318
    %381 = vmatmul.f32.gmra.mxu0 %v337
    %v382 = vpop.f32.mrf.mxu0
    %v383 = vadd.f32 %v328, %v382
    %384 = vmatmul.f32.gmra.mxu0 %v340
    %v385 = vpop.f32.mrf.mxu0
    %v386 = vadd.f32 %v328, %v385
    %387 = vdwg.mxu0
    %388 = vmatpush.msra.mxu0 0.0
    %389 = vmatpush.msra.mxu0 0.0
    %390 = vmatpush.msra.mxu0 0.0
    %391 = vmatpush.msra.mxu0 0.0
    %392 = vmatpush.msra.mxu0 0.0
    %393 = vmatpush.msra.mxu0 0.0
    %394 = vmatpush.msra.mxu0 0.0
    %395 = vmatpush.msra.mxu0 0.0
    %396 = vmatpush.msra.mxu0 0.0
    %397 = vmatpush.msra.mxu0 0.0
    %398 = vmatpush.msra.mxu0 0.0
    %399 = vmatpush.msra.mxu0 0.0
    %400 = vmatpush.msra.mxu0 0.0
    %401 = vmatpush.msra.mxu0 0.0
    %402 = vmatpush.msra.mxu0 %v323
    %403 = vmatpush.msra.mxu0 %v319
    %404 = vmatmul.f32.gmra.mxu0 %v337
    %v405 = vpop.f32.mrf.mxu0
    %v406 = vadd.f32 %v329, %v405
    %407 = vmatmul.f32.gmra.mxu0 %v340
    %v408 = vpop.f32.mrf.mxu0
    %v409 = vadd.f32 %v329, %v408
    %410 = vdwg.mxu0
    %411 = vmatpush.msra.mxu0 0.0
    %412 = vmatpush.msra.mxu0 0.0
    %413 = vmatpush.msra.mxu0 0.0
    %414 = vmatpush.msra.mxu0 0.0
    %415 = vmatpush.msra.mxu0 0.0
    %416 = vmatpush.msra.mxu0 0.0
    %417 = vmatpush.msra.mxu0 0.0
    %418 = vmatpush.msra.mxu0 0.0
    %419 = vmatpush.msra.mxu0 0.0
    %420 = vmatpush.msra.mxu0 0.0
    %421 = vmatpush.msra.mxu0 0.0
    %422 = vmatpush.msra.mxu0 0.0
    %423 = vmatpush.msra.mxu0 0.0
    %424 = vmatpush.msra.mxu0 0.0
    %425 = vmatpush.msra.mxu0 %v324
    %426 = vmatpush.msra.mxu0 %v320
    %427 = vmatmul.f32.gmra.mxu0 %v337
    %v428 = vpop.f32.mrf.mxu0
    %v429 = vadd.f32 %v330, %v428
    %430 = vmatmul.f32.gmra.mxu0 %v340
    %v431 = vpop.f32.mrf.mxu0
    %v432 = vadd.f32 %v330, %v431
    %433 = vdwg.mxu0
    %434 = vmatpush.msra.mxu0 %v173
    %435 = vmatpush.msra.mxu0 %v169
    %436 = vmatpush.msra.mxu0 %v165
    %437 = vmatpush.msra.mxu0 %v161
    %438 = vmatpush.msra.mxu0 %v157
    %439 = vmatpush.msra.mxu0 %v153
    %440 = vmatpush.msra.mxu0 %v149
    %441 = vmatpush.msra.mxu0 %v145
    %442 = vmatpush.msra.mxu0 %v141
    %443 = vmatpush.msra.mxu0 %v137
    %444 = vmatpush.msra.mxu0 %v133
    %445 = vmatpush.msra.mxu0 %v129
    %446 = vmatpush.msra.mxu0 %v125
    %447 = vmatpush.msra.mxu0 %v121
    %448 = vmatpush.msra.mxu0 %v117
    %449 = vmatpush.msra.mxu0 %v113
    %450 = vmatmul.f32.gmra.mxu0 0.0
    %v451 = vpop.f32.mrf.mxu0
    %v452 = vadd.f32 0.0, %v451
    %453 = vdwg.mxu0
    %454 = vmatpush.msra.mxu0 %v174
    %455 = vmatpush.msra.mxu0 %v170
    %456 = vmatpush.msra.mxu0 %v166
    %457 = vmatpush.msra.mxu0 %v162
    %458 = vmatpush.msra.mxu0 %v158
    %459 = vmatpush.msra.mxu0 %v154
    %460 = vmatpush.msra.mxu0 %v150
    %461 = vmatpush.msra.mxu0 %v146
    %462 = vmatpush.msra.mxu0 %v142
    %463 = vmatpush.msra.mxu0 %v138
    %464 = vmatpush.msra.mxu0 %v134
    %465 = vmatpush.msra.mxu0 %v130
    %466 = vmatpush.msra.mxu0 %v126
    %467 = vmatpush.msra.mxu0 %v122
    %468 = vmatpush.msra.mxu0 %v118
    %469 = vmatpush.msra.mxu0 %v114
    %470 = vmatmul.f32.gmra.mxu0 0.0
    %v471 = vpop.f32.mrf.mxu0
    %v472 = vadd.f32 0.0, %v471
    %473 = vdwg.mxu0
    %474 = vmatpush.msra.mxu0 %v175
    %475 = vmatpush.msra.mxu0 %v171
    %476 = vmatpush.msra.mxu0 %v167
    %477 = vmatpush.msra.mxu0 %v163
    %478 = vmatpush.msra.mxu0 %v159
    %479 = vmatpush.msra.mxu0 %v155
    %480 = vmatpush.msra.mxu0 %v151
    %481 = vmatpush.msra.mxu0 %v147
    %482 = vmatpush.msra.mxu0 %v143
    %483 = vmatpush.msra.mxu0 %v139
    %484 = vmatpush.msra.mxu0 %v135
    %485 = vmatpush.msra.mxu0 %v131
    %486 = vmatpush.msra.mxu0 %v127
    %487 = vmatpush.msra.mxu0 %v123
    %488 = vmatpush.msra.mxu0 %v119
    %489 = vmatpush.msra.mxu0 %v115
    %490 = vmatmul.f32.gmra.mxu0 0.0
    %v491 = vpop.f32.mrf.mxu0
    %v492 = vadd.f32 0.0, %v491
    %493 = vdwg.mxu0
    %494 = vmatpush.msra.mxu0 %v176
    %495 = vmatpush.msra.mxu0 %v172
    %496 = vmatpush.msra.mxu0 %v168
    %497 = vmatpush.msra.mxu0 %v164
    %498 = vmatpush.msra.mxu0 %v160
    %499 = vmatpush.msra.mxu0 %v156
    %500 = vmatpush.msra.mxu0 %v152
    %501 = vmatpush.msra.mxu0 %v148
    %502 = vmatpush.msra.mxu0 %v144
    %503 = vmatpush.msra.mxu0 %v140
    %504 = vmatpush.msra.mxu0 %v136
    %505 = vmatpush.msra.mxu0 %v132
    %506 = vmatpush.msra.mxu0 %v128
    %507 = vmatpush.msra.mxu0 %v124
    %508 = vmatpush.msra.mxu0 %v120
    %509 = vmatpush.msra.mxu0 %v116
    %510 = vmatmul.f32.gmra.mxu0 0.0
    %v511 = vpop.f32.mrf.mxu0
    %v512 = vadd.f32 0.0, %v511
    %513 = vdwg.mxu0
    %v514 = vadd.f32 %v360, %v452
    %v515 = vadd.f32 %v383, %v472
    %v516 = vadd.f32 %v406, %v492
    %v517 = vadd.f32 %v429, %v512
    %v518 = vxor.u32 %v514, 2147483648
    %v519 = vmul.f32 %v518, 1.442695
    %v520 = vpow.pop %v519
    %v521 = vadd.f32 %v520, 1.0
    %v522 = vrcp.pop %v521
    %v523 = vmul.f32 %v521, %v522
    %v524 = vsub.f32 1.0, %v523
    %v525 = vmul.f32 %v522, %v524
    %v526 = vadd.f32 %v522, %v525
    %vm527 = vweird.f32 %v521
    %vm528 = vweird.f32 %v522
    %vm529 = vmor %vm527, %vm528
    %v530 = vsel %vm529, %v522, %v526
    %v531 = vand.u32 2147483647, %v521
    %vm532 = vcmp.eq.f32.partialorder %v531, 8.507059e+37
    %v533 = vand.u32 %v521, 2147483648
    %v534 = vor.u32 1.1754944e-38, %v533
    %v535 = vsel %vm532, %v534, %v530
    %v536 = vmul.f32 1.0, %v535
    %v537 = vxor.u32 %v515, 2147483648
    %v538 = vmul.f32 %v537, 1.442695
    %v539 = vpow.pop %v538
    %v540 = vadd.f32 %v539, 1.0
    %v541 = vrcp.pop %v540
    %v542 = vmul.f32 %v540, %v541
    %v543 = vsub.f32 1.0, %v542
    %v544 = vmul.f32 %v541, %v543
    %v545 = vadd.f32 %v541, %v544
    %vm546 = vweird.f32 %v540
    %vm547 = vweird.f32 %v541
    %vm548 = vmor %vm546, %vm547
    %v549 = vsel %vm548, %v541, %v545
    %v550 = vand.u32 2147483647, %v540
    %vm551 = vcmp.eq.f32.partialorder %v550, 8.507059e+37
    %v552 = vand.u32 %v540, 2147483648
    %v553 = vor.u32 1.1754944e-38, %v552
    %v554 = vsel %vm551, %v553, %v549
    %v555 = vmul.f32 1.0, %v554
    %v556 = vtanh.pop %v516
    %v557 = vxor.u32 %v517, 2147483648
    %v558 = vmul.f32 %v557, 1.442695
    %v559 = vpow.pop %v558
    %v560 = vadd.f32 %v559, 1.0
    %v561 = vrcp.pop %v560
    %v562 = vmul.f32 %v560, %v561
    %v563 = vsub.f32 1.0, %v562
    %v564 = vmul.f32 %v561, %v563
    %v565 = vadd.f32 %v561, %v564
    %vm566 = vweird.f32 %v560
    %vm567 = vweird.f32 %v561
    %vm568 = vmor %vm566, %vm567
    %v569 = vsel %vm568, %v561, %v565
    %v570 = vand.u32 2147483647, %v560
    %vm571 = vcmp.eq.f32.partialorder %v570, 8.507059e+37
    %v572 = vand.u32 %v560, 2147483648
    %v573 = vor.u32 1.1754944e-38, %v572
    %v574 = vsel %vm571, %v573, %v569
    %v575 = vmul.f32 1.0, %v574
    %v576 = vmul.f32 %v555, 0.0
    %v577 = vmul.f32 %v536, %v556
    %v578 = vadd.f32 %v576, %v577
    %v579 = vtanh.pop %v578
    %v580 = vmul.f32 %v575, %v579
    %v581 = vmax.f32 %v580, 0.0
    %582 = vmatpush.msra.mxu0 %v237
    %583 = vmatpush.msra.mxu0 %v233
    %584 = vmatpush.msra.mxu0 %v229
    %585 = vmatpush.msra.mxu0 %v225
    %586 = vmatpush.msra.mxu0 %v221
    %587 = vmatpush.msra.mxu0 %v217
    %588 = vmatpush.msra.mxu0 %v213
    %589 = vmatpush.msra.mxu0 %v209
    %590 = vmatpush.msra.mxu0 %v205
    %591 = vmatpush.msra.mxu0 %v201
    %592 = vmatpush.msra.mxu0 %v197
    %593 = vmatpush.msra.mxu0 %v193
    %594 = vmatpush.msra.mxu0 %v189
    %595 = vmatpush.msra.mxu0 %v185
    %596 = vmatpush.msra.mxu0 %v181
    %597 = vmatpush.msra.mxu0 %v177
    %598 = vmatmul.f32.gmra.mxu0 %v581
    %v599 = vpop.f32.mrf.mxu0
    %v600 = vadd.f32 %v307, %v599
    %601 = vdwg.mxu0
    %602 = vmatpush.msra.mxu0 %v301
    %603 = vmatpush.msra.mxu0 %v297
    %604 = vmatpush.msra.mxu0 %v293
    %605 = vmatpush.msra.mxu0 %v289
    %606 = vmatpush.msra.mxu0 %v285
    %607 = vmatpush.msra.mxu0 %v281
    %608 = vmatpush.msra.mxu0 %v277
    %609 = vmatpush.msra.mxu0 %v273
    %610 = vmatpush.msra.mxu0 %v269
    %611 = vmatpush.msra.mxu0 %v265
    %612 = vmatpush.msra.mxu0 %v261
    %613 = vmatpush.msra.mxu0 %v257
    %614 = vmatpush.msra.mxu0 %v253
    %615 = vmatpush.msra.mxu0 %v249
    %616 = vmatpush.msra.mxu0 %v245
    %617 = vmatpush.msra.mxu0 %v241
    %618 = vmatmul.f32.gmra.mxu0 0.0
    %v619 = vpop.f32.mrf.mxu0
    %v620 = vadd.f32 %v600, %v619
    %621 = vdwg.mxu0
    %622 = vmatpush.msra.mxu0 %v238
    %623 = vmatpush.msra.mxu0 %v234
    %624 = vmatpush.msra.mxu0 %v230
    %625 = vmatpush.msra.mxu0 %v226
    %626 = vmatpush.msra.mxu0 %v222
    %627 = vmatpush.msra.mxu0 %v218
    %628 = vmatpush.msra.mxu0 %v214
    %629 = vmatpush.msra.mxu0 %v210
    %630 = vmatpush.msra.mxu0 %v206
    %631 = vmatpush.msra.mxu0 %v202
    %632 = vmatpush.msra.mxu0 %v198
    %633 = vmatpush.msra.mxu0 %v194
    %634 = vmatpush.msra.mxu0 %v190
    %635 = vmatpush.msra.mxu0 %v186
    %636 = vmatpush.msra.mxu0 %v182
    %637 = vmatpush.msra.mxu0 %v178
    %638 = vmatmul.f32.gmra.mxu0 %v581
    %v639 = vpop.f32.mrf.mxu0
    %v640 = vadd.f32 %v308, %v639
    %641 = vdwg.mxu0
    %642 = vmatpush.msra.mxu0 %v302
    %643 = vmatpush.msra.mxu0 %v298
    %644 = vmatpush.msra.mxu0 %v294
    %645 = vmatpush.msra.mxu0 %v290
    %646 = vmatpush.msra.mxu0 %v286
    %647 = vmatpush.msra.mxu0 %v282
    %648 = vmatpush.msra.mxu0 %v278
    %649 = vmatpush.msra.mxu0 %v274
    %650 = vmatpush.msra.mxu0 %v270
    %651 = vmatpush.msra.mxu0 %v266
    %652 = vmatpush.msra.mxu0 %v262
    %653 = vmatpush.msra.mxu0 %v258
    %654 = vmatpush.msra.mxu0 %v254
    %655 = vmatpush.msra.mxu0 %v250
    %656 = vmatpush.msra.mxu0 %v246
    %657 = vmatpush.msra.mxu0 %v242
    %658 = vmatmul.f32.gmra.mxu0 0.0
    %v659 = vpop.f32.mrf.mxu0
    %v660 = vadd.f32 %v640, %v659
    %661 = vdwg.mxu0
    %662 = vmatpush.msra.mxu0 %v239
    %663 = vmatpush.msra.mxu0 %v235
    %664 = vmatpush.msra.mxu0 %v231
    %665 = vmatpush.msra.mxu0 %v227
    %666 = vmatpush.msra.mxu0 %v223
    %667 = vmatpush.msra.mxu0 %v219
    %668 = vmatpush.msra.mxu0 %v215
    %669 = vmatpush.msra.mxu0 %v211
    %670 = vmatpush.msra.mxu0 %v207
    %671 = vmatpush.msra.mxu0 %v203
    %672 = vmatpush.msra.mxu0 %v199
    %673 = vmatpush.msra.mxu0 %v195
    %674 = vmatpush.msra.mxu0 %v191
    %675 = vmatpush.msra.mxu0 %v187
    %676 = vmatpush.msra.mxu0 %v183
    %677 = vmatpush.msra.mxu0 %v179
    %678 = vmatmul.f32.gmra.mxu0 %v581
    %v679 = vpop.f32.mrf.mxu0
    %v680 = vadd.f32 %v309, %v679
    %681 = vdwg.mxu0
    %682 = vmatpush.msra.mxu0 %v303
    %683 = vmatpush.msra.mxu0 %v299
    %684 = vmatpush.msra.mxu0 %v295
    %685 = vmatpush.msra.mxu0 %v291
    %686 = vmatpush.msra.mxu0 %v287
    %687 = vmatpush.msra.mxu0 %v283
    %688 = vmatpush.msra.mxu0 %v279
    %689 = vmatpush.msra.mxu0 %v275
    %690 = vmatpush.msra.mxu0 %v271
    %691 = vmatpush.msra.mxu0 %v267
    %692 = vmatpush.msra.mxu0 %v263
    %693 = vmatpush.msra.mxu0 %v259
    %694 = vmatpush.msra.mxu0 %v255
    %695 = vmatpush.msra.mxu0 %v251
    %696 = vmatpush.msra.mxu0 %v247
    %697 = vmatpush.msra.mxu0 %v243
    %698 = vmatmul.f32.gmra.mxu0 0.0
    %v699 = vpop.f32.mrf.mxu0
    %v700 = vadd.f32 %v680, %v699
    %701 = vdwg.mxu0
    %702 = vmatpush.msra.mxu0 %v240
    %703 = vmatpush.msra.mxu0 %v236
    %704 = vmatpush.msra.mxu0 %v232
    %705 = vmatpush.msra.mxu0 %v228
    %706 = vmatpush.msra.mxu0 %v224
    %707 = vmatpush.msra.mxu0 %v220
    %708 = vmatpush.msra.mxu0 %v216
    %709 = vmatpush.msra.mxu0 %v212
    %710 = vmatpush.msra.mxu0 %v208
    %711 = vmatpush.msra.mxu0 %v204
    %712 = vmatpush.msra.mxu0 %v200
    %713 = vmatpush.msra.mxu0 %v196
    %714 = vmatpush.msra.mxu0 %v192
    %715 = vmatpush.msra.mxu0 %v188
    %716 = vmatpush.msra.mxu0 %v184
    %717 = vmatpush.msra.mxu0 %v180
    %718 = vmatmul.f32.gmra.mxu0 %v581
    %v719 = vpop.f32.mrf.mxu0
    %v720 = vadd.f32 %v310, %v719
    %721 = vdwg.mxu0
    %722 = vmatpush.msra.mxu0 %v304
    %723 = vmatpush.msra.mxu0 %v300
    %724 = vmatpush.msra.mxu0 %v296
    %725 = vmatpush.msra.mxu0 %v292
    %726 = vmatpush.msra.mxu0 %v288
    %727 = vmatpush.msra.mxu0 %v284
    %728 = vmatpush.msra.mxu0 %v280
    %729 = vmatpush.msra.mxu0 %v276
    %730 = vmatpush.msra.mxu0 %v272
    %731 = vmatpush.msra.mxu0 %v268
    %732 = vmatpush.msra.mxu0 %v264
    %733 = vmatpush.msra.mxu0 %v260
    %734 = vmatpush.msra.mxu0 %v256
    %735 = vmatpush.msra.mxu0 %v252
    %736 = vmatpush.msra.mxu0 %v248
    %737 = vmatpush.msra.mxu0 %v244
    %738 = vmatmul.f32.gmra.mxu0 0.0
    %v739 = vpop.f32.mrf.mxu0
    %v740 = vadd.f32 %v720, %v739
    %741 = vdwg.mxu0
    %v742 = vxor.u32 %v620, 2147483648
    %v743 = vmul.f32 %v742, 1.442695
    %v744 = vpow.pop %v743
    %v745 = vadd.f32 %v744, 1.0
    %v746 = vrcp.pop %v745
    %v747 = vmul.f32 %v745, %v746
    %v748 = vsub.f32 1.0, %v747
    %v749 = vmul.f32 %v746, %v748
    %v750 = vadd.f32 %v746, %v749
    %vm751 = vweird.f32 %v745
    %vm752 = vweird.f32 %v746
    %vm753 = vmor %vm751, %vm752
    %v754 = vsel %vm753, %v746, %v750
    %v755 = vand.u32 2147483647, %v745
    %vm756 = vcmp.eq.f32.partialorder %v755, 8.507059e+37
    %v757 = vand.u32 %v745, 2147483648
    %v758 = vor.u32 1.1754944e-38, %v757
    %v759 = vsel %vm756, %v758, %v754
    %v760 = vmul.f32 1.0, %v759
    %v761 = vxor.u32 %v660, 2147483648
    %v762 = vmul.f32 %v761, 1.442695
    %v763 = vpow.pop %v762
    %v764 = vadd.f32 %v763, 1.0
    %v765 = vrcp.pop %v764
    %v766 = vmul.f32 %v764, %v765
    %v767 = vsub.f32 1.0, %v766
    %v768 = vmul.f32 %v765, %v767
    %v769 = vadd.f32 %v765, %v768
    %vm770 = vweird.f32 %v764
    %vm771 = vweird.f32 %v765
    %vm772 = vmor %vm770, %vm771
    %v773 = vsel %vm772, %v765, %v769
    %v774 = vand.u32 2147483647, %v764
    %vm775 = vcmp.eq.f32.partialorder %v774, 8.507059e+37
    %v776 = vand.u32 %v764, 2147483648
    %v777 = vor.u32 1.1754944e-38, %v776
    %v778 = vsel %vm775, %v777, %v773
    %v779 = vmul.f32 1.0, %v778
    %v780 = vtanh.pop %v700
    %v781 = vxor.u32 %v740, 2147483648
    %v782 = vmul.f32 %v781, 1.442695
    %v783 = vpow.pop %v782
    %v784 = vadd.f32 %v783, 1.0
    %v785 = vrcp.pop %v784
    %v786 = vmul.f32 %v784, %v785
    %v787 = vsub.f32 1.0, %v786
    %v788 = vmul.f32 %v785, %v787
    %v789 = vadd.f32 %v785, %v788
    %vm790 = vweird.f32 %v784
    %vm791 = vweird.f32 %v785
    %vm792 = vmor %vm790, %vm791
    %v793 = vsel %vm792, %v785, %v789
    %v794 = vand.u32 2147483647, %v784
    %vm795 = vcmp.eq.f32.partialorder %v794, 8.507059e+37
    %v796 = vand.u32 %v784, 2147483648
    %v797 = vor.u32 1.1754944e-38, %v796
    %v798 = vsel %vm795, %v797, %v793
    %v799 = vmul.f32 1.0, %v798
    %v800 = vmul.f32 %v779, 0.0
    %v801 = vmul.f32 %v760, %v780
    %v802 = vadd.f32 %v800, %v801
    %v803 = vtanh.pop %v802
    %v804 = vmul.f32 %v799, %v803
    %805 = vst [vmem:[%s6] sm:$0x3] %v804
    %806 = vmatpush.msra.mxu0 %v173
    %807 = vmatpush.msra.mxu0 %v169
    %808 = vmatpush.msra.mxu0 %v165
    %809 = vmatpush.msra.mxu0 %v161
    %810 = vmatpush.msra.mxu0 %v157
    %811 = vmatpush.msra.mxu0 %v153
    %812 = vmatpush.msra.mxu0 %v149
    %813 = vmatpush.msra.mxu0 %v145
    %814 = vmatpush.msra.mxu0 %v141
    %815 = vmatpush.msra.mxu0 %v137
    %816 = vmatpush.msra.mxu0 %v133
    %817 = vmatpush.msra.mxu0 %v129
    %818 = vmatpush.msra.mxu0 %v125
    %819 = vmatpush.msra.mxu0 %v121
    %820 = vmatpush.msra.mxu0 %v117
    %821 = vmatpush.msra.mxu0 %v113
    %822 = vmatmul.f32.gmra.mxu0 %v580
    %v823 = vpop.f32.mrf.mxu0
    %v824 = vadd.f32 0.0, %v823
    %825 = vdwg.mxu0
    %826 = vmatpush.msra.mxu0 %v174
    %827 = vmatpush.msra.mxu0 %v170
    %828 = vmatpush.msra.mxu0 %v166
    %829 = vmatpush.msra.mxu0 %v162
    %830 = vmatpush.msra.mxu0 %v158
    %831 = vmatpush.msra.mxu0 %v154
    %832 = vmatpush.msra.mxu0 %v150
    %833 = vmatpush.msra.mxu0 %v146
    %834 = vmatpush.msra.mxu0 %v142
    %835 = vmatpush.msra.mxu0 %v138
    %836 = vmatpush.msra.mxu0 %v134
    %837 = vmatpush.msra.mxu0 %v130
    %838 = vmatpush.msra.mxu0 %v126
    %839 = vmatpush.msra.mxu0 %v122
    %840 = vmatpush.msra.mxu0 %v118
    %841 = vmatpush.msra.mxu0 %v114
    %842 = vmatmul.f32.gmra.mxu0 %v580
    %v843 = vpop.f32.mrf.mxu0
    %v844 = vadd.f32 0.0, %v843
    %845 = vdwg.mxu0
    %846 = vmatpush.msra.mxu0 %v175
    %847 = vmatpush.msra.mxu0 %v171
    %848 = vmatpush.msra.mxu0 %v167
    %849 = vmatpush.msra.mxu0 %v163
    %850 = vmatpush.msra.mxu0 %v159
    %851 = vmatpush.msra.mxu0 %v155
    %852 = vmatpush.msra.mxu0 %v151
    %853 = vmatpush.msra.mxu0 %v147
    %854 = vmatpush.msra.mxu0 %v143
    %855 = vmatpush.msra.mxu0 %v139
    %856 = vmatpush.msra.mxu0 %v135
    %857 = vmatpush.msra.mxu0 %v131
    %858 = vmatpush.msra.mxu0 %v127
    %859 = vmatpush.msra.mxu0 %v123
    %860 = vmatpush.msra.mxu0 %v119
    %861 = vmatpush.msra.mxu0 %v115
    %862 = vmatmul.f32.gmra.mxu0 %v580
    %v863 = vpop.f32.mrf.mxu0
    %v864 = vadd.f32 0.0, %v863
    %865 = vdwg.mxu0
    %866 = vmatpush.msra.mxu0 %v176
    %867 = vmatpush.msra.mxu0 %v172
    %868 = vmatpush.msra.mxu0 %v168
    %869 = vmatpush.msra.mxu0 %v164
    %870 = vmatpush.msra.mxu0 %v160
    %871 = vmatpush.msra.mxu0 %v156
    %872 = vmatpush.msra.mxu0 %v152
    %873 = vmatpush.msra.mxu0 %v148
    %874 = vmatpush.msra.mxu0 %v144
    %875 = vmatpush.msra.mxu0 %v140
    %876 = vmatpush.msra.mxu0 %v136
    %877 = vmatpush.msra.mxu0 %v132
    %878 = vmatpush.msra.mxu0 %v128
    %879 = vmatpush.msra.mxu0 %v124
    %880 = vmatpush.msra.mxu0 %v120
    %881 = vmatpush.msra.mxu0 %v116
    %882 = vmatmul.f32.gmra.mxu0 %v580
    %v883 = vpop.f32.mrf.mxu0
    %v884 = vadd.f32 0.0, %v883
    %885 = vdwg.mxu0
    %v890 = vrot.slane %v824, 6
    %v891 = vrot.slane %v844, 6
    %v892 = vrot.slane %v864, 6
    %v893 = vrot.slane %v884, 6
    %v898 = vadd.f32 %v360, %v890
    %v899 = vadd.f32 %v383, %v891
    %v900 = vadd.f32 %v406, %v892
    %v901 = vadd.f32 %v429, %v893
    %v902 = vxor.u32 %v898, 2147483648
    %v903 = vmul.f32 %v902, 1.442695
    %v904 = vpow.pop %v903
    %v905 = vadd.f32 %v904, 1.0
    %v906 = vrcp.pop %v905
    %v907 = vmul.f32 %v905, %v906
    %v908 = vsub.f32 1.0, %v907
    %v909 = vmul.f32 %v906, %v908
    %v910 = vadd.f32 %v906, %v909
    %vm911 = vweird.f32 %v905
    %vm912 = vweird.f32 %v906
    %vm913 = vmor %vm911, %vm912
    %v914 = vsel %vm913, %v906, %v910
    %v915 = vand.u32 2147483647, %v905
    %vm916 = vcmp.eq.f32.partialorder %v915, 8.507059e+37
    %v917 = vand.u32 %v905, 2147483648
    %v918 = vor.u32 1.1754944e-38, %v917
    %v919 = vsel %vm916, %v918, %v914
    %v920 = vmul.f32 1.0, %v919
    %v921 = vxor.u32 %v899, 2147483648
    %v922 = vmul.f32 %v921, 1.442695
    %v923 = vpow.pop %v922
    %v924 = vadd.f32 %v923, 1.0
    %v925 = vrcp.pop %v924
    %v926 = vmul.f32 %v924, %v925
    %v927 = vsub.f32 1.0, %v926
    %v928 = vmul.f32 %v925, %v927
    %v929 = vadd.f32 %v925, %v928
    %vm930 = vweird.f32 %v924
    %vm931 = vweird.f32 %v925
    %vm932 = vmor %vm930, %vm931
    %v933 = vsel %vm932, %v925, %v929
    %v934 = vand.u32 2147483647, %v924
    %vm935 = vcmp.eq.f32.partialorder %v934, 8.507059e+37
    %v936 = vand.u32 %v924, 2147483648
    %v937 = vor.u32 1.1754944e-38, %v936
    %v938 = vsel %vm935, %v937, %v933
    %v939 = vmul.f32 1.0, %v938
    %v940 = vtanh.pop %v900
    %v941 = vxor.u32 %v901, 2147483648
    %v942 = vmul.f32 %v941, 1.442695
    %v943 = vpow.pop %v942
    %v944 = vadd.f32 %v943, 1.0
    %v945 = vrcp.pop %v944
    %v946 = vmul.f32 %v944, %v945
    %v947 = vsub.f32 1.0, %v946
    %v948 = vmul.f32 %v945, %v947
    %v949 = vadd.f32 %v945, %v948
    %vm950 = vweird.f32 %v944
    %vm951 = vweird.f32 %v945
    %vm952 = vmor %vm950, %vm951
    %v953 = vsel %vm952, %v945, %v949
    %v954 = vand.u32 2147483647, %v944
    %vm955 = vcmp.eq.f32.partialorder %v954, 8.507059e+37
    %v956 = vand.u32 %v944, 2147483648
    %v957 = vor.u32 1.1754944e-38, %v956
    %v958 = vsel %vm955, %v957, %v953
    %v959 = vmul.f32 1.0, %v958
    %v961 = vrot.slane %v578, 6
    %v963 = vmul.f32 %v939, %v961
    %v964 = vmul.f32 %v920, %v940
    %v965 = vadd.f32 %v963, %v964
    %v966 = vtanh.pop %v965
    %v967 = vmul.f32 %v959, %v966
    %v968 = vmax.f32 %v967, 0.0
    %v970 = vrot.slane %v804, 6
    %v972 = vrot.slane %v968, 2
    %v973 = vrot.slane %v970, 2
    %976 = vmatpush.msra.mxu0 %v237
    %977 = vmatpush.msra.mxu0 %v233
    %978 = vmatpush.msra.mxu0 %v229
    %979 = vmatpush.msra.mxu0 %v225
    %980 = vmatpush.msra.mxu0 %v221
    %981 = vmatpush.msra.mxu0 %v217
    %982 = vmatpush.msra.mxu0 %v213
    %983 = vmatpush.msra.mxu0 %v209
    %984 = vmatpush.msra.mxu0 %v205
    %985 = vmatpush.msra.mxu0 %v201
    %986 = vmatpush.msra.mxu0 %v197
    %987 = vmatpush.msra.mxu0 %v193
    %988 = vmatpush.msra.mxu0 %v189
    %989 = vmatpush.msra.mxu0 %v185
    %990 = vmatpush.msra.mxu0 %v181
    %991 = vmatpush.msra.mxu0 %v177
    %992 = vmatmul.f32.gmra.mxu0 %v972
    %v993 = vpop.f32.mrf.mxu0
    %v994 = vadd.f32 %v307, %v993
    %995 = vdwg.mxu0
    %996 = vmatpush.msra.mxu0 %v301
    %997 = vmatpush.msra.mxu0 %v297
    %998 = vmatpush.msra.mxu0 %v293
    %999 = vmatpush.msra.mxu0 %v289
    %1000 = vmatpush.msra.mxu0 %v285
    %1001 = vmatpush.msra.mxu0 %v281
    %1002 = vmatpush.msra.mxu0 %v277
    %1003 = vmatpush.msra.mxu0 %v273
    %1004 = vmatpush.msra.mxu0 %v269
    %1005 = vmatpush.msra.mxu0 %v265
    %1006 = vmatpush.msra.mxu0 %v261
    %1007 = vmatpush.msra.mxu0 %v257
    %1008 = vmatpush.msra.mxu0 %v253
    %1009 = vmatpush.msra.mxu0 %v249
    %1010 = vmatpush.msra.mxu0 %v245
    %1011 = vmatpush.msra.mxu0 %v241
    %1012 = vmatmul.f32.gmra.mxu0 %v973
    %v1013 = vpop.f32.mrf.mxu0
    %v1014 = vadd.f32 %v994, %v1013
    %1015 = vdwg.mxu0
    %1016 = vmatpush.msra.mxu0 %v238
    %1017 = vmatpush.msra.mxu0 %v234
    %1018 = vmatpush.msra.mxu0 %v230
    %1019 = vmatpush.msra.mxu0 %v226
    %1020 = vmatpush.msra.mxu0 %v222
    %1021 = vmatpush.msra.mxu0 %v218
    %1022 = vmatpush.msra.mxu0 %v214
    %1023 = vmatpush.msra.mxu0 %v210
    %1024 = vmatpush.msra.mxu0 %v206
    %1025 = vmatpush.msra.mxu0 %v202
    %1026 = vmatpush.msra.mxu0 %v198
    %1027 = vmatpush.msra.mxu0 %v194
    %1028 = vmatpush.msra.mxu0 %v190
    %1029 = vmatpush.msra.mxu0 %v186
    %1030 = vmatpush.msra.mxu0 %v182
    %1031 = vmatpush.msra.mxu0 %v178
    %1032 = vmatmul.f32.gmra.mxu0 %v972
    %v1033 = vpop.f32.mrf.mxu0
    %v1034 = vadd.f32 %v308, %v1033
    %1035 = vdwg.mxu0
    %1036 = vmatpush.msra.mxu0 %v302
    %1037 = vmatpush.msra.mxu0 %v298
    %1038 = vmatpush.msra.mxu0 %v294
    %1039 = vmatpush.msra.mxu0 %v290
    %1040 = vmatpush.msra.mxu0 %v286
    %1041 = vmatpush.msra.mxu0 %v282
    %1042 = vmatpush.msra.mxu0 %v278
    %1043 = vmatpush.msra.mxu0 %v274
    %1044 = vmatpush.msra.mxu0 %v270
    %1045 = vmatpush.msra.mxu0 %v266
    %1046 = vmatpush.msra.mxu0 %v262
    %1047 = vmatpush.msra.mxu0 %v258
    %1048 = vmatpush.msra.mxu0 %v254
    %1049 = vmatpush.msra.mxu0 %v250
    %1050 = vmatpush.msra.mxu0 %v246
    %1051 = vmatpush.msra.mxu0 %v242
    %1052 = vmatmul.f32.gmra.mxu0 %v973
    %v1053 = vpop.f32.mrf.mxu0
    %v1054 = vadd.f32 %v1034, %v1053
    %1055 = vdwg.mxu0
    %1056 = vmatpush.msra.mxu0 %v239
    %1057 = vmatpush.msra.mxu0 %v235
    %1058 = vmatpush.msra.mxu0 %v231
    %1059 = vmatpush.msra.mxu0 %v227
    %1060 = vmatpush.msra.mxu0 %v223
    %1061 = vmatpush.msra.mxu0 %v219
    %1062 = vmatpush.msra.mxu0 %v215
    %1063 = vmatpush.msra.mxu0 %v211
    %1064 = vmatpush.msra.mxu0 %v207
    %1065 = vmatpush.msra.mxu0 %v203
    %1066 = vmatpush.msra.mxu0 %v199
    %1067 = vmatpush.msra.mxu0 %v195
    %1068 = vmatpush.msra.mxu0 %v191
    %1069 = vmatpush.msra.mxu0 %v187
    %1070 = vmatpush.msra.mxu0 %v183
    %1071 = vmatpush.msra.mxu0 %v179
    %1072 = vmatmul.f32.gmra.mxu0 %v972
    %v1073 = vpop.f32.mrf.mxu0
    %v1074 = vadd.f32 %v309, %v1073
    %1075 = vdwg.mxu0
    %1076 = vmatpush.msra.mxu0 %v303
    %1077 = vmatpush.msra.mxu0 %v299
    %1078 = vmatpush.msra.mxu0 %v295
    %1079 = vmatpush.msra.mxu0 %v291
    %1080 = vmatpush.msra.mxu0 %v287
    %1081 = vmatpush.msra.mxu0 %v283
    %1082 = vmatpush.msra.mxu0 %v279
    %1083 = vmatpush.msra.mxu0 %v275
    %1084 = vmatpush.msra.mxu0 %v271
    %1085 = vmatpush.msra.mxu0 %v267
    %1086 = vmatpush.msra.mxu0 %v263
    %1087 = vmatpush.msra.mxu0 %v259
    %1088 = vmatpush.msra.mxu0 %v255
    %1089 = vmatpush.msra.mxu0 %v251
    %1090 = vmatpush.msra.mxu0 %v247
    %1091 = vmatpush.msra.mxu0 %v243
    %1092 = vmatmul.f32.gmra.mxu0 %v973
    %v1093 = vpop.f32.mrf.mxu0
    %v1094 = vadd.f32 %v1074, %v1093
    %1095 = vdwg.mxu0
    %1096 = vmatpush.msra.mxu0 %v240
    %1097 = vmatpush.msra.mxu0 %v236
    %1098 = vmatpush.msra.mxu0 %v232
    %1099 = vmatpush.msra.mxu0 %v228
    %1100 = vmatpush.msra.mxu0 %v224
    %1101 = vmatpush.msra.mxu0 %v220
    %1102 = vmatpush.msra.mxu0 %v216
    %1103 = vmatpush.msra.mxu0 %v212
    %1104 = vmatpush.msra.mxu0 %v208
    %1105 = vmatpush.msra.mxu0 %v204
    %1106 = vmatpush.msra.mxu0 %v200
    %1107 = vmatpush.msra.mxu0 %v196
    %1108 = vmatpush.msra.mxu0 %v192
    %1109 = vmatpush.msra.mxu0 %v188
    %1110 = vmatpush.msra.mxu0 %v184
    %1111 = vmatpush.msra.mxu0 %v180
    %1112 = vmatmul.f32.gmra.mxu0 %v972
    %v1113 = vpop.f32.mrf.mxu0
    %v1114 = vadd.f32 %v310, %v1113
    %1115 = vdwg.mxu0
    %1116 = vmatpush.msra.mxu0 %v304
    %1117 = vmatpush.msra.mxu0 %v300
    %1118 = vmatpush.msra.mxu0 %v296
    %1119 = vmatpush.msra.mxu0 %v292
    %1120 = vmatpush.msra.mxu0 %v288
    %1121 = vmatpush.msra.mxu0 %v284
    %1122 = vmatpush.msra.mxu0 %v280
    %1123 = vmatpush.msra.mxu0 %v276
    %1124 = vmatpush.msra.mxu0 %v272
    %1125 = vmatpush.msra.mxu0 %v268
    %1126 = vmatpush.msra.mxu0 %v264
    %1127 = vmatpush.msra.mxu0 %v260
    %1128 = vmatpush.msra.mxu0 %v256
    %1129 = vmatpush.msra.mxu0 %v252
    %1130 = vmatpush.msra.mxu0 %v248
    %1131 = vmatpush.msra.mxu0 %v244
    %1132 = vmatmul.f32.gmra.mxu0 %v973
    %v1133 = vpop.f32.mrf.mxu0
    %v1134 = vadd.f32 %v1114, %v1133
    %1135 = vdwg.mxu0
    %v1136 = vxor.u32 %v1014, 2147483648
    %v1137 = vmul.f32 %v1136, 1.442695
    %v1138 = vpow.pop %v1137
    %v1139 = vadd.f32 %v1138, 1.0
    %v1140 = vrcp.pop %v1139
    %v1141 = vmul.f32 %v1139, %v1140
    %v1142 = vsub.f32 1.0, %v1141
    %v1143 = vmul.f32 %v1140, %v1142
    %v1144 = vadd.f32 %v1140, %v1143
    %vm1145 = vweird.f32 %v1139
    %vm1146 = vweird.f32 %v1140
    %vm1147 = vmor %vm1145, %vm1146
    %v1148 = vsel %vm1147, %v1140, %v1144
    %v1149 = vand.u32 2147483647, %v1139
    %vm1150 = vcmp.eq.f32.partialorder %v1149, 8.507059e+37
    %v1151 = vand.u32 %v1139, 2147483648
    %v1152 = vor.u32 1.1754944e-38, %v1151
    %v1153 = vsel %vm1150, %v1152, %v1148
    %v1154 = vmul.f32 1.0, %v1153
    %v1155 = vxor.u32 %v1054, 2147483648
    %v1156 = vmul.f32 %v1155, 1.442695
    %v1157 = vpow.pop %v1156
    %v1158 = vadd.f32 %v1157, 1.0
    %v1159 = vrcp.pop %v1158
    %v1160 = vmul.f32 %v1158, %v1159
    %v1161 = vsub.f32 1.0, %v1160
    %v1162 = vmul.f32 %v1159, %v1161
    %v1163 = vadd.f32 %v1159, %v1162
    %vm1164 = vweird.f32 %v1158
    %vm1165 = vweird.f32 %v1159
    %vm1166 = vmor %vm1164, %vm1165
    %v1167 = vsel %vm1166, %v1159, %v1163
    %v1168 = vand.u32 2147483647, %v1158
    %vm1169 = vcmp.eq.f32.partialorder %v1168, 8.507059e+37
    %v1170 = vand.u32 %v1158, 2147483648
    %v1171 = vor.u32 1.1754944e-38, %v1170
    %v1172 = vsel %vm1169, %v1171, %v1167
    %v1173 = vmul.f32 1.0, %v1172
    %v1174 = vtanh.pop %v1094
    %v1175 = vxor.u32 %v1134, 2147483648
    %v1176 = vmul.f32 %v1175, 1.442695
    %v1177 = vpow.pop %v1176
    %v1178 = vadd.f32 %v1177, 1.0
    %v1179 = vrcp.pop %v1178
    %v1180 = vmul.f32 %v1178, %v1179
    %v1181 = vsub.f32 1.0, %v1180
    %v1182 = vmul.f32 %v1179, %v1181
    %v1183 = vadd.f32 %v1179, %v1182
    %vm1184 = vweird.f32 %v1178
    %vm1185 = vweird.f32 %v1179
    %vm1186 = vmor %vm1184, %vm1185
    %v1187 = vsel %vm1186, %v1179, %v1183
    %v1188 = vand.u32 2147483647, %v1178
    %vm1189 = vcmp.eq.f32.partialorder %v1188, 8.507059e+37
    %v1190 = vand.u32 %v1178, 2147483648
    %v1191 = vor.u32 1.1754944e-38, %v1190
    %v1192 = vsel %vm1189, %v1191, %v1187
    %v1193 = vmul.f32 1.0, %v1192
    %v1194 = vmul.f32 %v1173, %v802
    %v1195 = vmul.f32 %v1154, %v1174
    %v1196 = vadd.f32 %v1194, %v1195
    %v1197 = vtanh.pop %v1196
    %v1198 = vmul.f32 %v1193, %v1197
    %s1199 = scalar_lea.vmem %s6, 2
    %1200 = vst [vmem:[%s1199] sm:$0x3] %v1198
    %v1202 = vrot.slane %v967, 2
    %1204 = vmatpush.msra.mxu0 %v173
    %1205 = vmatpush.msra.mxu0 %v169
    %1206 = vmatpush.msra.mxu0 %v165
    %1207 = vmatpush.msra.mxu0 %v161
    %1208 = vmatpush.msra.mxu0 %v157
    %1209 = vmatpush.msra.mxu0 %v153
    %1210 = vmatpush.msra.mxu0 %v149
    %1211 = vmatpush.msra.mxu0 %v145
    %1212 = vmatpush.msra.mxu0 %v141
    %1213 = vmatpush.msra.mxu0 %v137
    %1214 = vmatpush.msra.mxu0 %v133
    %1215 = vmatpush.msra.mxu0 %v129
    %1216 = vmatpush.msra.mxu0 %v125
    %1217 = vmatpush.msra.mxu0 %v121
    %1218 = vmatpush.msra.mxu0 %v117
    %1219 = vmatpush.msra.mxu0 %v113
    %1220 = vmatmul.f32.gmra.mxu0 %v1202
    %v1221 = vpop.f32.mrf.mxu0
    %v1222 = vadd.f32 0.0, %v1221
    %1223 = vdwg.mxu0
    %1224 = vmatpush.msra.mxu0 %v174
    %1225 = vmatpush.msra.mxu0 %v170
    %1226 = vmatpush.msra.mxu0 %v166
    %1227 = vmatpush.msra.mxu0 %v162
    %1228 = vmatpush.msra.mxu0 %v158
    %1229 = vmatpush.msra.mxu0 %v154
    %1230 = vmatpush.msra.mxu0 %v150
    %1231 = vmatpush.msra.mxu0 %v146
    %1232 = vmatpush.msra.mxu0 %v142
    %1233 = vmatpush.msra.mxu0 %v138
    %1234 = vmatpush.msra.mxu0 %v134
    %1235 = vmatpush.msra.mxu0 %v130
    %1236 = vmatpush.msra.mxu0 %v126
    %1237 = vmatpush.msra.mxu0 %v122
    %1238 = vmatpush.msra.mxu0 %v118
    %1239 = vmatpush.msra.mxu0 %v114
    %1240 = vmatmul.f32.gmra.mxu0 %v1202
    %v1241 = vpop.f32.mrf.mxu0
    %v1242 = vadd.f32 0.0, %v1241
    %1243 = vdwg.mxu0
    %1244 = vmatpush.msra.mxu0 %v175
    %1245 = vmatpush.msra.mxu0 %v171
    %1246 = vmatpush.msra.mxu0 %v167
    %1247 = vmatpush.msra.mxu0 %v163
    %1248 = vmatpush.msra.mxu0 %v159
    %1249 = vmatpush.msra.mxu0 %v155
    %1250 = vmatpush.msra.mxu0 %v151
    %1251 = vmatpush.msra.mxu0 %v147
    %1252 = vmatpush.msra.mxu0 %v143
    %1253 = vmatpush.msra.mxu0 %v139
    %1254 = vmatpush.msra.mxu0 %v135
    %1255 = vmatpush.msra.mxu0 %v131
    %1256 = vmatpush.msra.mxu0 %v127
    %1257 = vmatpush.msra.mxu0 %v123
    %1258 = vmatpush.msra.mxu0 %v119
    %1259 = vmatpush.msra.mxu0 %v115
    %1260 = vmatmul.f32.gmra.mxu0 %v1202
    %v1261 = vpop.f32.mrf.mxu0
    %v1262 = vadd.f32 0.0, %v1261
    %1263 = vdwg.mxu0
    %1264 = vmatpush.msra.mxu0 %v176
    %1265 = vmatpush.msra.mxu0 %v172
    %1266 = vmatpush.msra.mxu0 %v168
    %1267 = vmatpush.msra.mxu0 %v164
    %1268 = vmatpush.msra.mxu0 %v160
    %1269 = vmatpush.msra.mxu0 %v156
    %1270 = vmatpush.msra.mxu0 %v152
    %1271 = vmatpush.msra.mxu0 %v148
    %1272 = vmatpush.msra.mxu0 %v144
    %1273 = vmatpush.msra.mxu0 %v140
    %1274 = vmatpush.msra.mxu0 %v136
    %1275 = vmatpush.msra.mxu0 %v132
    %1276 = vmatpush.msra.mxu0 %v128
    %1277 = vmatpush.msra.mxu0 %v124
    %1278 = vmatpush.msra.mxu0 %v120
    %1279 = vmatpush.msra.mxu0 %v116
    %1280 = vmatmul.f32.gmra.mxu0 %v1202
    %v1281 = vpop.f32.mrf.mxu0
    %v1282 = vadd.f32 0.0, %v1281
    %1283 = vdwg.mxu0
    %v1288 = vrot.slane %v1222, 4
    %v1289 = vrot.slane %v1242, 4
    %v1290 = vrot.slane %v1262, 4
    %v1291 = vrot.slane %v1282, 4
    %v1296 = vadd.f32 %v360, %v1288
    %v1297 = vadd.f32 %v383, %v1289
    %v1298 = vadd.f32 %v406, %v1290
    %v1299 = vadd.f32 %v429, %v1291
    %v1300 = vxor.u32 %v1296, 2147483648
    %v1301 = vmul.f32 %v1300, 1.442695
    %v1302 = vpow.pop %v1301
    %v1303 = vadd.f32 %v1302, 1.0
    %v1304 = vrcp.pop %v1303
    %v1305 = vmul.f32 %v1303, %v1304
    %v1306 = vsub.f32 1.0, %v1305
    %v1307 = vmul.f32 %v1304, %v1306
    %v1308 = vadd.f32 %v1304, %v1307
    %vm1309 = vweird.f32 %v1303
    %vm1310 = vweird.f32 %v1304
    %vm1311 = vmor %vm1309, %vm1310
    %v1312 = vsel %vm1311, %v1304, %v1308
    %v1313 = vand.u32 2147483647, %v1303
    %vm1314 = vcmp.eq.f32.partialorder %v1313, 8.507059e+37
    %v1315 = vand.u32 %v1303, 2147483648
    %v1316 = vor.u32 1.1754944e-38, %v1315
    %v1317 = vsel %vm1314, %v1316, %v1312
    %v1318 = vmul.f32 1.0, %v1317
    %v1319 = vxor.u32 %v1297, 2147483648
    %v1320 = vmul.f32 %v1319, 1.442695
    %v1321 = vpow.pop %v1320
    %v1322 = vadd.f32 %v1321, 1.0
    %v1323 = vrcp.pop %v1322
    %v1324 = vmul.f32 %v1322, %v1323
    %v1325 = vsub.f32 1.0, %v1324
    %v1326 = vmul.f32 %v1323, %v1325
    %v1327 = vadd.f32 %v1323, %v1326
    %vm1328 = vweird.f32 %v1322
    %vm1329 = vweird.f32 %v1323
    %vm1330 = vmor %vm1328, %vm1329
    %v1331 = vsel %vm1330, %v1323, %v1327
    %v1332 = vand.u32 2147483647, %v1322
    %vm1333 = vcmp.eq.f32.partialorder %v1332, 8.507059e+37
    %v1334 = vand.u32 %v1322, 2147483648
    %v1335 = vor.u32 1.1754944e-38, %v1334
    %v1336 = vsel %vm1333, %v1335, %v1331
    %v1337 = vmul.f32 1.0, %v1336
    %v1338 = vtanh.pop %v1298
    %v1339 = vxor.u32 %v1299, 2147483648
    %v1340 = vmul.f32 %v1339, 1.442695
    %v1341 = vpow.pop %v1340
    %v1342 = vadd.f32 %v1341, 1.0
    %v1343 = vrcp.pop %v1342
    %v1344 = vmul.f32 %v1342, %v1343
    %v1345 = vsub.f32 1.0, %v1344
    %v1346 = vmul.f32 %v1343, %v1345
    %v1347 = vadd.f32 %v1343, %v1346
    %vm1348 = vweird.f32 %v1342
    %vm1349 = vweird.f32 %v1343
    %vm1350 = vmor %vm1348, %vm1349
    %v1351 = vsel %vm1350, %v1343, %v1347
    %v1352 = vand.u32 2147483647, %v1342
    %vm1353 = vcmp.eq.f32.partialorder %v1352, 8.507059e+37
    %v1354 = vand.u32 %v1342, 2147483648
    %v1355 = vor.u32 1.1754944e-38, %v1354
    %v1356 = vsel %vm1353, %v1355, %v1351
    %v1357 = vmul.f32 1.0, %v1356
    %v1359 = vrot.slane %v965, 6
    %v1361 = vmul.f32 %v1337, %v1359
    %v1362 = vmul.f32 %v1318, %v1338
    %v1363 = vadd.f32 %v1361, %v1362
    %v1364 = vtanh.pop %v1363
    %v1365 = vmul.f32 %v1357, %v1364
    %v1366 = vmax.f32 %v1365, 0.0
    %v1368 = vrot.slane %v1198, 4
    %v1370 = vrot.slane %v1366, 4
    %v1371 = vrot.slane %v1368, 4
    %1374 = vmatpush.msra.mxu0 %v237
    %1375 = vmatpush.msra.mxu0 %v233
    %1376 = vmatpush.msra.mxu0 %v229
    %1377 = vmatpush.msra.mxu0 %v225
    %1378 = vmatpush.msra.mxu0 %v221
    %1379 = vmatpush.msra.mxu0 %v217
    %1380 = vmatpush.msra.mxu0 %v213
    %1381 = vmatpush.msra.mxu0 %v209
    %1382 = vmatpush.msra.mxu0 %v205
    %1383 = vmatpush.msra.mxu0 %v201
    %1384 = vmatpush.msra.mxu0 %v197
    %1385 = vmatpush.msra.mxu0 %v193
    %1386 = vmatpush.msra.mxu0 %v189
    %1387 = vmatpush.msra.mxu0 %v185
    %1388 = vmatpush.msra.mxu0 %v181
    %1389 = vmatpush.msra.mxu0 %v177
    %1390 = vmatmul.f32.gmra.mxu0 %v1370
    %v1391 = vpop.f32.mrf.mxu0
    %v1392 = vadd.f32 %v307, %v1391
    %1393 = vdwg.mxu0
    %1394 = vmatpush.msra.mxu0 %v301
    %1395 = vmatpush.msra.mxu0 %v297
    %1396 = vmatpush.msra.mxu0 %v293
    %1397 = vmatpush.msra.mxu0 %v289
    %1398 = vmatpush.msra.mxu0 %v285
    %1399 = vmatpush.msra.mxu0 %v281
    %1400 = vmatpush.msra.mxu0 %v277
    %1401 = vmatpush.msra.mxu0 %v273
    %1402 = vmatpush.msra.mxu0 %v269
    %1403 = vmatpush.msra.mxu0 %v265
    %1404 = vmatpush.msra.mxu0 %v261
    %1405 = vmatpush.msra.mxu0 %v257
    %1406 = vmatpush.msra.mxu0 %v253
    %1407 = vmatpush.msra.mxu0 %v249
    %1408 = vmatpush.msra.mxu0 %v245
    %1409 = vmatpush.msra.mxu0 %v241
    %1410 = vmatmul.f32.gmra.mxu0 %v1371
    %v1411 = vpop.f32.mrf.mxu0
    %v1412 = vadd.f32 %v1392, %v1411
    %1413 = vdwg.mxu0
    %1414 = vmatpush.msra.mxu0 %v238
    %1415 = vmatpush.msra.mxu0 %v234
    %1416 = vmatpush.msra.mxu0 %v230
    %1417 = vmatpush.msra.mxu0 %v226
    %1418 = vmatpush.msra.mxu0 %v222
    %1419 = vmatpush.msra.mxu0 %v218
    %1420 = vmatpush.msra.mxu0 %v214
    %1421 = vmatpush.msra.mxu0 %v210
    %1422 = vmatpush.msra.mxu0 %v206
    %1423 = vmatpush.msra.mxu0 %v202
    %1424 = vmatpush.msra.mxu0 %v198
    %1425 = vmatpush.msra.mxu0 %v194
    %1426 = vmatpush.msra.mxu0 %v190
    %1427 = vmatpush.msra.mxu0 %v186
    %1428 = vmatpush.msra.mxu0 %v182
    %1429 = vmatpush.msra.mxu0 %v178
    %1430 = vmatmul.f32.gmra.mxu0 %v1370
    %v1431 = vpop.f32.mrf.mxu0
    %v1432 = vadd.f32 %v308, %v1431
    %1433 = vdwg.mxu0
    %1434 = vmatpush.msra.mxu0 %v302
    %1435 = vmatpush.msra.mxu0 %v298
    %1436 = vmatpush.msra.mxu0 %v294
    %1437 = vmatpush.msra.mxu0 %v290
    %1438 = vmatpush.msra.mxu0 %v286
    %1439 = vmatpush.msra.mxu0 %v282
    %1440 = vmatpush.msra.mxu0 %v278
    %1441 = vmatpush.msra.mxu0 %v274
    %1442 = vmatpush.msra.mxu0 %v270
    %1443 = vmatpush.msra.mxu0 %v266
    %1444 = vmatpush.msra.mxu0 %v262
    %1445 = vmatpush.msra.mxu0 %v258
    %1446 = vmatpush.msra.mxu0 %v254
    %1447 = vmatpush.msra.mxu0 %v250
    %1448 = vmatpush.msra.mxu0 %v246
    %1449 = vmatpush.msra.mxu0 %v242
    %1450 = vmatmul.f32.gmra.mxu0 %v1371
    %v1451 = vpop.f32.mrf.mxu0
    %v1452 = vadd.f32 %v1432, %v1451
    %1453 = vdwg.mxu0
    %1454 = vmatpush.msra.mxu0 %v239
    %1455 = vmatpush.msra.mxu0 %v235
    %1456 = vmatpush.msra.mxu0 %v231
    %1457 = vmatpush.msra.mxu0 %v227
    %1458 = vmatpush.msra.mxu0 %v223
    %1459 = vmatpush.msra.mxu0 %v219
    %1460 = vmatpush.msra.mxu0 %v215
    %1461 = vmatpush.msra.mxu0 %v211
    %1462 = vmatpush.msra.mxu0 %v207
    %1463 = vmatpush.msra.mxu0 %v203
    %1464 = vmatpush.msra.mxu0 %v199
    %1465 = vmatpush.msra.mxu0 %v195
    %1466 = vmatpush.msra.mxu0 %v191
    %1467 = vmatpush.msra.mxu0 %v187
    %1468 = vmatpush.msra.mxu0 %v183
    %1469 = vmatpush.msra.mxu0 %v179
    %1470 = vmatmul.f32.gmra.mxu0 %v1370
    %v1471 = vpop.f32.mrf.mxu0
    %v1472 = vadd.f32 %v309, %v1471
    %1473 = vdwg.mxu0
    %1474 = vmatpush.msra.mxu0 %v303
    %1475 = vmatpush.msra.mxu0 %v299
    %1476 = vmatpush.msra.mxu0 %v295
    %1477 = vmatpush.msra.mxu0 %v291
    %1478 = vmatpush.msra.mxu0 %v287
    %1479 = vmatpush.msra.mxu0 %v283
    %1480 = vmatpush.msra.mxu0 %v279
    %1481 = vmatpush.msra.mxu0 %v275
    %1482 = vmatpush.msra.mxu0 %v271
    %1483 = vmatpush.msra.mxu0 %v267
    %1484 = vmatpush.msra.mxu0 %v263
    %1485 = vmatpush.msra.mxu0 %v259
    %1486 = vmatpush.msra.mxu0 %v255
    %1487 = vmatpush.msra.mxu0 %v251
    %1488 = vmatpush.msra.mxu0 %v247
    %1489 = vmatpush.msra.mxu0 %v243
    %1490 = vmatmul.f32.gmra.mxu0 %v1371
    %v1491 = vpop.f32.mrf.mxu0
    %v1492 = vadd.f32 %v1472, %v1491
    %1493 = vdwg.mxu0
    %1494 = vmatpush.msra.mxu0 %v240
    %1495 = vmatpush.msra.mxu0 %v236
    %1496 = vmatpush.msra.mxu0 %v232
    %1497 = vmatpush.msra.mxu0 %v228
    %1498 = vmatpush.msra.mxu0 %v224
    %1499 = vmatpush.msra.mxu0 %v220
    %1500 = vmatpush.msra.mxu0 %v216
    %1501 = vmatpush.msra.mxu0 %v212
    %1502 = vmatpush.msra.mxu0 %v208
    %1503 = vmatpush.msra.mxu0 %v204
    %1504 = vmatpush.msra.mxu0 %v200
    %1505 = vmatpush.msra.mxu0 %v196
    %1506 = vmatpush.msra.mxu0 %v192
    %1507 = vmatpush.msra.mxu0 %v188
    %1508 = vmatpush.msra.mxu0 %v184
    %1509 = vmatpush.msra.mxu0 %v180
    %1510 = vmatmul.f32.gmra.mxu0 %v1370
    %v1511 = vpop.f32.mrf.mxu0
    %v1512 = vadd.f32 %v310, %v1511
    %1513 = vdwg.mxu0
    %1514 = vmatpush.msra.mxu0 %v304
    %1515 = vmatpush.msra.mxu0 %v300
    %1516 = vmatpush.msra.mxu0 %v296
    %1517 = vmatpush.msra.mxu0 %v292
    %1518 = vmatpush.msra.mxu0 %v288
    %1519 = vmatpush.msra.mxu0 %v284
    %1520 = vmatpush.msra.mxu0 %v280
    %1521 = vmatpush.msra.mxu0 %v276
    %1522 = vmatpush.msra.mxu0 %v272
    %1523 = vmatpush.msra.mxu0 %v268
    %1524 = vmatpush.msra.mxu0 %v264
    %1525 = vmatpush.msra.mxu0 %v260
    %1526 = vmatpush.msra.mxu0 %v256
    %1527 = vmatpush.msra.mxu0 %v252
    %1528 = vmatpush.msra.mxu0 %v248
    %1529 = vmatpush.msra.mxu0 %v244
    %1530 = vmatmul.f32.gmra.mxu0 %v1371
    %v1531 = vpop.f32.mrf.mxu0
    %v1532 = vadd.f32 %v1512, %v1531
    %1533 = vdwg.mxu0
    %v1534 = vxor.u32 %v1412, 2147483648
    %v1535 = vmul.f32 %v1534, 1.442695
    %v1536 = vpow.pop %v1535
    %v1537 = vadd.f32 %v1536, 1.0
    %v1538 = vrcp.pop %v1537
    %v1539 = vmul.f32 %v1537, %v1538
    %v1540 = vsub.f32 1.0, %v1539
    %v1541 = vmul.f32 %v1538, %v1540
    %v1542 = vadd.f32 %v1538, %v1541
    %vm1543 = vweird.f32 %v1537
    %vm1544 = vweird.f32 %v1538
    %vm1545 = vmor %vm1543, %vm1544
    %v1546 = vsel %vm1545, %v1538, %v1542
    %v1547 = vand.u32 2147483647, %v1537
    %vm1548 = vcmp.eq.f32.partialorder %v1547, 8.507059e+37
    %v1549 = vand.u32 %v1537, 2147483648
    %v1550 = vor.u32 1.1754944e-38, %v1549
    %v1551 = vsel %vm1548, %v1550, %v1546
    %v1552 = vmul.f32 1.0, %v1551
    %v1553 = vxor.u32 %v1452, 2147483648
    %v1554 = vmul.f32 %v1553, 1.442695
    %v1555 = vpow.pop %v1554
    %v1556 = vadd.f32 %v1555, 1.0
    %v1557 = vrcp.pop %v1556
    %v1558 = vmul.f32 %v1556, %v1557
    %v1559 = vsub.f32 1.0, %v1558
    %v1560 = vmul.f32 %v1557, %v1559
    %v1561 = vadd.f32 %v1557, %v1560
    %vm1562 = vweird.f32 %v1556
    %vm1563 = vweird.f32 %v1557
    %vm1564 = vmor %vm1562, %vm1563
    %v1565 = vsel %vm1564, %v1557, %v1561
    %v1566 = vand.u32 2147483647, %v1556
    %vm1567 = vcmp.eq.f32.partialorder %v1566, 8.507059e+37
    %v1568 = vand.u32 %v1556, 2147483648
    %v1569 = vor.u32 1.1754944e-38, %v1568
    %v1570 = vsel %vm1567, %v1569, %v1565
    %v1571 = vmul.f32 1.0, %v1570
    %v1572 = vtanh.pop %v1492
    %v1573 = vxor.u32 %v1532, 2147483648
    %v1574 = vmul.f32 %v1573, 1.442695
    %v1575 = vpow.pop %v1574
    %v1576 = vadd.f32 %v1575, 1.0
    %v1577 = vrcp.pop %v1576
    %v1578 = vmul.f32 %v1576, %v1577
    %v1579 = vsub.f32 1.0, %v1578
    %v1580 = vmul.f32 %v1577, %v1579
    %v1581 = vadd.f32 %v1577, %v1580
    %vm1582 = vweird.f32 %v1576
    %vm1583 = vweird.f32 %v1577
    %vm1584 = vmor %vm1582, %vm1583
    %v1585 = vsel %vm1584, %v1577, %v1581
    %v1586 = vand.u32 2147483647, %v1576
    %vm1587 = vcmp.eq.f32.partialorder %v1586, 8.507059e+37
    %v1588 = vand.u32 %v1576, 2147483648
    %v1589 = vor.u32 1.1754944e-38, %v1588
    %v1590 = vsel %vm1587, %v1589, %v1585
    %v1591 = vmul.f32 1.0, %v1590
    %v1592 = vmul.f32 %v1571, %v1196
    %v1593 = vmul.f32 %v1552, %v1572
    %v1594 = vadd.f32 %v1592, %v1593
    %v1595 = vtanh.pop %v1594
    %v1596 = vmul.f32 %v1591, %v1595
    %s1597 = scalar_lea.vmem %s6, 4
    %1598 = vst [vmem:[%s1597] sm:$0x3] %v1596
    %v1600 = vrot.slane %v1365, 4
    %1602 = vmatpush.msra.mxu0 %v173
    %1603 = vmatpush.msra.mxu0 %v169
    %1604 = vmatpush.msra.mxu0 %v165
    %1605 = vmatpush.msra.mxu0 %v161
    %1606 = vmatpush.msra.mxu0 %v157
    %1607 = vmatpush.msra.mxu0 %v153
    %1608 = vmatpush.msra.mxu0 %v149
    %1609 = vmatpush.msra.mxu0 %v145
    %1610 = vmatpush.msra.mxu0 %v141
    %1611 = vmatpush.msra.mxu0 %v137
    %1612 = vmatpush.msra.mxu0 %v133
    %1613 = vmatpush.msra.mxu0 %v129
    %1614 = vmatpush.msra.mxu0 %v125
    %1615 = vmatpush.msra.mxu0 %v121
    %1616 = vmatpush.msra.mxu0 %v117
    %1617 = vmatpush.msra.mxu0 %v113
    %1618 = vmatmul.f32.gmra.mxu0 %v1600
    %v1619 = vpop.f32.mrf.mxu0
    %v1620 = vadd.f32 0.0, %v1619
    %1621 = vdwg.mxu0
    %1622 = vmatpush.msra.mxu0 %v174
    %1623 = vmatpush.msra.mxu0 %v170
    %1624 = vmatpush.msra.mxu0 %v166
    %1625 = vmatpush.msra.mxu0 %v162
    %1626 = vmatpush.msra.mxu0 %v158
    %1627 = vmatpush.msra.mxu0 %v154
    %1628 = vmatpush.msra.mxu0 %v150
    %1629 = vmatpush.msra.mxu0 %v146
    %1630 = vmatpush.msra.mxu0 %v142
    %1631 = vmatpush.msra.mxu0 %v138
    %1632 = vmatpush.msra.mxu0 %v134
    %1633 = vmatpush.msra.mxu0 %v130
    %1634 = vmatpush.msra.mxu0 %v126
    %1635 = vmatpush.msra.mxu0 %v122
    %1636 = vmatpush.msra.mxu0 %v118
    %1637 = vmatpush.msra.mxu0 %v114
    %1638 = vmatmul.f32.gmra.mxu0 %v1600
    %v1639 = vpop.f32.mrf.mxu0
    %v1640 = vadd.f32 0.0, %v1639
    %1641 = vdwg.mxu0
    %1642 = vmatpush.msra.mxu0 %v175
    %1643 = vmatpush.msra.mxu0 %v171
    %1644 = vmatpush.msra.mxu0 %v167
    %1645 = vmatpush.msra.mxu0 %v163
    %1646 = vmatpush.msra.mxu0 %v159
    %1647 = vmatpush.msra.mxu0 %v155
    %1648 = vmatpush.msra.mxu0 %v151
    %1649 = vmatpush.msra.mxu0 %v147
    %1650 = vmatpush.msra.mxu0 %v143
    %1651 = vmatpush.msra.mxu0 %v139
    %1652 = vmatpush.msra.mxu0 %v135
    %1653 = vmatpush.msra.mxu0 %v131
    %1654 = vmatpush.msra.mxu0 %v127
    %1655 = vmatpush.msra.mxu0 %v123
    %1656 = vmatpush.msra.mxu0 %v119
    %1657 = vmatpush.msra.mxu0 %v115
    %1658 = vmatmul.f32.gmra.mxu0 %v1600
    %v1659 = vpop.f32.mrf.mxu0
    %v1660 = vadd.f32 0.0, %v1659
    %1661 = vdwg.mxu0
    %1662 = vmatpush.msra.mxu0 %v176
    %1663 = vmatpush.msra.mxu0 %v172
    %1664 = vmatpush.msra.mxu0 %v168
    %1665 = vmatpush.msra.mxu0 %v164
    %1666 = vmatpush.msra.mxu0 %v160
    %1667 = vmatpush.msra.mxu0 %v156
    %1668 = vmatpush.msra.mxu0 %v152
    %1669 = vmatpush.msra.mxu0 %v148
    %1670 = vmatpush.msra.mxu0 %v144
    %1671 = vmatpush.msra.mxu0 %v140
    %1672 = vmatpush.msra.mxu0 %v136
    %1673 = vmatpush.msra.mxu0 %v132
    %1674 = vmatpush.msra.mxu0 %v128
    %1675 = vmatpush.msra.mxu0 %v124
    %1676 = vmatpush.msra.mxu0 %v120
    %1677 = vmatpush.msra.mxu0 %v116
    %1678 = vmatmul.f32.gmra.mxu0 %v1600
    %v1679 = vpop.f32.mrf.mxu0
    %v1680 = vadd.f32 0.0, %v1679
    %1681 = vdwg.mxu0
    %v1686 = vrot.slane %v1620, 2
    %v1687 = vrot.slane %v1640, 2
    %v1688 = vrot.slane %v1660, 2
    %v1689 = vrot.slane %v1680, 2
    %v1694 = vadd.f32 %v360, %v1686
    %v1695 = vadd.f32 %v383, %v1687
    %v1696 = vadd.f32 %v406, %v1688
    %v1697 = vadd.f32 %v429, %v1689
    %v1698 = vxor.u32 %v1694, 2147483648
    %v1699 = vmul.f32 %v1698, 1.442695
    %v1700 = vpow.pop %v1699
    %v1701 = vadd.f32 %v1700, 1.0
    %v1702 = vrcp.pop %v1701
    %v1703 = vmul.f32 %v1701, %v1702
    %v1704 = vsub.f32 1.0, %v1703
    %v1705 = vmul.f32 %v1702, %v1704
    %v1706 = vadd.f32 %v1702, %v1705
    %vm1707 = vweird.f32 %v1701
    %vm1708 = vweird.f32 %v1702
    %vm1709 = vmor %vm1707, %vm1708
    %v1710 = vsel %vm1709, %v1702, %v1706
    %v1711 = vand.u32 2147483647, %v1701
    %vm1712 = vcmp.eq.f32.partialorder %v1711, 8.507059e+37
    %v1713 = vand.u32 %v1701, 2147483648
    %v1714 = vor.u32 1.1754944e-38, %v1713
    %v1715 = vsel %vm1712, %v1714, %v1710
    %v1716 = vmul.f32 1.0, %v1715
    %v1717 = vxor.u32 %v1695, 2147483648
    %v1718 = vmul.f32 %v1717, 1.442695
    %v1719 = vpow.pop %v1718
    %v1720 = vadd.f32 %v1719, 1.0
    %v1721 = vrcp.pop %v1720
    %v1722 = vmul.f32 %v1720, %v1721
    %v1723 = vsub.f32 1.0, %v1722
    %v1724 = vmul.f32 %v1721, %v1723
    %v1725 = vadd.f32 %v1721, %v1724
    %vm1726 = vweird.f32 %v1720
    %vm1727 = vweird.f32 %v1721
    %vm1728 = vmor %vm1726, %vm1727
    %v1729 = vsel %vm1728, %v1721, %v1725
    %v1730 = vand.u32 2147483647, %v1720
    %vm1731 = vcmp.eq.f32.partialorder %v1730, 8.507059e+37
    %v1732 = vand.u32 %v1720, 2147483648
    %v1733 = vor.u32 1.1754944e-38, %v1732
    %v1734 = vsel %vm1731, %v1733, %v1729
    %v1735 = vmul.f32 1.0, %v1734
    %v1736 = vtanh.pop %v1696
    %v1737 = vxor.u32 %v1697, 2147483648
    %v1738 = vmul.f32 %v1737, 1.442695
    %v1739 = vpow.pop %v1738
    %v1740 = vadd.f32 %v1739, 1.0
    %v1741 = vrcp.pop %v1740
    %v1742 = vmul.f32 %v1740, %v1741
    %v1743 = vsub.f32 1.0, %v1742
    %v1744 = vmul.f32 %v1741, %v1743
    %v1745 = vadd.f32 %v1741, %v1744
    %vm1746 = vweird.f32 %v1740
    %vm1747 = vweird.f32 %v1741
    %vm1748 = vmor %vm1746, %vm1747
    %v1749 = vsel %vm1748, %v1741, %v1745
    %v1750 = vand.u32 2147483647, %v1740
    %vm1751 = vcmp.eq.f32.partialorder %v1750, 8.507059e+37
    %v1752 = vand.u32 %v1740, 2147483648
    %v1753 = vor.u32 1.1754944e-38, %v1752
    %v1754 = vsel %vm1751, %v1753, %v1749
    %v1755 = vmul.f32 1.0, %v1754
    %v1757 = vrot.slane %v1363, 6
    %v1759 = vmul.f32 %v1735, %v1757
    %v1760 = vmul.f32 %v1716, %v1736
    %v1761 = vadd.f32 %v1759, %v1760
    %v1762 = vtanh.pop %v1761
    %v1763 = vmul.f32 %v1755, %v1762
    %v1764 = vmax.f32 %v1763, 0.0
    %v1766 = vrot.slane %v1596, 2
    %v1768 = vrot.slane %v1764, 6
    %v1769 = vrot.slane %v1766, 6
    %1772 = vmatpush.msra.mxu0 %v237
    %1773 = vmatpush.msra.mxu0 %v233
    %1774 = vmatpush.msra.mxu0 %v229
    %1775 = vmatpush.msra.mxu0 %v225
    %1776 = vmatpush.msra.mxu0 %v221
    %1777 = vmatpush.msra.mxu0 %v217
    %1778 = vmatpush.msra.mxu0 %v213
    %1779 = vmatpush.msra.mxu0 %v209
    %1780 = vmatpush.msra.mxu0 %v205
    %1781 = vmatpush.msra.mxu0 %v201
    %1782 = vmatpush.msra.mxu0 %v197
    %1783 = vmatpush.msra.mxu0 %v193
    %1784 = vmatpush.msra.mxu0 %v189
    %1785 = vmatpush.msra.mxu0 %v185
    %1786 = vmatpush.msra.mxu0 %v181
    %1787 = vmatpush.msra.mxu0 %v177
    %1788 = vmatmul.f32.gmra.mxu0 %v1768
    %v1789 = vpop.f32.mrf.mxu0
    %v1790 = vadd.f32 %v307, %v1789
    %1791 = vdwg.mxu0
    %1792 = vmatpush.msra.mxu0 %v301
    %1793 = vmatpush.msra.mxu0 %v297
    %1794 = vmatpush.msra.mxu0 %v293
    %1795 = vmatpush.msra.mxu0 %v289
    %1796 = vmatpush.msra.mxu0 %v285
    %1797 = vmatpush.msra.mxu0 %v281
    %1798 = vmatpush.msra.mxu0 %v277
    %1799 = vmatpush.msra.mxu0 %v273
    %1800 = vmatpush.msra.mxu0 %v269
    %1801 = vmatpush.msra.mxu0 %v265
    %1802 = vmatpush.msra.mxu0 %v261
    %1803 = vmatpush.msra.mxu0 %v257
    %1804 = vmatpush.msra.mxu0 %v253
    %1805 = vmatpush.msra.mxu0 %v249
    %1806 = vmatpush.msra.mxu0 %v245
    %1807 = vmatpush.msra.mxu0 %v241
    %1808 = vmatmul.f32.gmra.mxu0 %v1769
    %v1809 = vpop.f32.mrf.mxu0
    %v1810 = vadd.f32 %v1790, %v1809
    %1811 = vdwg.mxu0
    %1812 = vmatpush.msra.mxu0 %v238
    %1813 = vmatpush.msra.mxu0 %v234
    %1814 = vmatpush.msra.mxu0 %v230
    %1815 = vmatpush.msra.mxu0 %v226
    %1816 = vmatpush.msra.mxu0 %v222
    %1817 = vmatpush.msra.mxu0 %v218
    %1818 = vmatpush.msra.mxu0 %v214
    %1819 = vmatpush.msra.mxu0 %v210
    %1820 = vmatpush.msra.mxu0 %v206
    %1821 = vmatpush.msra.mxu0 %v202
    %1822 = vmatpush.msra.mxu0 %v198
    %1823 = vmatpush.msra.mxu0 %v194
    %1824 = vmatpush.msra.mxu0 %v190
    %1825 = vmatpush.msra.mxu0 %v186
    %1826 = vmatpush.msra.mxu0 %v182
    %1827 = vmatpush.msra.mxu0 %v178
    %1828 = vmatmul.f32.gmra.mxu0 %v1768
    %v1829 = vpop.f32.mrf.mxu0
    %v1830 = vadd.f32 %v308, %v1829
    %1831 = vdwg.mxu0
    %1832 = vmatpush.msra.mxu0 %v302
    %1833 = vmatpush.msra.mxu0 %v298
    %1834 = vmatpush.msra.mxu0 %v294
    %1835 = vmatpush.msra.mxu0 %v290
    %1836 = vmatpush.msra.mxu0 %v286
    %1837 = vmatpush.msra.mxu0 %v282
    %1838 = vmatpush.msra.mxu0 %v278
    %1839 = vmatpush.msra.mxu0 %v274
    %1840 = vmatpush.msra.mxu0 %v270
    %1841 = vmatpush.msra.mxu0 %v266
    %1842 = vmatpush.msra.mxu0 %v262
    %1843 = vmatpush.msra.mxu0 %v258
    %1844 = vmatpush.msra.mxu0 %v254
    %1845 = vmatpush.msra.mxu0 %v250
    %1846 = vmatpush.msra.mxu0 %v246
    %1847 = vmatpush.msra.mxu0 %v242
    %1848 = vmatmul.f32.gmra.mxu0 %v1769
    %v1849 = vpop.f32.mrf.mxu0
    %v1850 = vadd.f32 %v1830, %v1849
    %1851 = vdwg.mxu0
    %1852 = vmatpush.msra.mxu0 %v239
    %1853 = vmatpush.msra.mxu0 %v235
    %1854 = vmatpush.msra.mxu0 %v231
    %1855 = vmatpush.msra.mxu0 %v227
    %1856 = vmatpush.msra.mxu0 %v223
    %1857 = vmatpush.msra.mxu0 %v219
    %1858 = vmatpush.msra.mxu0 %v215
    %1859 = vmatpush.msra.mxu0 %v211
    %1860 = vmatpush.msra.mxu0 %v207
    %1861 = vmatpush.msra.mxu0 %v203
    %1862 = vmatpush.msra.mxu0 %v199
    %1863 = vmatpush.msra.mxu0 %v195
    %1864 = vmatpush.msra.mxu0 %v191
    %1865 = vmatpush.msra.mxu0 %v187
    %1866 = vmatpush.msra.mxu0 %v183
    %1867 = vmatpush.msra.mxu0 %v179
    %1868 = vmatmul.f32.gmra.mxu0 %v1768
    %v1869 = vpop.f32.mrf.mxu0
    %v1870 = vadd.f32 %v309, %v1869
    %1871 = vdwg.mxu0
    %1872 = vmatpush.msra.mxu0 %v303
    %1873 = vmatpush.msra.mxu0 %v299
    %1874 = vmatpush.msra.mxu0 %v295
    %1875 = vmatpush.msra.mxu0 %v291
    %1876 = vmatpush.msra.mxu0 %v287
    %1877 = vmatpush.msra.mxu0 %v283
    %1878 = vmatpush.msra.mxu0 %v279
    %1879 = vmatpush.msra.mxu0 %v275
    %1880 = vmatpush.msra.mxu0 %v271
    %1881 = vmatpush.msra.mxu0 %v267
    %1882 = vmatpush.msra.mxu0 %v263
    %1883 = vmatpush.msra.mxu0 %v259
    %1884 = vmatpush.msra.mxu0 %v255
    %1885 = vmatpush.msra.mxu0 %v251
    %1886 = vmatpush.msra.mxu0 %v247
    %1887 = vmatpush.msra.mxu0 %v243
    %1888 = vmatmul.f32.gmra.mxu0 %v1769
    %v1889 = vpop.f32.mrf.mxu0
    %v1890 = vadd.f32 %v1870, %v1889
    %1891 = vdwg.mxu0
    %1892 = vmatpush.msra.mxu0 %v240
    %1893 = vmatpush.msra.mxu0 %v236
    %1894 = vmatpush.msra.mxu0 %v232
    %1895 = vmatpush.msra.mxu0 %v228
    %1896 = vmatpush.msra.mxu0 %v224
    %1897 = vmatpush.msra.mxu0 %v220
    %1898 = vmatpush.msra.mxu0 %v216
    %1899 = vmatpush.msra.mxu0 %v212
    %1900 = vmatpush.msra.mxu0 %v208
    %1901 = vmatpush.msra.mxu0 %v204
    %1902 = vmatpush.msra.mxu0 %v200
    %1903 = vmatpush.msra.mxu0 %v196
    %1904 = vmatpush.msra.mxu0 %v192
    %1905 = vmatpush.msra.mxu0 %v188
    %1906 = vmatpush.msra.mxu0 %v184
    %1907 = vmatpush.msra.mxu0 %v180
    %1908 = vmatmul.f32.gmra.mxu0 %v1768
    %v1909 = vpop.f32.mrf.mxu0
    %v1910 = vadd.f32 %v310, %v1909
    %1911 = vdwg.mxu0
    %1912 = vmatpush.msra.mxu0 %v304
    %1913 = vmatpush.msra.mxu0 %v300
    %1914 = vmatpush.msra.mxu0 %v296
    %1915 = vmatpush.msra.mxu0 %v292
    %1916 = vmatpush.msra.mxu0 %v288
    %1917 = vmatpush.msra.mxu0 %v284
    %1918 = vmatpush.msra.mxu0 %v280
    %1919 = vmatpush.msra.mxu0 %v276
    %1920 = vmatpush.msra.mxu0 %v272
    %1921 = vmatpush.msra.mxu0 %v268
    %1922 = vmatpush.msra.mxu0 %v264
    %1923 = vmatpush.msra.mxu0 %v260
    %1924 = vmatpush.msra.mxu0 %v256
    %1925 = vmatpush.msra.mxu0 %v252
    %1926 = vmatpush.msra.mxu0 %v248
    %1927 = vmatpush.msra.mxu0 %v244
    %1928 = vmatmul.f32.gmra.mxu0 %v1769
    %v1929 = vpop.f32.mrf.mxu0
    %v1930 = vadd.f32 %v1910, %v1929
    %1931 = vdwg.mxu0
    %v1932 = vxor.u32 %v1810, 2147483648
    %v1933 = vmul.f32 %v1932, 1.442695
    %v1934 = vpow.pop %v1933
    %v1935 = vadd.f32 %v1934, 1.0
    %v1936 = vrcp.pop %v1935
    %v1937 = vmul.f32 %v1935, %v1936
    %v1938 = vsub.f32 1.0, %v1937
    %v1939 = vmul.f32 %v1936, %v1938
    %v1940 = vadd.f32 %v1936, %v1939
    %vm1941 = vweird.f32 %v1935
    %vm1942 = vweird.f32 %v1936
    %vm1943 = vmor %vm1941, %vm1942
    %v1944 = vsel %vm1943, %v1936, %v1940
    %v1945 = vand.u32 2147483647, %v1935
    %vm1946 = vcmp.eq.f32.partialorder %v1945, 8.507059e+37
    %v1947 = vand.u32 %v1935, 2147483648
    %v1948 = vor.u32 1.1754944e-38, %v1947
    %v1949 = vsel %vm1946, %v1948, %v1944
    %v1950 = vmul.f32 1.0, %v1949
    %v1951 = vxor.u32 %v1850, 2147483648
    %v1952 = vmul.f32 %v1951, 1.442695
    %v1953 = vpow.pop %v1952
    %v1954 = vadd.f32 %v1953, 1.0
    %v1955 = vrcp.pop %v1954
    %v1956 = vmul.f32 %v1954, %v1955
    %v1957 = vsub.f32 1.0, %v1956
    %v1958 = vmul.f32 %v1955, %v1957
    %v1959 = vadd.f32 %v1955, %v1958
    %vm1960 = vweird.f32 %v1954
    %vm1961 = vweird.f32 %v1955
    %vm1962 = vmor %vm1960, %vm1961
    %v1963 = vsel %vm1962, %v1955, %v1959
    %v1964 = vand.u32 2147483647, %v1954
    %vm1965 = vcmp.eq.f32.partialorder %v1964, 8.507059e+37
    %v1966 = vand.u32 %v1954, 2147483648
    %v1967 = vor.u32 1.1754944e-38, %v1966
    %v1968 = vsel %vm1965, %v1967, %v1963
    %v1969 = vmul.f32 1.0, %v1968
    %v1970 = vtanh.pop %v1890
    %v1971 = vxor.u32 %v1930, 2147483648
    %v1972 = vmul.f32 %v1971, 1.442695
    %v1973 = vpow.pop %v1972
    %v1974 = vadd.f32 %v1973, 1.0
    %v1975 = vrcp.pop %v1974
    %v1976 = vmul.f32 %v1974, %v1975
    %v1977 = vsub.f32 1.0, %v1976
    %v1978 = vmul.f32 %v1975, %v1977
    %v1979 = vadd.f32 %v1975, %v1978
    %vm1980 = vweird.f32 %v1974
    %vm1981 = vweird.f32 %v1975
    %vm1982 = vmor %vm1980, %vm1981
    %v1983 = vsel %vm1982, %v1975, %v1979
    %v1984 = vand.u32 2147483647, %v1974
    %vm1985 = vcmp.eq.f32.partialorder %v1984, 8.507059e+37
    %v1986 = vand.u32 %v1974, 2147483648
    %v1987 = vor.u32 1.1754944e-38, %v1986
    %v1988 = vsel %vm1985, %v1987, %v1983
    %v1989 = vmul.f32 1.0, %v1988
    %v1990 = vmul.f32 %v1969, %v1594
    %v1991 = vmul.f32 %v1950, %v1970
    %v1992 = vadd.f32 %v1990, %v1991
    %v1993 = vtanh.pop %v1992
    %v1994 = vmul.f32 %v1989, %v1993
    %s1995 = scalar_lea.vmem %s6, 6
    %1996 = vst [vmem:[%s1995] sm:$0x3] %v1994
    %v1998 = vrot.slane %v1763, 6
    %2000 = vmatpush.msra.mxu0 %v173
    %2001 = vmatpush.msra.mxu0 %v169
    %2002 = vmatpush.msra.mxu0 %v165
    %2003 = vmatpush.msra.mxu0 %v161
    %2004 = vmatpush.msra.mxu0 %v157
    %2005 = vmatpush.msra.mxu0 %v153
    %2006 = vmatpush.msra.mxu0 %v149
    %2007 = vmatpush.msra.mxu0 %v145
    %2008 = vmatpush.msra.mxu0 %v141
    %2009 = vmatpush.msra.mxu0 %v137
    %2010 = vmatpush.msra.mxu0 %v133
    %2011 = vmatpush.msra.mxu0 %v129
    %2012 = vmatpush.msra.mxu0 %v125
    %2013 = vmatpush.msra.mxu0 %v121
    %2014 = vmatpush.msra.mxu0 %v117
    %2015 = vmatpush.msra.mxu0 %v113
    %2016 = vmatmul.f32.gmra.mxu0 %v1998
    %v2017 = vpop.f32.mrf.mxu0
    %v2018 = vadd.f32 0.0, %v2017
    %2019 = vdwg.mxu0
    %2020 = vmatpush.msra.mxu0 %v174
    %2021 = vmatpush.msra.mxu0 %v170
    %2022 = vmatpush.msra.mxu0 %v166
    %2023 = vmatpush.msra.mxu0 %v162
    %2024 = vmatpush.msra.mxu0 %v158
    %2025 = vmatpush.msra.mxu0 %v154
    %2026 = vmatpush.msra.mxu0 %v150
    %2027 = vmatpush.msra.mxu0 %v146
    %2028 = vmatpush.msra.mxu0 %v142
    %2029 = vmatpush.msra.mxu0 %v138
    %2030 = vmatpush.msra.mxu0 %v134
    %2031 = vmatpush.msra.mxu0 %v130
    %2032 = vmatpush.msra.mxu0 %v126
    %2033 = vmatpush.msra.mxu0 %v122
    %2034 = vmatpush.msra.mxu0 %v118
    %2035 = vmatpush.msra.mxu0 %v114
    %2036 = vmatmul.f32.gmra.mxu0 %v1998
    %v2037 = vpop.f32.mrf.mxu0
    %v2038 = vadd.f32 0.0, %v2037
    %2039 = vdwg.mxu0
    %2040 = vmatpush.msra.mxu0 %v175
    %2041 = vmatpush.msra.mxu0 %v171
    %2042 = vmatpush.msra.mxu0 %v167
    %2043 = vmatpush.msra.mxu0 %v163
    %2044 = vmatpush.msra.mxu0 %v159
    %2045 = vmatpush.msra.mxu0 %v155
    %2046 = vmatpush.msra.mxu0 %v151
    %2047 = vmatpush.msra.mxu0 %v147
    %2048 = vmatpush.msra.mxu0 %v143
    %2049 = vmatpush.msra.mxu0 %v139
    %2050 = vmatpush.msra.mxu0 %v135
    %2051 = vmatpush.msra.mxu0 %v131
    %2052 = vmatpush.msra.mxu0 %v127
    %2053 = vmatpush.msra.mxu0 %v123
    %2054 = vmatpush.msra.mxu0 %v119
    %2055 = vmatpush.msra.mxu0 %v115
    %2056 = vmatmul.f32.gmra.mxu0 %v1998
    %v2057 = vpop.f32.mrf.mxu0
    %v2058 = vadd.f32 0.0, %v2057
    %2059 = vdwg.mxu0
    %2060 = vmatpush.msra.mxu0 %v176
    %2061 = vmatpush.msra.mxu0 %v172
    %2062 = vmatpush.msra.mxu0 %v168
    %2063 = vmatpush.msra.mxu0 %v164
    %2064 = vmatpush.msra.mxu0 %v160
    %2065 = vmatpush.msra.mxu0 %v156
    %2066 = vmatpush.msra.mxu0 %v152
    %2067 = vmatpush.msra.mxu0 %v148
    %2068 = vmatpush.msra.mxu0 %v144
    %2069 = vmatpush.msra.mxu0 %v140
    %2070 = vmatpush.msra.mxu0 %v136
    %2071 = vmatpush.msra.mxu0 %v132
    %2072 = vmatpush.msra.mxu0 %v128
    %2073 = vmatpush.msra.mxu0 %v124
    %2074 = vmatpush.msra.mxu0 %v120
    %2075 = vmatpush.msra.mxu0 %v116
    %2076 = vmatmul.f32.gmra.mxu0 %v1998
    %v2077 = vpop.f32.mrf.mxu0
    %v2078 = vadd.f32 0.0, %v2077
    %2079 = vdwg.mxu0
    %v2080 = vadd.f32 %v363, %v2018
    %v2081 = vadd.f32 %v386, %v2038
    %v2082 = vadd.f32 %v409, %v2058
    %v2083 = vadd.f32 %v432, %v2078
    %v2084 = vxor.u32 %v2080, 2147483648
    %v2085 = vmul.f32 %v2084, 1.442695
    %v2086 = vpow.pop %v2085
    %v2087 = vadd.f32 %v2086, 1.0
    %v2088 = vrcp.pop %v2087
    %v2089 = vmul.f32 %v2087, %v2088
    %v2090 = vsub.f32 1.0, %v2089
    %v2091 = vmul.f32 %v2088, %v2090
    %v2092 = vadd.f32 %v2088, %v2091
    %vm2093 = vweird.f32 %v2087
    %vm2094 = vweird.f32 %v2088
    %vm2095 = vmor %vm2093, %vm2094
    %v2096 = vsel %vm2095, %v2088, %v2092
    %v2097 = vand.u32 2147483647, %v2087
    %vm2098 = vcmp.eq.f32.partialorder %v2097, 8.507059e+37
    %v2099 = vand.u32 %v2087, 2147483648
    %v2100 = vor.u32 1.1754944e-38, %v2099
    %v2101 = vsel %vm2098, %v2100, %v2096
    %v2102 = vmul.f32 1.0, %v2101
    %v2103 = vxor.u32 %v2081, 2147483648
    %v2104 = vmul.f32 %v2103, 1.442695
    %v2105 = vpow.pop %v2104
    %v2106 = vadd.f32 %v2105, 1.0
    %v2107 = vrcp.pop %v2106
    %v2108 = vmul.f32 %v2106, %v2107
    %v2109 = vsub.f32 1.0, %v2108
    %v2110 = vmul.f32 %v2107, %v2109
    %v2111 = vadd.f32 %v2107, %v2110
    %vm2112 = vweird.f32 %v2106
    %vm2113 = vweird.f32 %v2107
    %vm2114 = vmor %vm2112, %vm2113
    %v2115 = vsel %vm2114, %v2107, %v2111
    %v2116 = vand.u32 2147483647, %v2106
    %vm2117 = vcmp.eq.f32.partialorder %v2116, 8.507059e+37
    %v2118 = vand.u32 %v2106, 2147483648
    %v2119 = vor.u32 1.1754944e-38, %v2118
    %v2120 = vsel %vm2117, %v2119, %v2115
    %v2121 = vmul.f32 1.0, %v2120
    %v2122 = vtanh.pop %v2082
    %v2123 = vxor.u32 %v2083, 2147483648
    %v2124 = vmul.f32 %v2123, 1.442695
    %v2125 = vpow.pop %v2124
    %v2126 = vadd.f32 %v2125, 1.0
    %v2127 = vrcp.pop %v2126
    %v2128 = vmul.f32 %v2126, %v2127
    %v2129 = vsub.f32 1.0, %v2128
    %v2130 = vmul.f32 %v2127, %v2129
    %v2131 = vadd.f32 %v2127, %v2130
    %vm2132 = vweird.f32 %v2126
    %vm2133 = vweird.f32 %v2127
    %vm2134 = vmor %vm2132, %vm2133
    %v2135 = vsel %vm2134, %v2127, %v2131
    %v2136 = vand.u32 2147483647, %v2126
    %vm2137 = vcmp.eq.f32.partialorder %v2136, 8.507059e+37
    %v2138 = vand.u32 %v2126, 2147483648
    %v2139 = vor.u32 1.1754944e-38, %v2138
    %v2140 = vsel %vm2137, %v2139, %v2135
    %v2141 = vmul.f32 1.0, %v2140
    %v2143 = vrot.slane %v1761, 6
    %v2145 = vmul.f32 %v2121, %v2143
    %v2146 = vmul.f32 %v2102, %v2122
    %v2147 = vadd.f32 %v2145, %v2146
    %v2148 = vtanh.pop %v2147
    %v2149 = vmul.f32 %v2141, %v2148
    %v2150 = vmax.f32 %v2149, 0.0
    %2151 = vmatpush.msra.mxu0 %v237
    %2152 = vmatpush.msra.mxu0 %v233
    %2153 = vmatpush.msra.mxu0 %v229
    %2154 = vmatpush.msra.mxu0 %v225
    %2155 = vmatpush.msra.mxu0 %v221
    %2156 = vmatpush.msra.mxu0 %v217
    %2157 = vmatpush.msra.mxu0 %v213
    %2158 = vmatpush.msra.mxu0 %v209
    %2159 = vmatpush.msra.mxu0 %v205
    %2160 = vmatpush.msra.mxu0 %v201
    %2161 = vmatpush.msra.mxu0 %v197
    %2162 = vmatpush.msra.mxu0 %v193
    %2163 = vmatpush.msra.mxu0 %v189
    %2164 = vmatpush.msra.mxu0 %v185
    %2165 = vmatpush.msra.mxu0 %v181
    %2166 = vmatpush.msra.mxu0 %v177
    %2167 = vmatmul.f32.gmra.mxu0 %v2150
    %v2168 = vpop.f32.mrf.mxu0
    %v2169 = vadd.f32 %v307, %v2168
    %2170 = vdwg.mxu0
    %2171 = vmatpush.msra.mxu0 %v301
    %2172 = vmatpush.msra.mxu0 %v297
    %2173 = vmatpush.msra.mxu0 %v293
    %2174 = vmatpush.msra.mxu0 %v289
    %2175 = vmatpush.msra.mxu0 %v285
    %2176 = vmatpush.msra.mxu0 %v281
    %2177 = vmatpush.msra.mxu0 %v277
    %2178 = vmatpush.msra.mxu0 %v273
    %2179 = vmatpush.msra.mxu0 %v269
    %2180 = vmatpush.msra.mxu0 %v265
    %2181 = vmatpush.msra.mxu0 %v261
    %2182 = vmatpush.msra.mxu0 %v257
    %2183 = vmatpush.msra.mxu0 %v253
    %2184 = vmatpush.msra.mxu0 %v249
    %2185 = vmatpush.msra.mxu0 %v245
    %2186 = vmatpush.msra.mxu0 %v241
    %2187 = vmatmul.f32.gmra.mxu0 %v1994
    %v2188 = vpop.f32.mrf.mxu0
    %v2189 = vadd.f32 %v2169, %v2188
    %2190 = vdwg.mxu0
    %2191 = vmatpush.msra.mxu0 %v238
    %2192 = vmatpush.msra.mxu0 %v234
    %2193 = vmatpush.msra.mxu0 %v230
    %2194 = vmatpush.msra.mxu0 %v226
    %2195 = vmatpush.msra.mxu0 %v222
    %2196 = vmatpush.msra.mxu0 %v218
    %2197 = vmatpush.msra.mxu0 %v214
    %2198 = vmatpush.msra.mxu0 %v210
    %2199 = vmatpush.msra.mxu0 %v206
    %2200 = vmatpush.msra.mxu0 %v202
    %2201 = vmatpush.msra.mxu0 %v198
    %2202 = vmatpush.msra.mxu0 %v194
    %2203 = vmatpush.msra.mxu0 %v190
    %2204 = vmatpush.msra.mxu0 %v186
    %2205 = vmatpush.msra.mxu0 %v182
    %2206 = vmatpush.msra.mxu0 %v178
    %2207 = vmatmul.f32.gmra.mxu0 %v2150
    %v2208 = vpop.f32.mrf.mxu0
    %v2209 = vadd.f32 %v308, %v2208
    %2210 = vdwg.mxu0
    %2211 = vmatpush.msra.mxu0 %v302
    %2212 = vmatpush.msra.mxu0 %v298
    %2213 = vmatpush.msra.mxu0 %v294
    %2214 = vmatpush.msra.mxu0 %v290
    %2215 = vmatpush.msra.mxu0 %v286
    %2216 = vmatpush.msra.mxu0 %v282
    %2217 = vmatpush.msra.mxu0 %v278
    %2218 = vmatpush.msra.mxu0 %v274
    %2219 = vmatpush.msra.mxu0 %v270
    %2220 = vmatpush.msra.mxu0 %v266
    %2221 = vmatpush.msra.mxu0 %v262
    %2222 = vmatpush.msra.mxu0 %v258
    %2223 = vmatpush.msra.mxu0 %v254
    %2224 = vmatpush.msra.mxu0 %v250
    %2225 = vmatpush.msra.mxu0 %v246
    %2226 = vmatpush.msra.mxu0 %v242
    %2227 = vmatmul.f32.gmra.mxu0 %v1994
    %v2228 = vpop.f32.mrf.mxu0
    %v2229 = vadd.f32 %v2209, %v2228
    %2230 = vdwg.mxu0
    %2231 = vmatpush.msra.mxu0 %v239
    %2232 = vmatpush.msra.mxu0 %v235
    %2233 = vmatpush.msra.mxu0 %v231
    %2234 = vmatpush.msra.mxu0 %v227
    %2235 = vmatpush.msra.mxu0 %v223
    %2236 = vmatpush.msra.mxu0 %v219
    %2237 = vmatpush.msra.mxu0 %v215
    %2238 = vmatpush.msra.mxu0 %v211
    %2239 = vmatpush.msra.mxu0 %v207
    %2240 = vmatpush.msra.mxu0 %v203
    %2241 = vmatpush.msra.mxu0 %v199
    %2242 = vmatpush.msra.mxu0 %v195
    %2243 = vmatpush.msra.mxu0 %v191
    %2244 = vmatpush.msra.mxu0 %v187
    %2245 = vmatpush.msra.mxu0 %v183
    %2246 = vmatpush.msra.mxu0 %v179
    %2247 = vmatmul.f32.gmra.mxu0 %v2150
    %v2248 = vpop.f32.mrf.mxu0
    %v2249 = vadd.f32 %v309, %v2248
    %2250 = vdwg.mxu0
    %2251 = vmatpush.msra.mxu0 %v303
    %2252 = vmatpush.msra.mxu0 %v299
    %2253 = vmatpush.msra.mxu0 %v295
    %2254 = vmatpush.msra.mxu0 %v291
    %2255 = vmatpush.msra.mxu0 %v287
    %2256 = vmatpush.msra.mxu0 %v283
    %2257 = vmatpush.msra.mxu0 %v279
    %2258 = vmatpush.msra.mxu0 %v275
    %2259 = vmatpush.msra.mxu0 %v271
    %2260 = vmatpush.msra.mxu0 %v267
    %2261 = vmatpush.msra.mxu0 %v263
    %2262 = vmatpush.msra.mxu0 %v259
    %2263 = vmatpush.msra.mxu0 %v255
    %2264 = vmatpush.msra.mxu0 %v251
    %2265 = vmatpush.msra.mxu0 %v247
    %2266 = vmatpush.msra.mxu0 %v243
    %2267 = vmatmul.f32.gmra.mxu0 %v1994
    %v2268 = vpop.f32.mrf.mxu0
    %v2269 = vadd.f32 %v2249, %v2268
    %2270 = vdwg.mxu0
    %2271 = vmatpush.msra.mxu0 %v240
    %2272 = vmatpush.msra.mxu0 %v236
    %2273 = vmatpush.msra.mxu0 %v232
    %2274 = vmatpush.msra.mxu0 %v228
    %2275 = vmatpush.msra.mxu0 %v224
    %2276 = vmatpush.msra.mxu0 %v220
    %2277 = vmatpush.msra.mxu0 %v216
    %2278 = vmatpush.msra.mxu0 %v212
    %2279 = vmatpush.msra.mxu0 %v208
    %2280 = vmatpush.msra.mxu0 %v204
    %2281 = vmatpush.msra.mxu0 %v200
    %2282 = vmatpush.msra.mxu0 %v196
    %2283 = vmatpush.msra.mxu0 %v192
    %2284 = vmatpush.msra.mxu0 %v188
    %2285 = vmatpush.msra.mxu0 %v184
    %2286 = vmatpush.msra.mxu0 %v180
    %2287 = vmatmul.f32.gmra.mxu0 %v2150
    %v2288 = vpop.f32.mrf.mxu0
    %v2289 = vadd.f32 %v310, %v2288
    %2290 = vdwg.mxu0
    %2291 = vmatpush.msra.mxu0 %v304
    %2292 = vmatpush.msra.mxu0 %v300
    %2293 = vmatpush.msra.mxu0 %v296
    %2294 = vmatpush.msra.mxu0 %v292
    %2295 = vmatpush.msra.mxu0 %v288
    %2296 = vmatpush.msra.mxu0 %v284
    %2297 = vmatpush.msra.mxu0 %v280
    %2298 = vmatpush.msra.mxu0 %v276
    %2299 = vmatpush.msra.mxu0 %v272
    %2300 = vmatpush.msra.mxu0 %v268
    %2301 = vmatpush.msra.mxu0 %v264
    %2302 = vmatpush.msra.mxu0 %v260
    %2303 = vmatpush.msra.mxu0 %v256
    %2304 = vmatpush.msra.mxu0 %v252
    %2305 = vmatpush.msra.mxu0 %v248
    %2306 = vmatpush.msra.mxu0 %v244
    %2307 = vmatmul.f32.gmra.mxu0 %v1994
    %v2308 = vpop.f32.mrf.mxu0
    %v2309 = vadd.f32 %v2289, %v2308
    %2310 = vdwg.mxu0
    %v2311 = vxor.u32 %v2189, 2147483648
    %v2312 = vmul.f32 %v2311, 1.442695
    %v2313 = vpow.pop %v2312
    %v2314 = vadd.f32 %v2313, 1.0
    %v2315 = vrcp.pop %v2314
    %v2316 = vmul.f32 %v2314, %v2315
    %v2317 = vsub.f32 1.0, %v2316
    %v2318 = vmul.f32 %v2315, %v2317
    %v2319 = vadd.f32 %v2315, %v2318
    %vm2320 = vweird.f32 %v2314
    %vm2321 = vweird.f32 %v2315
    %vm2322 = vmor %vm2320, %vm2321
    %v2323 = vsel %vm2322, %v2315, %v2319
    %v2324 = vand.u32 2147483647, %v2314
    %vm2325 = vcmp.eq.f32.partialorder %v2324, 8.507059e+37
    %v2326 = vand.u32 %v2314, 2147483648
    %v2327 = vor.u32 1.1754944e-38, %v2326
    %v2328 = vsel %vm2325, %v2327, %v2323
    %v2329 = vmul.f32 1.0, %v2328
    %v2330 = vxor.u32 %v2229, 2147483648
    %v2331 = vmul.f32 %v2330, 1.442695
    %v2332 = vpow.pop %v2331
    %v2333 = vadd.f32 %v2332, 1.0
    %v2334 = vrcp.pop %v2333
    %v2335 = vmul.f32 %v2333, %v2334
    %v2336 = vsub.f32 1.0, %v2335
    %v2337 = vmul.f32 %v2334, %v2336
    %v2338 = vadd.f32 %v2334, %v2337
    %vm2339 = vweird.f32 %v2333
    %vm2340 = vweird.f32 %v2334
    %vm2341 = vmor %vm2339, %vm2340
    %v2342 = vsel %vm2341, %v2334, %v2338
    %v2343 = vand.u32 2147483647, %v2333
    %vm2344 = vcmp.eq.f32.partialorder %v2343, 8.507059e+37
    %v2345 = vand.u32 %v2333, 2147483648
    %v2346 = vor.u32 1.1754944e-38, %v2345
    %v2347 = vsel %vm2344, %v2346, %v2342
    %v2348 = vmul.f32 1.0, %v2347
    %v2349 = vtanh.pop %v2269
    %v2350 = vxor.u32 %v2309, 2147483648
    %v2351 = vmul.f32 %v2350, 1.442695
    %v2352 = vpow.pop %v2351
    %v2353 = vadd.f32 %v2352, 1.0
    %v2354 = vrcp.pop %v2353
    %v2355 = vmul.f32 %v2353, %v2354
    %v2356 = vsub.f32 1.0, %v2355
    %v2357 = vmul.f32 %v2354, %v2356
    %v2358 = vadd.f32 %v2354, %v2357
    %vm2359 = vweird.f32 %v2353
    %vm2360 = vweird.f32 %v2354
    %vm2361 = vmor %vm2359, %vm2360
    %v2362 = vsel %vm2361, %v2354, %v2358
    %v2363 = vand.u32 2147483647, %v2353
    %vm2364 = vcmp.eq.f32.partialorder %v2363, 8.507059e+37
    %v2365 = vand.u32 %v2353, 2147483648
    %v2366 = vor.u32 1.1754944e-38, %v2365
    %v2367 = vsel %vm2364, %v2366, %v2362
    %v2368 = vmul.f32 1.0, %v2367
    %v2369 = vmul.f32 %v2348, %v1992
    %v2370 = vmul.f32 %v2329, %v2349
    %v2371 = vadd.f32 %v2369, %v2370
    %v2372 = vtanh.pop %v2371
    %v2373 = vmul.f32 %v2368, %v2372
    %s2374 = scalar_lea.vmem %s6, 8
    %2375 = vst [vmem:[%s2374] sm:$0x3] %v2373
    %2376 = vmatpush.msra.mxu0 %v173
    %2377 = vmatpush.msra.mxu0 %v169
    %2378 = vmatpush.msra.mxu0 %v165
    %2379 = vmatpush.msra.mxu0 %v161
    %2380 = vmatpush.msra.mxu0 %v157
    %2381 = vmatpush.msra.mxu0 %v153
    %2382 = vmatpush.msra.mxu0 %v149
    %2383 = vmatpush.msra.mxu0 %v145
    %2384 = vmatpush.msra.mxu0 %v141
    %2385 = vmatpush.msra.mxu0 %v137
    %2386 = vmatpush.msra.mxu0 %v133
    %2387 = vmatpush.msra.mxu0 %v129
    %2388 = vmatpush.msra.mxu0 %v125
    %2389 = vmatpush.msra.mxu0 %v121
    %2390 = vmatpush.msra.mxu0 %v117
    %2391 = vmatpush.msra.mxu0 %v113
    %2392 = vmatmul.f32.gmra.mxu0 %v2149
    %v2393 = vpop.f32.mrf.mxu0
    %v2394 = vadd.f32 0.0, %v2393
    %2395 = vdwg.mxu0
    %2396 = vmatpush.msra.mxu0 %v174
    %2397 = vmatpush.msra.mxu0 %v170
    %2398 = vmatpush.msra.mxu0 %v166
    %2399 = vmatpush.msra.mxu0 %v162
    %2400 = vmatpush.msra.mxu0 %v158
    %2401 = vmatpush.msra.mxu0 %v154
    %2402 = vmatpush.msra.mxu0 %v150
    %2403 = vmatpush.msra.mxu0 %v146
    %2404 = vmatpush.msra.mxu0 %v142
    %2405 = vmatpush.msra.mxu0 %v138
    %2406 = vmatpush.msra.mxu0 %v134
    %2407 = vmatpush.msra.mxu0 %v130
    %2408 = vmatpush.msra.mxu0 %v126
    %2409 = vmatpush.msra.mxu0 %v122
    %2410 = vmatpush.msra.mxu0 %v118
    %2411 = vmatpush.msra.mxu0 %v114
    %2412 = vmatmul.f32.gmra.mxu0 %v2149
    %v2413 = vpop.f32.mrf.mxu0
    %v2414 = vadd.f32 0.0, %v2413
    %2415 = vdwg.mxu0
    %2416 = vmatpush.msra.mxu0 %v175
    %2417 = vmatpush.msra.mxu0 %v171
    %2418 = vmatpush.msra.mxu0 %v167
    %2419 = vmatpush.msra.mxu0 %v163
    %2420 = vmatpush.msra.mxu0 %v159
    %2421 = vmatpush.msra.mxu0 %v155
    %2422 = vmatpush.msra.mxu0 %v151
    %2423 = vmatpush.msra.mxu0 %v147
    %2424 = vmatpush.msra.mxu0 %v143
    %2425 = vmatpush.msra.mxu0 %v139
    %2426 = vmatpush.msra.mxu0 %v135
    %2427 = vmatpush.msra.mxu0 %v131
    %2428 = vmatpush.msra.mxu0 %v127
    %2429 = vmatpush.msra.mxu0 %v123
    %2430 = vmatpush.msra.mxu0 %v119
    %2431 = vmatpush.msra.mxu0 %v115
    %2432 = vmatmul.f32.gmra.mxu0 %v2149
    %v2433 = vpop.f32.mrf.mxu0
    %v2434 = vadd.f32 0.0, %v2433
    %2435 = vdwg.mxu0
    %2436 = vmatpush.msra.mxu0 %v176
    %2437 = vmatpush.msra.mxu0 %v172
    %2438 = vmatpush.msra.mxu0 %v168
    %2439 = vmatpush.msra.mxu0 %v164
    %2440 = vmatpush.msra.mxu0 %v160
    %2441 = vmatpush.msra.mxu0 %v156
    %2442 = vmatpush.msra.mxu0 %v152
    %2443 = vmatpush.msra.mxu0 %v148
    %2444 = vmatpush.msra.mxu0 %v144
    %2445 = vmatpush.msra.mxu0 %v140
    %2446 = vmatpush.msra.mxu0 %v136
    %2447 = vmatpush.msra.mxu0 %v132
    %2448 = vmatpush.msra.mxu0 %v128
    %2449 = vmatpush.msra.mxu0 %v124
    %2450 = vmatpush.msra.mxu0 %v120
    %2451 = vmatpush.msra.mxu0 %v116
    %2452 = vmatmul.f32.gmra.mxu0 %v2149
    %v2453 = vpop.f32.mrf.mxu0
    %v2454 = vadd.f32 0.0, %v2453
    %2455 = vdwg.mxu0
    %v2460 = vrot.slane %v2394, 6
    %v2461 = vrot.slane %v2414, 6
    %v2462 = vrot.slane %v2434, 6
    %v2463 = vrot.slane %v2454, 6
    %v2468 = vadd.f32 %v363, %v2460
    %v2469 = vadd.f32 %v386, %v2461
    %v2470 = vadd.f32 %v409, %v2462
    %v2471 = vadd.f32 %v432, %v2463
    %v2472 = vxor.u32 %v2468, 2147483648
    %v2473 = vmul.f32 %v2472, 1.442695
    %v2474 = vpow.pop %v2473
    %v2475 = vadd.f32 %v2474, 1.0
    %v2476 = vrcp.pop %v2475
    %v2477 = vmul.f32 %v2475, %v2476
    %v2478 = vsub.f32 1.0, %v2477
    %v2479 = vmul.f32 %v2476, %v2478
    %v2480 = vadd.f32 %v2476, %v2479
    %vm2481 = vweird.f32 %v2475
    %vm2482 = vweird.f32 %v2476
    %vm2483 = vmor %vm2481, %vm2482
    %v2484 = vsel %vm2483, %v2476, %v2480
    %v2485 = vand.u32 2147483647, %v2475
    %vm2486 = vcmp.eq.f32.partialorder %v2485, 8.507059e+37
    %v2487 = vand.u32 %v2475, 2147483648
    %v2488 = vor.u32 1.1754944e-38, %v2487
    %v2489 = vsel %vm2486, %v2488, %v2484
    %v2490 = vmul.f32 1.0, %v2489
    %v2491 = vxor.u32 %v2469, 2147483648
    %v2492 = vmul.f32 %v2491, 1.442695
    %v2493 = vpow.pop %v2492
    %v2494 = vadd.f32 %v2493, 1.0
    %v2495 = vrcp.pop %v2494
    %v2496 = vmul.f32 %v2494, %v2495
    %v2497 = vsub.f32 1.0, %v2496
    %v2498 = vmul.f32 %v2495, %v2497
    %v2499 = vadd.f32 %v2495, %v2498
    %vm2500 = vweird.f32 %v2494
    %vm2501 = vweird.f32 %v2495
    %vm2502 = vmor %vm2500, %vm2501
    %v2503 = vsel %vm2502, %v2495, %v2499
    %v2504 = vand.u32 2147483647, %v2494
    %vm2505 = vcmp.eq.f32.partialorder %v2504, 8.507059e+37
    %v2506 = vand.u32 %v2494, 2147483648
    %v2507 = vor.u32 1.1754944e-38, %v2506
    %v2508 = vsel %vm2505, %v2507, %v2503
    %v2509 = vmul.f32 1.0, %v2508
    %v2510 = vtanh.pop %v2470
    %v2511 = vxor.u32 %v2471, 2147483648
    %v2512 = vmul.f32 %v2511, 1.442695
    %v2513 = vpow.pop %v2512
    %v2514 = vadd.f32 %v2513, 1.0
    %v2515 = vrcp.pop %v2514
    %v2516 = vmul.f32 %v2514, %v2515
    %v2517 = vsub.f32 1.0, %v2516
    %v2518 = vmul.f32 %v2515, %v2517
    %v2519 = vadd.f32 %v2515, %v2518
    %vm2520 = vweird.f32 %v2514
    %vm2521 = vweird.f32 %v2515
    %vm2522 = vmor %vm2520, %vm2521
    %v2523 = vsel %vm2522, %v2515, %v2519
    %v2524 = vand.u32 2147483647, %v2514
    %vm2525 = vcmp.eq.f32.partialorder %v2524, 8.507059e+37
    %v2526 = vand.u32 %v2514, 2147483648
    %v2527 = vor.u32 1.1754944e-38, %v2526
    %v2528 = vsel %vm2525, %v2527, %v2523
    %v2529 = vmul.f32 1.0, %v2528
    %v2531 = vrot.slane %v2147, 6
    %v2533 = vmul.f32 %v2509, %v2531
    %v2534 = vmul.f32 %v2490, %v2510
    %v2535 = vadd.f32 %v2533, %v2534
    %v2536 = vtanh.pop %v2535
    %v2537 = vmul.f32 %v2529, %v2536
    %v2538 = vmax.f32 %v2537, 0.0
    %v2540 = vrot.slane %v2373, 6
    %v2542 = vrot.slane %v2538, 2
    %v2543 = vrot.slane %v2540, 2
    %2546 = vmatpush.msra.mxu0 %v237
    %2547 = vmatpush.msra.mxu0 %v233
    %2548 = vmatpush.msra.mxu0 %v229
    %2549 = vmatpush.msra.mxu0 %v225
    %2550 = vmatpush.msra.mxu0 %v221
    %2551 = vmatpush.msra.mxu0 %v217
    %2552 = vmatpush.msra.mxu0 %v213
    %2553 = vmatpush.msra.mxu0 %v209
    %2554 = vmatpush.msra.mxu0 %v205
    %2555 = vmatpush.msra.mxu0 %v201
    %2556 = vmatpush.msra.mxu0 %v197
    %2557 = vmatpush.msra.mxu0 %v193
    %2558 = vmatpush.msra.mxu0 %v189
    %2559 = vmatpush.msra.mxu0 %v185
    %2560 = vmatpush.msra.mxu0 %v181
    %2561 = vmatpush.msra.mxu0 %v177
    %2562 = vmatmul.f32.gmra.mxu0 %v2542
    %v2563 = vpop.f32.mrf.mxu0
    %v2564 = vadd.f32 %v307, %v2563
    %2565 = vdwg.mxu0
    %2566 = vmatpush.msra.mxu0 %v301
    %2567 = vmatpush.msra.mxu0 %v297
    %2568 = vmatpush.msra.mxu0 %v293
    %2569 = vmatpush.msra.mxu0 %v289
    %2570 = vmatpush.msra.mxu0 %v285
    %2571 = vmatpush.msra.mxu0 %v281
    %2572 = vmatpush.msra.mxu0 %v277
    %2573 = vmatpush.msra.mxu0 %v273
    %2574 = vmatpush.msra.mxu0 %v269
    %2575 = vmatpush.msra.mxu0 %v265
    %2576 = vmatpush.msra.mxu0 %v261
    %2577 = vmatpush.msra.mxu0 %v257
    %2578 = vmatpush.msra.mxu0 %v253
    %2579 = vmatpush.msra.mxu0 %v249
    %2580 = vmatpush.msra.mxu0 %v245
    %2581 = vmatpush.msra.mxu0 %v241
    %2582 = vmatmul.f32.gmra.mxu0 %v2543
    %v2583 = vpop.f32.mrf.mxu0
    %v2584 = vadd.f32 %v2564, %v2583
    %2585 = vdwg.mxu0
    %2586 = vmatpush.msra.mxu0 %v238
    %2587 = vmatpush.msra.mxu0 %v234
    %2588 = vmatpush.msra.mxu0 %v230
    %2589 = vmatpush.msra.mxu0 %v226
    %2590 = vmatpush.msra.mxu0 %v222
    %2591 = vmatpush.msra.mxu0 %v218
    %2592 = vmatpush.msra.mxu0 %v214
    %2593 = vmatpush.msra.mxu0 %v210
    %2594 = vmatpush.msra.mxu0 %v206
    %2595 = vmatpush.msra.mxu0 %v202
    %2596 = vmatpush.msra.mxu0 %v198
    %2597 = vmatpush.msra.mxu0 %v194
    %2598 = vmatpush.msra.mxu0 %v190
    %2599 = vmatpush.msra.mxu0 %v186
    %2600 = vmatpush.msra.mxu0 %v182
    %2601 = vmatpush.msra.mxu0 %v178
    %2602 = vmatmul.f32.gmra.mxu0 %v2542
    %v2603 = vpop.f32.mrf.mxu0
    %v2604 = vadd.f32 %v308, %v2603
    %2605 = vdwg.mxu0
    %2606 = vmatpush.msra.mxu0 %v302
    %2607 = vmatpush.msra.mxu0 %v298
    %2608 = vmatpush.msra.mxu0 %v294
    %2609 = vmatpush.msra.mxu0 %v290
    %2610 = vmatpush.msra.mxu0 %v286
    %2611 = vmatpush.msra.mxu0 %v282
    %2612 = vmatpush.msra.mxu0 %v278
    %2613 = vmatpush.msra.mxu0 %v274
    %2614 = vmatpush.msra.mxu0 %v270
    %2615 = vmatpush.msra.mxu0 %v266
    %2616 = vmatpush.msra.mxu0 %v262
    %2617 = vmatpush.msra.mxu0 %v258
    %2618 = vmatpush.msra.mxu0 %v254
    %2619 = vmatpush.msra.mxu0 %v250
    %2620 = vmatpush.msra.mxu0 %v246
    %2621 = vmatpush.msra.mxu0 %v242
    %2622 = vmatmul.f32.gmra.mxu0 %v2543
    %v2623 = vpop.f32.mrf.mxu0
    %v2624 = vadd.f32 %v2604, %v2623
    %2625 = vdwg.mxu0
    %2626 = vmatpush.msra.mxu0 %v239
    %2627 = vmatpush.msra.mxu0 %v235
    %2628 = vmatpush.msra.mxu0 %v231
    %2629 = vmatpush.msra.mxu0 %v227
    %2630 = vmatpush.msra.mxu0 %v223
    %2631 = vmatpush.msra.mxu0 %v219
    %2632 = vmatpush.msra.mxu0 %v215
    %2633 = vmatpush.msra.mxu0 %v211
    %2634 = vmatpush.msra.mxu0 %v207
    %2635 = vmatpush.msra.mxu0 %v203
    %2636 = vmatpush.msra.mxu0 %v199
    %2637 = vmatpush.msra.mxu0 %v195
    %2638 = vmatpush.msra.mxu0 %v191
    %2639 = vmatpush.msra.mxu0 %v187
    %2640 = vmatpush.msra.mxu0 %v183
    %2641 = vmatpush.msra.mxu0 %v179
    %2642 = vmatmul.f32.gmra.mxu0 %v2542
    %v2643 = vpop.f32.mrf.mxu0
    %v2644 = vadd.f32 %v309, %v2643
    %2645 = vdwg.mxu0
    %2646 = vmatpush.msra.mxu0 %v303
    %2647 = vmatpush.msra.mxu0 %v299
    %2648 = vmatpush.msra.mxu0 %v295
    %2649 = vmatpush.msra.mxu0 %v291
    %2650 = vmatpush.msra.mxu0 %v287
    %2651 = vmatpush.msra.mxu0 %v283
    %2652 = vmatpush.msra.mxu0 %v279
    %2653 = vmatpush.msra.mxu0 %v275
    %2654 = vmatpush.msra.mxu0 %v271
    %2655 = vmatpush.msra.mxu0 %v267
    %2656 = vmatpush.msra.mxu0 %v263
    %2657 = vmatpush.msra.mxu0 %v259
    %2658 = vmatpush.msra.mxu0 %v255
    %2659 = vmatpush.msra.mxu0 %v251
    %2660 = vmatpush.msra.mxu0 %v247
    %2661 = vmatpush.msra.mxu0 %v243
    %2662 = vmatmul.f32.gmra.mxu0 %v2543
    %v2663 = vpop.f32.mrf.mxu0
    %v2664 = vadd.f32 %v2644, %v2663
    %2665 = vdwg.mxu0
    %2666 = vmatpush.msra.mxu0 %v240
    %2667 = vmatpush.msra.mxu0 %v236
    %2668 = vmatpush.msra.mxu0 %v232
    %2669 = vmatpush.msra.mxu0 %v228
    %2670 = vmatpush.msra.mxu0 %v224
    %2671 = vmatpush.msra.mxu0 %v220
    %2672 = vmatpush.msra.mxu0 %v216
    %2673 = vmatpush.msra.mxu0 %v212
    %2674 = vmatpush.msra.mxu0 %v208
    %2675 = vmatpush.msra.mxu0 %v204
    %2676 = vmatpush.msra.mxu0 %v200
    %2677 = vmatpush.msra.mxu0 %v196
    %2678 = vmatpush.msra.mxu0 %v192
    %2679 = vmatpush.msra.mxu0 %v188
    %2680 = vmatpush.msra.mxu0 %v184
    %2681 = vmatpush.msra.mxu0 %v180
    %2682 = vmatmul.f32.gmra.mxu0 %v2542
    %v2683 = vpop.f32.mrf.mxu0
    %v2684 = vadd.f32 %v310, %v2683
    %2685 = vdwg.mxu0
    %2686 = vmatpush.msra.mxu0 %v304
    %2687 = vmatpush.msra.mxu0 %v300
    %2688 = vmatpush.msra.mxu0 %v296
    %2689 = vmatpush.msra.mxu0 %v292
    %2690 = vmatpush.msra.mxu0 %v288
    %2691 = vmatpush.msra.mxu0 %v284
    %2692 = vmatpush.msra.mxu0 %v280
    %2693 = vmatpush.msra.mxu0 %v276
    %2694 = vmatpush.msra.mxu0 %v272
    %2695 = vmatpush.msra.mxu0 %v268
    %2696 = vmatpush.msra.mxu0 %v264
    %2697 = vmatpush.msra.mxu0 %v260
    %2698 = vmatpush.msra.mxu0 %v256
    %2699 = vmatpush.msra.mxu0 %v252
    %2700 = vmatpush.msra.mxu0 %v248
    %2701 = vmatpush.msra.mxu0 %v244
    %2702 = vmatmul.f32.gmra.mxu0 %v2543
    %v2703 = vpop.f32.mrf.mxu0
    %v2704 = vadd.f32 %v2684, %v2703
    %2705 = vdwg.mxu0
    %v2706 = vxor.u32 %v2584, 2147483648
    %v2707 = vmul.f32 %v2706, 1.442695
    %v2708 = vpow.pop %v2707
    %v2709 = vadd.f32 %v2708, 1.0
    %v2710 = vrcp.pop %v2709
    %v2711 = vmul.f32 %v2709, %v2710
    %v2712 = vsub.f32 1.0, %v2711
    %v2713 = vmul.f32 %v2710, %v2712
    %v2714 = vadd.f32 %v2710, %v2713
    %vm2715 = vweird.f32 %v2709
    %vm2716 = vweird.f32 %v2710
    %vm2717 = vmor %vm2715, %vm2716
    %v2718 = vsel %vm2717, %v2710, %v2714
    %v2719 = vand.u32 2147483647, %v2709
    %vm2720 = vcmp.eq.f32.partialorder %v2719, 8.507059e+37
    %v2721 = vand.u32 %v2709, 2147483648
    %v2722 = vor.u32 1.1754944e-38, %v2721
    %v2723 = vsel %vm2720, %v2722, %v2718
    %v2724 = vmul.f32 1.0, %v2723
    %v2725 = vxor.u32 %v2624, 2147483648
    %v2726 = vmul.f32 %v2725, 1.442695
    %v2727 = vpow.pop %v2726
    %v2728 = vadd.f32 %v2727, 1.0
    %v2729 = vrcp.pop %v2728
    %v2730 = vmul.f32 %v2728, %v2729
    %v2731 = vsub.f32 1.0, %v2730
    %v2732 = vmul.f32 %v2729, %v2731
    %v2733 = vadd.f32 %v2729, %v2732
    %vm2734 = vweird.f32 %v2728
    %vm2735 = vweird.f32 %v2729
    %vm2736 = vmor %vm2734, %vm2735
    %v2737 = vsel %vm2736, %v2729, %v2733
    %v2738 = vand.u32 2147483647, %v2728
    %vm2739 = vcmp.eq.f32.partialorder %v2738, 8.507059e+37
    %v2740 = vand.u32 %v2728, 2147483648
    %v2741 = vor.u32 1.1754944e-38, %v2740
    %v2742 = vsel %vm2739, %v2741, %v2737
    %v2743 = vmul.f32 1.0, %v2742
    %v2744 = vtanh.pop %v2664
    %v2745 = vxor.u32 %v2704, 2147483648
    %v2746 = vmul.f32 %v2745, 1.442695
    %v2747 = vpow.pop %v2746
    %v2748 = vadd.f32 %v2747, 1.0
    %v2749 = vrcp.pop %v2748
    %v2750 = vmul.f32 %v2748, %v2749
    %v2751 = vsub.f32 1.0, %v2750
    %v2752 = vmul.f32 %v2749, %v2751
    %v2753 = vadd.f32 %v2749, %v2752
    %vm2754 = vweird.f32 %v2748
    %vm2755 = vweird.f32 %v2749
    %vm2756 = vmor %vm2754, %vm2755
    %v2757 = vsel %vm2756, %v2749, %v2753
    %v2758 = vand.u32 2147483647, %v2748
    %vm2759 = vcmp.eq.f32.partialorder %v2758, 8.507059e+37
    %v2760 = vand.u32 %v2748, 2147483648
    %v2761 = vor.u32 1.1754944e-38, %v2760
    %v2762 = vsel %vm2759, %v2761, %v2757
    %v2763 = vmul.f32 1.0, %v2762
    %v2764 = vmul.f32 %v2743, %v2371
    %v2765 = vmul.f32 %v2724, %v2744
    %v2766 = vadd.f32 %v2764, %v2765
    %v2767 = vtanh.pop %v2766
    %v2768 = vmul.f32 %v2763, %v2767
    %s2769 = scalar_lea.vmem %s6, 10
    %2770 = vst [vmem:[%s2769] sm:$0x3] %v2768
    %v2772 = vrot.slane %v2537, 2
    %2774 = vmatpush.msra.mxu0 %v173
    %2775 = vmatpush.msra.mxu0 %v169
    %2776 = vmatpush.msra.mxu0 %v165
    %2777 = vmatpush.msra.mxu0 %v161
    %2778 = vmatpush.msra.mxu0 %v157
    %2779 = vmatpush.msra.mxu0 %v153
    %2780 = vmatpush.msra.mxu0 %v149
    %2781 = vmatpush.msra.mxu0 %v145
    %2782 = vmatpush.msra.mxu0 %v141
    %2783 = vmatpush.msra.mxu0 %v137
    %2784 = vmatpush.msra.mxu0 %v133
    %2785 = vmatpush.msra.mxu0 %v129
    %2786 = vmatpush.msra.mxu0 %v125
    %2787 = vmatpush.msra.mxu0 %v121
    %2788 = vmatpush.msra.mxu0 %v117
    %2789 = vmatpush.msra.mxu0 %v113
    %2790 = vmatmul.f32.gmra.mxu0 %v2772
    %v2791 = vpop.f32.mrf.mxu0
    %v2792 = vadd.f32 0.0, %v2791
    %2793 = vdwg.mxu0
    %2794 = vmatpush.msra.mxu0 %v174
    %2795 = vmatpush.msra.mxu0 %v170
    %2796 = vmatpush.msra.mxu0 %v166
    %2797 = vmatpush.msra.mxu0 %v162
    %2798 = vmatpush.msra.mxu0 %v158
    %2799 = vmatpush.msra.mxu0 %v154
    %2800 = vmatpush.msra.mxu0 %v150
    %2801 = vmatpush.msra.mxu0 %v146
    %2802 = vmatpush.msra.mxu0 %v142
    %2803 = vmatpush.msra.mxu0 %v138
    %2804 = vmatpush.msra.mxu0 %v134
    %2805 = vmatpush.msra.mxu0 %v130
    %2806 = vmatpush.msra.mxu0 %v126
    %2807 = vmatpush.msra.mxu0 %v122
    %2808 = vmatpush.msra.mxu0 %v118
    %2809 = vmatpush.msra.mxu0 %v114
    %2810 = vmatmul.f32.gmra.mxu0 %v2772
    %v2811 = vpop.f32.mrf.mxu0
    %v2812 = vadd.f32 0.0, %v2811
    %2813 = vdwg.mxu0
    %2814 = vmatpush.msra.mxu0 %v175
    %2815 = vmatpush.msra.mxu0 %v171
    %2816 = vmatpush.msra.mxu0 %v167
    %2817 = vmatpush.msra.mxu0 %v163
    %2818 = vmatpush.msra.mxu0 %v159
    %2819 = vmatpush.msra.mxu0 %v155
    %2820 = vmatpush.msra.mxu0 %v151
    %2821 = vmatpush.msra.mxu0 %v147
    %2822 = vmatpush.msra.mxu0 %v143
    %2823 = vmatpush.msra.mxu0 %v139
    %2824 = vmatpush.msra.mxu0 %v135
    %2825 = vmatpush.msra.mxu0 %v131
    %2826 = vmatpush.msra.mxu0 %v127
    %2827 = vmatpush.msra.mxu0 %v123
    %2828 = vmatpush.msra.mxu0 %v119
    %2829 = vmatpush.msra.mxu0 %v115
    %2830 = vmatmul.f32.gmra.mxu0 %v2772
    %v2831 = vpop.f32.mrf.mxu0
    %v2832 = vadd.f32 0.0, %v2831
    %2833 = vdwg.mxu0
    %2834 = vmatpush.msra.mxu0 %v176
    %2835 = vmatpush.msra.mxu0 %v172
    %2836 = vmatpush.msra.mxu0 %v168
    %2837 = vmatpush.msra.mxu0 %v164
    %2838 = vmatpush.msra.mxu0 %v160
    %2839 = vmatpush.msra.mxu0 %v156
    %2840 = vmatpush.msra.mxu0 %v152
    %2841 = vmatpush.msra.mxu0 %v148
    %2842 = vmatpush.msra.mxu0 %v144
    %2843 = vmatpush.msra.mxu0 %v140
    %2844 = vmatpush.msra.mxu0 %v136
    %2845 = vmatpush.msra.mxu0 %v132
    %2846 = vmatpush.msra.mxu0 %v128
    %2847 = vmatpush.msra.mxu0 %v124
    %2848 = vmatpush.msra.mxu0 %v120
    %2849 = vmatpush.msra.mxu0 %v116
    %2850 = vmatmul.f32.gmra.mxu0 %v2772
    %v2851 = vpop.f32.mrf.mxu0
    %v2852 = vadd.f32 0.0, %v2851
    %2853 = vdwg.mxu0
    %v2858 = vrot.slane %v2792, 4
    %v2859 = vrot.slane %v2812, 4
    %v2860 = vrot.slane %v2832, 4
    %v2861 = vrot.slane %v2852, 4
    %v2866 = vadd.f32 %v363, %v2858
    %v2867 = vadd.f32 %v386, %v2859
    %v2868 = vadd.f32 %v409, %v2860
    %v2869 = vadd.f32 %v432, %v2861
    %v2870 = vxor.u32 %v2866, 2147483648
    %v2871 = vmul.f32 %v2870, 1.442695
    %v2872 = vpow.pop %v2871
    %v2873 = vadd.f32 %v2872, 1.0
    %v2874 = vrcp.pop %v2873
    %v2875 = vmul.f32 %v2873, %v2874
    %v2876 = vsub.f32 1.0, %v2875
    %v2877 = vmul.f32 %v2874, %v2876
    %v2878 = vadd.f32 %v2874, %v2877
    %vm2879 = vweird.f32 %v2873
    %vm2880 = vweird.f32 %v2874
    %vm2881 = vmor %vm2879, %vm2880
    %v2882 = vsel %vm2881, %v2874, %v2878
    %v2883 = vand.u32 2147483647, %v2873
    %vm2884 = vcmp.eq.f32.partialorder %v2883, 8.507059e+37
    %v2885 = vand.u32 %v2873, 2147483648
    %v2886 = vor.u32 1.1754944e-38, %v2885
    %v2887 = vsel %vm2884, %v2886, %v2882
    %v2888 = vmul.f32 1.0, %v2887
    %v2889 = vxor.u32 %v2867, 2147483648
    %v2890 = vmul.f32 %v2889, 1.442695
    %v2891 = vpow.pop %v2890
    %v2892 = vadd.f32 %v2891, 1.0
    %v2893 = vrcp.pop %v2892
    %v2894 = vmul.f32 %v2892, %v2893
    %v2895 = vsub.f32 1.0, %v2894
    %v2896 = vmul.f32 %v2893, %v2895
    %v2897 = vadd.f32 %v2893, %v2896
    %vm2898 = vweird.f32 %v2892
    %vm2899 = vweird.f32 %v2893
    %vm2900 = vmor %vm2898, %vm2899
    %v2901 = vsel %vm2900, %v2893, %v2897
    %v2902 = vand.u32 2147483647, %v2892
    %vm2903 = vcmp.eq.f32.partialorder %v2902, 8.507059e+37
    %v2904 = vand.u32 %v2892, 2147483648
    %v2905 = vor.u32 1.1754944e-38, %v2904
    %v2906 = vsel %vm2903, %v2905, %v2901
    %v2907 = vmul.f32 1.0, %v2906
    %v2908 = vtanh.pop %v2868
    %v2909 = vxor.u32 %v2869, 2147483648
    %v2910 = vmul.f32 %v2909, 1.442695
    %v2911 = vpow.pop %v2910
    %v2912 = vadd.f32 %v2911, 1.0
    %v2913 = vrcp.pop %v2912
    %v2914 = vmul.f32 %v2912, %v2913
    %v2915 = vsub.f32 1.0, %v2914
    %v2916 = vmul.f32 %v2913, %v2915
    %v2917 = vadd.f32 %v2913, %v2916
    %vm2918 = vweird.f32 %v2912
    %vm2919 = vweird.f32 %v2913
    %vm2920 = vmor %vm2918, %vm2919
    %v2921 = vsel %vm2920, %v2913, %v2917
    %v2922 = vand.u32 2147483647, %v2912
    %vm2923 = vcmp.eq.f32.partialorder %v2922, 8.507059e+37
    %v2924 = vand.u32 %v2912, 2147483648
    %v2925 = vor.u32 1.1754944e-38, %v2924
    %v2926 = vsel %vm2923, %v2925, %v2921
    %v2927 = vmul.f32 1.0, %v2926
    %v2929 = vrot.slane %v2535, 6
    %v2931 = vmul.f32 %v2907, %v2929
    %v2932 = vmul.f32 %v2888, %v2908
    %v2933 = vadd.f32 %v2931, %v2932
    %v2934 = vtanh.pop %v2933
    %v2935 = vmul.f32 %v2927, %v2934
    %v2936 = vmax.f32 %v2935, 0.0
    %v2938 = vrot.slane %v2768, 4
    %v2940 = vrot.slane %v2936, 4
    %v2941 = vrot.slane %v2938, 4
    %2944 = vmatpush.msra.mxu0 %v237
    %2945 = vmatpush.msra.mxu0 %v233
    %2946 = vmatpush.msra.mxu0 %v229
    %2947 = vmatpush.msra.mxu0 %v225
    %2948 = vmatpush.msra.mxu0 %v221
    %2949 = vmatpush.msra.mxu0 %v217
    %2950 = vmatpush.msra.mxu0 %v213
    %2951 = vmatpush.msra.mxu0 %v209
    %2952 = vmatpush.msra.mxu0 %v205
    %2953 = vmatpush.msra.mxu0 %v201
    %2954 = vmatpush.msra.mxu0 %v197
    %2955 = vmatpush.msra.mxu0 %v193
    %2956 = vmatpush.msra.mxu0 %v189
    %2957 = vmatpush.msra.mxu0 %v185
    %2958 = vmatpush.msra.mxu0 %v181
    %2959 = vmatpush.msra.mxu0 %v177
    %2960 = vmatmul.f32.gmra.mxu0 %v2940
    %v2961 = vpop.f32.mrf.mxu0
    %v2962 = vadd.f32 %v307, %v2961
    %2963 = vdwg.mxu0
    %2964 = vmatpush.msra.mxu0 %v301
    %2965 = vmatpush.msra.mxu0 %v297
    %2966 = vmatpush.msra.mxu0 %v293
    %2967 = vmatpush.msra.mxu0 %v289
    %2968 = vmatpush.msra.mxu0 %v285
    %2969 = vmatpush.msra.mxu0 %v281
    %2970 = vmatpush.msra.mxu0 %v277
    %2971 = vmatpush.msra.mxu0 %v273
    %2972 = vmatpush.msra.mxu0 %v269
    %2973 = vmatpush.msra.mxu0 %v265
    %2974 = vmatpush.msra.mxu0 %v261
    %2975 = vmatpush.msra.mxu0 %v257
    %2976 = vmatpush.msra.mxu0 %v253
    %2977 = vmatpush.msra.mxu0 %v249
    %2978 = vmatpush.msra.mxu0 %v245
    %2979 = vmatpush.msra.mxu0 %v241
    %2980 = vmatmul.f32.gmra.mxu0 %v2941
    %v2981 = vpop.f32.mrf.mxu0
    %v2982 = vadd.f32 %v2962, %v2981
    %2983 = vdwg.mxu0
    %2984 = vmatpush.msra.mxu0 %v238
    %2985 = vmatpush.msra.mxu0 %v234
    %2986 = vmatpush.msra.mxu0 %v230
    %2987 = vmatpush.msra.mxu0 %v226
    %2988 = vmatpush.msra.mxu0 %v222
    %2989 = vmatpush.msra.mxu0 %v218
    %2990 = vmatpush.msra.mxu0 %v214
    %2991 = vmatpush.msra.mxu0 %v210
    %2992 = vmatpush.msra.mxu0 %v206
    %2993 = vmatpush.msra.mxu0 %v202
    %2994 = vmatpush.msra.mxu0 %v198
    %2995 = vmatpush.msra.mxu0 %v194
    %2996 = vmatpush.msra.mxu0 %v190
    %2997 = vmatpush.msra.mxu0 %v186
    %2998 = vmatpush.msra.mxu0 %v182
    %2999 = vmatpush.msra.mxu0 %v178
    %3000 = vmatmul.f32.gmra.mxu0 %v2940
    %v3001 = vpop.f32.mrf.mxu0
    %v3002 = vadd.f32 %v308, %v3001
    %3003 = vdwg.mxu0
    %3004 = vmatpush.msra.mxu0 %v302
    %3005 = vmatpush.msra.mxu0 %v298
    %3006 = vmatpush.msra.mxu0 %v294
    %3007 = vmatpush.msra.mxu0 %v290
    %3008 = vmatpush.msra.mxu0 %v286
    %3009 = vmatpush.msra.mxu0 %v282
    %3010 = vmatpush.msra.mxu0 %v278
    %3011 = vmatpush.msra.mxu0 %v274
    %3012 = vmatpush.msra.mxu0 %v270
    %3013 = vmatpush.msra.mxu0 %v266
    %3014 = vmatpush.msra.mxu0 %v262
    %3015 = vmatpush.msra.mxu0 %v258
    %3016 = vmatpush.msra.mxu0 %v254
    %3017 = vmatpush.msra.mxu0 %v250
    %3018 = vmatpush.msra.mxu0 %v246
    %3019 = vmatpush.msra.mxu0 %v242
    %3020 = vmatmul.f32.gmra.mxu0 %v2941
    %v3021 = vpop.f32.mrf.mxu0
    %v3022 = vadd.f32 %v3002, %v3021
    %3023 = vdwg.mxu0
    %3024 = vmatpush.msra.mxu0 %v239
    %3025 = vmatpush.msra.mxu0 %v235
    %3026 = vmatpush.msra.mxu0 %v231
    %3027 = vmatpush.msra.mxu0 %v227
    %3028 = vmatpush.msra.mxu0 %v223
    %3029 = vmatpush.msra.mxu0 %v219
    %3030 = vmatpush.msra.mxu0 %v215
    %3031 = vmatpush.msra.mxu0 %v211
    %3032 = vmatpush.msra.mxu0 %v207
    %3033 = vmatpush.msra.mxu0 %v203
    %3034 = vmatpush.msra.mxu0 %v199
    %3035 = vmatpush.msra.mxu0 %v195
    %3036 = vmatpush.msra.mxu0 %v191
    %3037 = vmatpush.msra.mxu0 %v187
    %3038 = vmatpush.msra.mxu0 %v183
    %3039 = vmatpush.msra.mxu0 %v179
    %3040 = vmatmul.f32.gmra.mxu0 %v2940
    %v3041 = vpop.f32.mrf.mxu0
    %v3042 = vadd.f32 %v309, %v3041
    %3043 = vdwg.mxu0
    %3044 = vmatpush.msra.mxu0 %v303
    %3045 = vmatpush.msra.mxu0 %v299
    %3046 = vmatpush.msra.mxu0 %v295
    %3047 = vmatpush.msra.mxu0 %v291
    %3048 = vmatpush.msra.mxu0 %v287
    %3049 = vmatpush.msra.mxu0 %v283
    %3050 = vmatpush.msra.mxu0 %v279
    %3051 = vmatpush.msra.mxu0 %v275
    %3052 = vmatpush.msra.mxu0 %v271
    %3053 = vmatpush.msra.mxu0 %v267
    %3054 = vmatpush.msra.mxu0 %v263
    %3055 = vmatpush.msra.mxu0 %v259
    %3056 = vmatpush.msra.mxu0 %v255
    %3057 = vmatpush.msra.mxu0 %v251
    %3058 = vmatpush.msra.mxu0 %v247
    %3059 = vmatpush.msra.mxu0 %v243
    %3060 = vmatmul.f32.gmra.mxu0 %v2941
    %v3061 = vpop.f32.mrf.mxu0
    %v3062 = vadd.f32 %v3042, %v3061
    %3063 = vdwg.mxu0
    %3064 = vmatpush.msra.mxu0 %v240
    %3065 = vmatpush.msra.mxu0 %v236
    %3066 = vmatpush.msra.mxu0 %v232
    %3067 = vmatpush.msra.mxu0 %v228
    %3068 = vmatpush.msra.mxu0 %v224
    %3069 = vmatpush.msra.mxu0 %v220
    %3070 = vmatpush.msra.mxu0 %v216
    %3071 = vmatpush.msra.mxu0 %v212
    %3072 = vmatpush.msra.mxu0 %v208
    %3073 = vmatpush.msra.mxu0 %v204
    %3074 = vmatpush.msra.mxu0 %v200
    %3075 = vmatpush.msra.mxu0 %v196
    %3076 = vmatpush.msra.mxu0 %v192
    %3077 = vmatpush.msra.mxu0 %v188
    %3078 = vmatpush.msra.mxu0 %v184
    %3079 = vmatpush.msra.mxu0 %v180
    %3080 = vmatmul.f32.gmra.mxu0 %v2940
    %v3081 = vpop.f32.mrf.mxu0
    %v3082 = vadd.f32 %v310, %v3081
    %3083 = vdwg.mxu0
    %3084 = vmatpush.msra.mxu0 %v304
    %3085 = vmatpush.msra.mxu0 %v300
    %3086 = vmatpush.msra.mxu0 %v296
    %3087 = vmatpush.msra.mxu0 %v292
    %3088 = vmatpush.msra.mxu0 %v288
    %3089 = vmatpush.msra.mxu0 %v284
    %3090 = vmatpush.msra.mxu0 %v280
    %3091 = vmatpush.msra.mxu0 %v276
    %3092 = vmatpush.msra.mxu0 %v272
    %3093 = vmatpush.msra.mxu0 %v268
    %3094 = vmatpush.msra.mxu0 %v264
    %3095 = vmatpush.msra.mxu0 %v260
    %3096 = vmatpush.msra.mxu0 %v256
    %3097 = vmatpush.msra.mxu0 %v252
    %3098 = vmatpush.msra.mxu0 %v248
    %3099 = vmatpush.msra.mxu0 %v244
    %3100 = vmatmul.f32.gmra.mxu0 %v2941
    %v3101 = vpop.f32.mrf.mxu0
    %v3102 = vadd.f32 %v3082, %v3101
    %3103 = vdwg.mxu0
    %v3104 = vxor.u32 %v2982, 2147483648
    %v3105 = vmul.f32 %v3104, 1.442695
    %v3106 = vpow.pop %v3105
    %v3107 = vadd.f32 %v3106, 1.0
    %v3108 = vrcp.pop %v3107
    %v3109 = vmul.f32 %v3107, %v3108
    %v3110 = vsub.f32 1.0, %v3109
    %v3111 = vmul.f32 %v3108, %v3110
    %v3112 = vadd.f32 %v3108, %v3111
    %vm3113 = vweird.f32 %v3107
    %vm3114 = vweird.f32 %v3108
    %vm3115 = vmor %vm3113, %vm3114
    %v3116 = vsel %vm3115, %v3108, %v3112
    %v3117 = vand.u32 2147483647, %v3107
    %vm3118 = vcmp.eq.f32.partialorder %v3117, 8.507059e+37
    %v3119 = vand.u32 %v3107, 2147483648
    %v3120 = vor.u32 1.1754944e-38, %v3119
    %v3121 = vsel %vm3118, %v3120, %v3116
    %v3122 = vmul.f32 1.0, %v3121
    %v3123 = vxor.u32 %v3022, 2147483648
    %v3124 = vmul.f32 %v3123, 1.442695
    %v3125 = vpow.pop %v3124
    %v3126 = vadd.f32 %v3125, 1.0
    %v3127 = vrcp.pop %v3126
    %v3128 = vmul.f32 %v3126, %v3127
    %v3129 = vsub.f32 1.0, %v3128
    %v3130 = vmul.f32 %v3127, %v3129
    %v3131 = vadd.f32 %v3127, %v3130
    %vm3132 = vweird.f32 %v3126
    %vm3133 = vweird.f32 %v3127
    %vm3134 = vmor %vm3132, %vm3133
    %v3135 = vsel %vm3134, %v3127, %v3131
    %v3136 = vand.u32 2147483647, %v3126
    %vm3137 = vcmp.eq.f32.partialorder %v3136, 8.507059e+37
    %v3138 = vand.u32 %v3126, 2147483648
    %v3139 = vor.u32 1.1754944e-38, %v3138
    %v3140 = vsel %vm3137, %v3139, %v3135
    %v3141 = vmul.f32 1.0, %v3140
    %v3142 = vtanh.pop %v3062
    %v3143 = vxor.u32 %v3102, 2147483648
    %v3144 = vmul.f32 %v3143, 1.442695
    %v3145 = vpow.pop %v3144
    %v3146 = vadd.f32 %v3145, 1.0
    %v3147 = vrcp.pop %v3146
    %v3148 = vmul.f32 %v3146, %v3147
    %v3149 = vsub.f32 1.0, %v3148
    %v3150 = vmul.f32 %v3147, %v3149
    %v3151 = vadd.f32 %v3147, %v3150
    %vm3152 = vweird.f32 %v3146
    %vm3153 = vweird.f32 %v3147
    %vm3154 = vmor %vm3152, %vm3153
    %v3155 = vsel %vm3154, %v3147, %v3151
    %v3156 = vand.u32 2147483647, %v3146
    %vm3157 = vcmp.eq.f32.partialorder %v3156, 8.507059e+37
    %v3158 = vand.u32 %v3146, 2147483648
    %v3159 = vor.u32 1.1754944e-38, %v3158
    %v3160 = vsel %vm3157, %v3159, %v3155
    %v3161 = vmul.f32 1.0, %v3160
    %v3162 = vmul.f32 %v3141, %v2766
    %v3163 = vmul.f32 %v3122, %v3142
    %v3164 = vadd.f32 %v3162, %v3163
    %v3165 = vtanh.pop %v3164
    %v3166 = vmul.f32 %v3161, %v3165
    %s3167 = scalar_lea.vmem %s6, 12
    %3168 = vst [vmem:[%s3167] sm:$0x3] %v3166
    %v3170 = vrot.slane %v2935, 4
    %3172 = vmatpush.msra.mxu0 %v173
    %3173 = vmatpush.msra.mxu0 %v169
    %3174 = vmatpush.msra.mxu0 %v165
    %3175 = vmatpush.msra.mxu0 %v161
    %3176 = vmatpush.msra.mxu0 %v157
    %3177 = vmatpush.msra.mxu0 %v153
    %3178 = vmatpush.msra.mxu0 %v149
    %3179 = vmatpush.msra.mxu0 %v145
    %3180 = vmatpush.msra.mxu0 %v141
    %3181 = vmatpush.msra.mxu0 %v137
    %3182 = vmatpush.msra.mxu0 %v133
    %3183 = vmatpush.msra.mxu0 %v129
    %3184 = vmatpush.msra.mxu0 %v125
    %3185 = vmatpush.msra.mxu0 %v121
    %3186 = vmatpush.msra.mxu0 %v117
    %3187 = vmatpush.msra.mxu0 %v113
    %3188 = vmatmul.f32.gmra.mxu0 %v3170
    %v3189 = vpop.f32.mrf.mxu0
    %v3190 = vadd.f32 0.0, %v3189
    %3191 = vdwg.mxu0
    %3192 = vmatpush.msra.mxu0 %v174
    %3193 = vmatpush.msra.mxu0 %v170
    %3194 = vmatpush.msra.mxu0 %v166
    %3195 = vmatpush.msra.mxu0 %v162
    %3196 = vmatpush.msra.mxu0 %v158
    %3197 = vmatpush.msra.mxu0 %v154
    %3198 = vmatpush.msra.mxu0 %v150
    %3199 = vmatpush.msra.mxu0 %v146
    %3200 = vmatpush.msra.mxu0 %v142
    %3201 = vmatpush.msra.mxu0 %v138
    %3202 = vmatpush.msra.mxu0 %v134
    %3203 = vmatpush.msra.mxu0 %v130
    %3204 = vmatpush.msra.mxu0 %v126
    %3205 = vmatpush.msra.mxu0 %v122
    %3206 = vmatpush.msra.mxu0 %v118
    %3207 = vmatpush.msra.mxu0 %v114
    %3208 = vmatmul.f32.gmra.mxu0 %v3170
    %v3209 = vpop.f32.mrf.mxu0
    %v3210 = vadd.f32 0.0, %v3209
    %3211 = vdwg.mxu0
    %3212 = vmatpush.msra.mxu0 %v175
    %3213 = vmatpush.msra.mxu0 %v171
    %3214 = vmatpush.msra.mxu0 %v167
    %3215 = vmatpush.msra.mxu0 %v163
    %3216 = vmatpush.msra.mxu0 %v159
    %3217 = vmatpush.msra.mxu0 %v155
    %3218 = vmatpush.msra.mxu0 %v151
    %3219 = vmatpush.msra.mxu0 %v147
    %3220 = vmatpush.msra.mxu0 %v143
    %3221 = vmatpush.msra.mxu0 %v139
    %3222 = vmatpush.msra.mxu0 %v135
    %3223 = vmatpush.msra.mxu0 %v131
    %3224 = vmatpush.msra.mxu0 %v127
    %3225 = vmatpush.msra.mxu0 %v123
    %3226 = vmatpush.msra.mxu0 %v119
    %3227 = vmatpush.msra.mxu0 %v115
    %3228 = vmatmul.f32.gmra.mxu0 %v3170
    %v3229 = vpop.f32.mrf.mxu0
    %v3230 = vadd.f32 0.0, %v3229
    %3231 = vdwg.mxu0
    %3232 = vmatpush.msra.mxu0 %v176
    %3233 = vmatpush.msra.mxu0 %v172
    %3234 = vmatpush.msra.mxu0 %v168
    %3235 = vmatpush.msra.mxu0 %v164
    %3236 = vmatpush.msra.mxu0 %v160
    %3237 = vmatpush.msra.mxu0 %v156
    %3238 = vmatpush.msra.mxu0 %v152
    %3239 = vmatpush.msra.mxu0 %v148
    %3240 = vmatpush.msra.mxu0 %v144
    %3241 = vmatpush.msra.mxu0 %v140
    %3242 = vmatpush.msra.mxu0 %v136
    %3243 = vmatpush.msra.mxu0 %v132
    %3244 = vmatpush.msra.mxu0 %v128
    %3245 = vmatpush.msra.mxu0 %v124
    %3246 = vmatpush.msra.mxu0 %v120
    %3247 = vmatpush.msra.mxu0 %v116
    %3248 = vmatmul.f32.gmra.mxu0 %v3170
    %v3249 = vpop.f32.mrf.mxu0
    %v3250 = vadd.f32 0.0, %v3249
    %3251 = vdwg.mxu0
    %v3256 = vrot.slane %v3190, 2
    %v3257 = vrot.slane %v3210, 2
    %v3258 = vrot.slane %v3230, 2
    %v3259 = vrot.slane %v3250, 2
    %v3264 = vadd.f32 %v363, %v3256
    %v3265 = vadd.f32 %v386, %v3257
    %v3266 = vadd.f32 %v409, %v3258
    %v3267 = vadd.f32 %v432, %v3259
    %v3268 = vxor.u32 %v3264, 2147483648
    %v3269 = vmul.f32 %v3268, 1.442695
    %v3270 = vpow.pop %v3269
    %v3271 = vadd.f32 %v3270, 1.0
    %v3272 = vrcp.pop %v3271
    %v3273 = vmul.f32 %v3271, %v3272
    %v3274 = vsub.f32 1.0, %v3273
    %v3275 = vmul.f32 %v3272, %v3274
    %v3276 = vadd.f32 %v3272, %v3275
    %vm3277 = vweird.f32 %v3271
    %vm3278 = vweird.f32 %v3272
    %vm3279 = vmor %vm3277, %vm3278
    %v3280 = vsel %vm3279, %v3272, %v3276
    %v3281 = vand.u32 2147483647, %v3271
    %vm3282 = vcmp.eq.f32.partialorder %v3281, 8.507059e+37
    %v3283 = vand.u32 %v3271, 2147483648
    %v3284 = vor.u32 1.1754944e-38, %v3283
    %v3285 = vsel %vm3282, %v3284, %v3280
    %v3286 = vmul.f32 1.0, %v3285
    %v3287 = vxor.u32 %v3265, 2147483648
    %v3288 = vmul.f32 %v3287, 1.442695
    %v3289 = vpow.pop %v3288
    %v3290 = vadd.f32 %v3289, 1.0
    %v3291 = vrcp.pop %v3290
    %v3292 = vmul.f32 %v3290, %v3291
    %v3293 = vsub.f32 1.0, %v3292
    %v3294 = vmul.f32 %v3291, %v3293
    %v3295 = vadd.f32 %v3291, %v3294
    %vm3296 = vweird.f32 %v3290
    %vm3297 = vweird.f32 %v3291
    %vm3298 = vmor %vm3296, %vm3297
    %v3299 = vsel %vm3298, %v3291, %v3295
    %v3300 = vand.u32 2147483647, %v3290
    %vm3301 = vcmp.eq.f32.partialorder %v3300, 8.507059e+37
    %v3302 = vand.u32 %v3290, 2147483648
    %v3303 = vor.u32 1.1754944e-38, %v3302
    %v3304 = vsel %vm3301, %v3303, %v3299
    %v3305 = vmul.f32 1.0, %v3304
    %v3306 = vtanh.pop %v3266
    %v3307 = vxor.u32 %v3267, 2147483648
    %v3308 = vmul.f32 %v3307, 1.442695
    %v3309 = vpow.pop %v3308
    %v3310 = vadd.f32 %v3309, 1.0
    %v3311 = vrcp.pop %v3310
    %v3312 = vmul.f32 %v3310, %v3311
    %v3313 = vsub.f32 1.0, %v3312
    %v3314 = vmul.f32 %v3311, %v3313
    %v3315 = vadd.f32 %v3311, %v3314
    %vm3316 = vweird.f32 %v3310
    %vm3317 = vweird.f32 %v3311
    %vm3318 = vmor %vm3316, %vm3317
    %v3319 = vsel %vm3318, %v3311, %v3315
    %v3320 = vand.u32 2147483647, %v3310
    %vm3321 = vcmp.eq.f32.partialorder %v3320, 8.507059e+37
    %v3322 = vand.u32 %v3310, 2147483648
    %v3323 = vor.u32 1.1754944e-38, %v3322
    %v3324 = vsel %vm3321, %v3323, %v3319
    %v3325 = vmul.f32 1.0, %v3324
    %v3327 = vrot.slane %v2933, 6
    %v3329 = vmul.f32 %v3305, %v3327
    %v3330 = vmul.f32 %v3286, %v3306
    %v3331 = vadd.f32 %v3329, %v3330
    %v3332 = vtanh.pop %v3331
    %v3333 = vmul.f32 %v3325, %v3332
    %v3334 = vmax.f32 %v3333, 0.0
    %v3336 = vrot.slane %v3166, 2
    %v3338 = vrot.slane %v3334, 6
    %v3339 = vrot.slane %v3336, 6
    %3342 = vmatpush.msra.mxu0 %v237
    %3343 = vmatpush.msra.mxu0 %v233
    %3344 = vmatpush.msra.mxu0 %v229
    %3345 = vmatpush.msra.mxu0 %v225
    %3346 = vmatpush.msra.mxu0 %v221
    %3347 = vmatpush.msra.mxu0 %v217
    %3348 = vmatpush.msra.mxu0 %v213
    %3349 = vmatpush.msra.mxu0 %v209
    %3350 = vmatpush.msra.mxu0 %v205
    %3351 = vmatpush.msra.mxu0 %v201
    %3352 = vmatpush.msra.mxu0 %v197
    %3353 = vmatpush.msra.mxu0 %v193
    %3354 = vmatpush.msra.mxu0 %v189
    %3355 = vmatpush.msra.mxu0 %v185
    %3356 = vmatpush.msra.mxu0 %v181
    %3357 = vmatpush.msra.mxu0 %v177
    %3358 = vmatmul.f32.gmra.mxu0 %v3338
    %v3359 = vpop.f32.mrf.mxu0
    %v3360 = vadd.f32 %v307, %v3359
    %3361 = vdwg.mxu0
    %3362 = vmatpush.msra.mxu0 %v301
    %3363 = vmatpush.msra.mxu0 %v297
    %3364 = vmatpush.msra.mxu0 %v293
    %3365 = vmatpush.msra.mxu0 %v289
    %3366 = vmatpush.msra.mxu0 %v285
    %3367 = vmatpush.msra.mxu0 %v281
    %3368 = vmatpush.msra.mxu0 %v277
    %3369 = vmatpush.msra.mxu0 %v273
    %3370 = vmatpush.msra.mxu0 %v269
    %3371 = vmatpush.msra.mxu0 %v265
    %3372 = vmatpush.msra.mxu0 %v261
    %3373 = vmatpush.msra.mxu0 %v257
    %3374 = vmatpush.msra.mxu0 %v253
    %3375 = vmatpush.msra.mxu0 %v249
    %3376 = vmatpush.msra.mxu0 %v245
    %3377 = vmatpush.msra.mxu0 %v241
    %3378 = vmatmul.f32.gmra.mxu0 %v3339
    %v3379 = vpop.f32.mrf.mxu0
    %v3380 = vadd.f32 %v3360, %v3379
    %3381 = vdwg.mxu0
    %3382 = vmatpush.msra.mxu0 %v238
    %3383 = vmatpush.msra.mxu0 %v234
    %3384 = vmatpush.msra.mxu0 %v230
    %3385 = vmatpush.msra.mxu0 %v226
    %3386 = vmatpush.msra.mxu0 %v222
    %3387 = vmatpush.msra.mxu0 %v218
    %3388 = vmatpush.msra.mxu0 %v214
    %3389 = vmatpush.msra.mxu0 %v210
    %3390 = vmatpush.msra.mxu0 %v206
    %3391 = vmatpush.msra.mxu0 %v202
    %3392 = vmatpush.msra.mxu0 %v198
    %3393 = vmatpush.msra.mxu0 %v194
    %3394 = vmatpush.msra.mxu0 %v190
    %3395 = vmatpush.msra.mxu0 %v186
    %3396 = vmatpush.msra.mxu0 %v182
    %3397 = vmatpush.msra.mxu0 %v178
    %3398 = vmatmul.f32.gmra.mxu0 %v3338
    %v3399 = vpop.f32.mrf.mxu0
    %v3400 = vadd.f32 %v308, %v3399
    %3401 = vdwg.mxu0
    %3402 = vmatpush.msra.mxu0 %v302
    %3403 = vmatpush.msra.mxu0 %v298
    %3404 = vmatpush.msra.mxu0 %v294
    %3405 = vmatpush.msra.mxu0 %v290
    %3406 = vmatpush.msra.mxu0 %v286
    %3407 = vmatpush.msra.mxu0 %v282
    %3408 = vmatpush.msra.mxu0 %v278
    %3409 = vmatpush.msra.mxu0 %v274
    %3410 = vmatpush.msra.mxu0 %v270
    %3411 = vmatpush.msra.mxu0 %v266
    %3412 = vmatpush.msra.mxu0 %v262
    %3413 = vmatpush.msra.mxu0 %v258
    %3414 = vmatpush.msra.mxu0 %v254
    %3415 = vmatpush.msra.mxu0 %v250
    %3416 = vmatpush.msra.mxu0 %v246
    %3417 = vmatpush.msra.mxu0 %v242
    %3418 = vmatmul.f32.gmra.mxu0 %v3339
    %v3419 = vpop.f32.mrf.mxu0
    %v3420 = vadd.f32 %v3400, %v3419
    %3421 = vdwg.mxu0
    %3422 = vmatpush.msra.mxu0 %v239
    %3423 = vmatpush.msra.mxu0 %v235
    %3424 = vmatpush.msra.mxu0 %v231
    %3425 = vmatpush.msra.mxu0 %v227
    %3426 = vmatpush.msra.mxu0 %v223
    %3427 = vmatpush.msra.mxu0 %v219
    %3428 = vmatpush.msra.mxu0 %v215
    %3429 = vmatpush.msra.mxu0 %v211
    %3430 = vmatpush.msra.mxu0 %v207
    %3431 = vmatpush.msra.mxu0 %v203
    %3432 = vmatpush.msra.mxu0 %v199
    %3433 = vmatpush.msra.mxu0 %v195
    %3434 = vmatpush.msra.mxu0 %v191
    %3435 = vmatpush.msra.mxu0 %v187
    %3436 = vmatpush.msra.mxu0 %v183
    %3437 = vmatpush.msra.mxu0 %v179
    %3438 = vmatmul.f32.gmra.mxu0 %v3338
    %v3439 = vpop.f32.mrf.mxu0
    %v3440 = vadd.f32 %v309, %v3439
    %3441 = vdwg.mxu0
    %3442 = vmatpush.msra.mxu0 %v303
    %3443 = vmatpush.msra.mxu0 %v299
    %3444 = vmatpush.msra.mxu0 %v295
    %3445 = vmatpush.msra.mxu0 %v291
    %3446 = vmatpush.msra.mxu0 %v287
    %3447 = vmatpush.msra.mxu0 %v283
    %3448 = vmatpush.msra.mxu0 %v279
    %3449 = vmatpush.msra.mxu0 %v275
    %3450 = vmatpush.msra.mxu0 %v271
    %3451 = vmatpush.msra.mxu0 %v267
    %3452 = vmatpush.msra.mxu0 %v263
    %3453 = vmatpush.msra.mxu0 %v259
    %3454 = vmatpush.msra.mxu0 %v255
    %3455 = vmatpush.msra.mxu0 %v251
    %3456 = vmatpush.msra.mxu0 %v247
    %3457 = vmatpush.msra.mxu0 %v243
    %3458 = vmatmul.f32.gmra.mxu0 %v3339
    %v3459 = vpop.f32.mrf.mxu0
    %v3460 = vadd.f32 %v3440, %v3459
    %3461 = vdwg.mxu0
    %3462 = vmatpush.msra.mxu0 %v240
    %3463 = vmatpush.msra.mxu0 %v236
    %3464 = vmatpush.msra.mxu0 %v232
    %3465 = vmatpush.msra.mxu0 %v228
    %3466 = vmatpush.msra.mxu0 %v224
    %3467 = vmatpush.msra.mxu0 %v220
    %3468 = vmatpush.msra.mxu0 %v216
    %3469 = vmatpush.msra.mxu0 %v212
    %3470 = vmatpush.msra.mxu0 %v208
    %3471 = vmatpush.msra.mxu0 %v204
    %3472 = vmatpush.msra.mxu0 %v200
    %3473 = vmatpush.msra.mxu0 %v196
    %3474 = vmatpush.msra.mxu0 %v192
    %3475 = vmatpush.msra.mxu0 %v188
    %3476 = vmatpush.msra.mxu0 %v184
    %3477 = vmatpush.msra.mxu0 %v180
    %3478 = vmatmul.f32.gmra.mxu0 %v3338
    %v3479 = vpop.f32.mrf.mxu0
    %v3480 = vadd.f32 %v310, %v3479
    %3481 = vdwg.mxu0
    %3482 = vmatpush.msra.mxu0 %v304
    %3483 = vmatpush.msra.mxu0 %v300
    %3484 = vmatpush.msra.mxu0 %v296
    %3485 = vmatpush.msra.mxu0 %v292
    %3486 = vmatpush.msra.mxu0 %v288
    %3487 = vmatpush.msra.mxu0 %v284
    %3488 = vmatpush.msra.mxu0 %v280
    %3489 = vmatpush.msra.mxu0 %v276
    %3490 = vmatpush.msra.mxu0 %v272
    %3491 = vmatpush.msra.mxu0 %v268
    %3492 = vmatpush.msra.mxu0 %v264
    %3493 = vmatpush.msra.mxu0 %v260
    %3494 = vmatpush.msra.mxu0 %v256
    %3495 = vmatpush.msra.mxu0 %v252
    %3496 = vmatpush.msra.mxu0 %v248
    %3497 = vmatpush.msra.mxu0 %v244
    %3498 = vmatmul.f32.gmra.mxu0 %v3339
    %v3499 = vpop.f32.mrf.mxu0
    %v3500 = vadd.f32 %v3480, %v3499
    %3501 = vdwg.mxu0
    %v3502 = vxor.u32 %v3380, 2147483648
    %v3503 = vmul.f32 %v3502, 1.442695
    %v3504 = vpow.pop %v3503
    %v3505 = vadd.f32 %v3504, 1.0
    %v3506 = vrcp.pop %v3505
    %v3507 = vmul.f32 %v3505, %v3506
    %v3508 = vsub.f32 1.0, %v3507
    %v3509 = vmul.f32 %v3506, %v3508
    %v3510 = vadd.f32 %v3506, %v3509
    %vm3511 = vweird.f32 %v3505
    %vm3512 = vweird.f32 %v3506
    %vm3513 = vmor %vm3511, %vm3512
    %v3514 = vsel %vm3513, %v3506, %v3510
    %v3515 = vand.u32 2147483647, %v3505
    %vm3516 = vcmp.eq.f32.partialorder %v3515, 8.507059e+37
    %v3517 = vand.u32 %v3505, 2147483648
    %v3518 = vor.u32 1.1754944e-38, %v3517
    %v3519 = vsel %vm3516, %v3518, %v3514
    %v3520 = vmul.f32 1.0, %v3519
    %v3521 = vxor.u32 %v3420, 2147483648
    %v3522 = vmul.f32 %v3521, 1.442695
    %v3523 = vpow.pop %v3522
    %v3524 = vadd.f32 %v3523, 1.0
    %v3525 = vrcp.pop %v3524
    %v3526 = vmul.f32 %v3524, %v3525
    %v3527 = vsub.f32 1.0, %v3526
    %v3528 = vmul.f32 %v3525, %v3527
    %v3529 = vadd.f32 %v3525, %v3528
    %vm3530 = vweird.f32 %v3524
    %vm3531 = vweird.f32 %v3525
    %vm3532 = vmor %vm3530, %vm3531
    %v3533 = vsel %vm3532, %v3525, %v3529
    %v3534 = vand.u32 2147483647, %v3524
    %vm3535 = vcmp.eq.f32.partialorder %v3534, 8.507059e+37
    %v3536 = vand.u32 %v3524, 2147483648
    %v3537 = vor.u32 1.1754944e-38, %v3536
    %v3538 = vsel %vm3535, %v3537, %v3533
    %v3539 = vmul.f32 1.0, %v3538
    %v3540 = vtanh.pop %v3460
    %v3541 = vxor.u32 %v3500, 2147483648
    %v3542 = vmul.f32 %v3541, 1.442695
    %v3543 = vpow.pop %v3542
    %v3544 = vadd.f32 %v3543, 1.0
    %v3545 = vrcp.pop %v3544
    %v3546 = vmul.f32 %v3544, %v3545
    %v3547 = vsub.f32 1.0, %v3546
    %v3548 = vmul.f32 %v3545, %v3547
    %v3549 = vadd.f32 %v3545, %v3548
    %vm3550 = vweird.f32 %v3544
    %vm3551 = vweird.f32 %v3545
    %vm3552 = vmor %vm3550, %vm3551
    %v3553 = vsel %vm3552, %v3545, %v3549
    %v3554 = vand.u32 2147483647, %v3544
    %vm3555 = vcmp.eq.f32.partialorder %v3554, 8.507059e+37
    %v3556 = vand.u32 %v3544, 2147483648
    %v3557 = vor.u32 1.1754944e-38, %v3556
    %v3558 = vsel %vm3555, %v3557, %v3553
    %v3559 = vmul.f32 1.0, %v3558
    %v3560 = vmul.f32 %v3539, %v3164
    %v3561 = vmul.f32 %v3520, %v3540
    %v3562 = vadd.f32 %v3560, %v3561
    %v3563 = vtanh.pop %v3562
    %v3564 = vmul.f32 %v3559, %v3563
    %s3565 = scalar_lea.vmem %s6, 14
    %3566 = vst [vmem:[%s3565] sm:$0x3] %v3564
    // Predicated region
    $region50: #{sss_encoder_pallas.1} parent=1 // pred_check
      _
    $region51: #{sss_encoder_pallas.1} parent=1 // pred_check_branch
      %3568 = sbr.rel (0) target = $region53
    $region52: #{sss_encoder_pallas.1} parent=1 // pred_region
      _
    $region53: #{sss_encoder_pallas.1} parent=1 // pred_fallthru
      _
    // Predicated region
    $region54: #{sss_encoder_pallas.1} parent=1 // pred_check
      _
    $region55: #{sss_encoder_pallas.1} parent=1 // pred_check_branch
      %3570 = sbr.rel (0) target = $region57
    $region56: #{sss_encoder_pallas.1} parent=1 // pred_region
      _
    $region57: #{sss_encoder_pallas.1} parent=1 // pred_fallthru
      _
    %3571 = vsyncpa [#allocation3], 1
    %3572 = vsyncpa [#allocation5], 1
    %3573 = vsyncpa [#allocation8], 1
    %3574 = vsyncpa [#allocation11], 1

</llo_original>
